<compile_context>
chip_gen: v5e
topology: v5e:2x2
jax: 0.10.0
libtpu: 0.0.40
codegen_flags: <defaults>
</compile_context>

<pallas_src>
import functools

import numpy as np
import jax
import jax.numpy as jnp
from jax import lax
from jax.experimental import pallas as pl
from jax.experimental.pallas import tpu as pltpu


# --------------------------------------------------------------- geometry ---
def _branch_geometry(kernel_size_lst, in_channels):
    ph_max = max(kh // 2 for kh, _ in kernel_size_lst)
    pw_max = max(kw // 2 for _, kw in kernel_size_lst)
    koffs, k = [], 0
    for kh, kw in kernel_size_lst:
        koffs.append(k)
        k += kh * kw * in_channels
    return ph_max, pw_max, tuple(koffs), k


def _pick_trows(oh, n):
    """Output rows per grid step: divides OH, and keeps grid >= 2 steps."""
    for t in (32, 16, 8, 4, 2, 1):
        if oh % t == 0 and (n * (oh // t) >= 2 or t == 1):
            return t
    return 1


# ------------------------------------------------------ one-time param prep --
def prepare_preproc_params(params, kernel_size_lst, compute_dtype=jnp.bfloat16):
    """Fold Conv bias + BatchNorm (eval) into a single weight slab and bias.

    Returns:
      w_slab: (OC_total, K_total) block-diagonal weights; per-branch K ordering
              is (kh, kw, c) so in-kernel patch rows can be written contiguously.
      bias:   (OC_total, 1) float32 folded bias.
    """
    w_blocks, b_blocks = [], []
    for (kh, kw), p in zip(kernel_size_lst, params):
        w, cb, gamma, beta, mean, var, eps = p
        oc4, c = w.shape[0], w.shape[1]
        scale = gamma / jnp.sqrt(var + eps)                          # (oc4,)
        wt = jnp.transpose(w, (0, 2, 3, 1)).reshape(oc4, kh * kw * c)
        w_blocks.append(wt * scale[:, None])                         # BN scale folded
        b_blocks.append(scale * (cb - mean) + beta)                  # folded bias
    k_sizes = [wb.shape[1] for wb in w_blocks]
    k_total = sum(k_sizes)
    rows, off = [], 0
    for wb, kb in zip(w_blocks, k_sizes):
        rows.append(jnp.pad(wb, ((0, 0), (off, k_total - off - kb))))
        off += kb
    w_slab = jnp.concatenate(rows, axis=0).astype(compute_dtype)     # (OC, K)
    bias = jnp.concatenate(b_blocks)[:, None].astype(jnp.float32)    # (OC, 1)
    return w_slab, bias


# ------------------------------------------------------------------ kernel --
def _make_kernel(kernel_size_lst, koffs, c, ow, trows, ph_max, pw_max, hp):
    """Direct stride-2 conv over a VMEM-resident, width-phase-split input."""

    def kernel(xw_ref, w_ref, bias_ref, o_ref, pt_ref):
        # xw_ref : (1, 2*Hp, C, Wh)  one image; row q*Hp + y holds padded-input
        #                            row y restricted to columns of parity q.
        # w_ref  : (OC, K)           BN-folded block-diagonal weights (bf16).
        # bias_ref: (OC, 1)          folded bias (f32).
        # o_ref  : (1, TROWS, OC, OW)
        # pt_ref : (K, OW)           per-output-row patch scratch (bf16).
        w = w_ref[...]
        bias = bias_ref[...]
        oy0 = pl.program_id(1) * trows

        def row_body(r, carry):
            oy = oy0 + r
            # Assemble the patch columns of this output row: for every kernel
            # offset (i, j) of every branch, copy a contiguous (C, OW) window
            # from the proper width-phase into the scratch at a static offset.
            for b, (kh, kw) in enumerate(kernel_size_lst):
                offh = ph_max - kh // 2
                offw = pw_max - kw // 2
                for i in range(kh):
                    yy = 2 * oy + (i + offh)          # padded-input row index
                    for j in range(kw):
                        jj = j + offw                 # padded-input col offset
                        k0 = koffs[b] + (i * kw + j) * c
                        pt_ref[k0:k0 + c, :] = xw_ref[
                            0, (jj % 2) * hp + yy, :, pl.ds(jj // 2, ow)]
            # One fused matmul for all 4 branches (block-diagonal weights),
            # f32 accumulation, then bias + ReLU epilogue.
            res = jnp.dot(w, pt_ref[...], preferred_element_type=jnp.float32)
            o_ref[0, r, :, :] = jnp.maximum(res + bias, 0.0).astype(o_ref.dtype)
            return carry

        lax.fori_loop(0, trows, row_body, 0)

    return kernel


# ----------------------------------------------------------------- forward --
def preproc_block_forward(x, w_slab, bias, *, kernel_size_lst, stride=2,
                          compute_dtype=jnp.bfloat16):
    """x: (N, C, H, W) float32 -> (N, OC_total, OH, OW) float32."""
    # TODO(synk): the even/odd width-phase split assumes stride == 2 (the
    # module's only use); a general stride needs a different decomposition.
    assert stride == 2
    n, c, h, w_in = x.shape
    ph_max, pw_max, koffs, k_total = _branch_geometry(kernel_size_lst, c)

    kh0, kw0 = kernel_size_lst[0]
    oh = (h + 2 * (kh0 // 2) - kh0) // stride + 1
    ow = (w_in + 2 * (kw0 // 2) - kw0) // stride + 1
    for kh, kw in kernel_size_lst:
        assert (h + 2 * (kh // 2) - kh) // stride + 1 == oh
        assert (w_in + 2 * (kw // 2) - kw) // stride + 1 == ow

    oc = w_slab.shape[0]
    hp = h + 2 * ph_max
    wp = w_in + 2 * pw_max
    wp_even = wp + (wp % 2)
    wh = wp_even // 2

    # Width-phase decomposition of the zero-padded input (O(input) bytes):
    #   xw[n, q*Hp + y, c, xh] == x_pad[n, c, y, 2*xh + q]
    xp = jnp.pad(x, ((0, 0), (0, 0), (ph_max, ph_max),
                     (pw_max, pw_max + (wp_even - wp))))
    xw = jnp.stack([xp[..., 0::2], xp[..., 1::2]], axis=1)     # (N, 2, C, Hp, Wh)
    xw = xw.transpose(0, 1, 3, 2, 4).reshape(n, 2 * hp, c, wh)  # (N, 2*Hp, C, Wh)
    xw = xw.astype(compute_dtype)
    w_slab = w_slab.astype(compute_dtype)

    trows = _pick_trows(oh, n)
    grid = (n, oh // trows)

    kernel = _make_kernel(tuple(tuple(k) for k in kernel_size_lst),
                          koffs, c, ow, trows, ph_max, pw_max, hp)

    out = pl.pallas_call(
        kernel,
        out_shape=jax.ShapeDtypeStruct((n, oh, oc, ow), jnp.float32),
        grid_spec=pltpu.PrefetchScalarGridSpec(
            num_scalar_prefetch=0,
            grid=grid,
            in_specs=[
                # per-image phase-split input, resident in VMEM for the row loop
                pl.BlockSpec((1, 2 * hp, c, wh), lambda ni, rb: (ni, 0, 0, 0)),
                # weights + bias: constant block -> fetched once, stay resident
                pl.BlockSpec((oc, k_total), lambda ni, rb: (0, 0)),
                pl.BlockSpec((oc, 1), lambda ni, rb: (0, 0)),
            ],
            out_specs=pl.BlockSpec((1, trows, oc, ow),
                                   lambda ni, rb: (ni, rb, 0, 0)),
            scratch_shapes=[pltpu.VMEM((k_total, ow), compute_dtype)],
        ),
        compiler_params=pltpu.CompilerParams(
            dimension_semantics=("parallel", "parallel"),
            vmem_limit_bytes=32 * 1024 * 1024,
        ),
    )(xw, w_slab, bias)

    return out.transpose(0, 2, 1, 3)                            # (N, OC, OH, OW)


# --------------------------------------------------------------- reference --
def preproc_block_reference(x, params, kernel_size_lst, stride=2):
    outs = []
    for (kh, kw), p in zip(kernel_size_lst, params):
        ph, pw = kh // 2, kw // 2
        w, cb, gamma, beta, mean, var, eps = p
        y = lax.conv_general_dilated(
            x, w, window_strides=(stride, stride),
            padding=((ph, ph), (pw, pw)),
            dimension_numbers=("NCHW", "OIHW", "NCHW"),
            precision=lax.Precision.HIGHEST,
        )
        y = y + cb[None, :, None, None]
        y = (y - mean[None, :, None, None]) / jnp.sqrt(var + eps)[None, :, None, None]
        y = y * gamma[None, :, None, None] + beta[None, :, None, None]
        outs.append(jnp.maximum(y, 0.0))
    return jnp.concatenate(outs, axis=1)


# ------------------------------------------------------------------- main ---
if __name__ == "__main__":
    # Small shapes consistent with the module (in=4, out=16, 16x16 input).
    N, C_IN, H, W = 2, 4, 16, 16
    OUT_CHANNELS = 16
    OC4 = OUT_CHANNELS // 4
    KERNEL_SIZE_LST = ((3, 9), (5, 11), (5, 7), (7, 7))   # BiFuse FCRN pre1
    STRIDE = 2
    EPS = 1e-5

    key = jax.random.PRNGKey(0)
    key, kx = jax.random.split(key)
    x = jax.random.normal(kx, (N, C_IN, H, W), dtype=jnp.float32)

    # Deterministic synthetic parameters for each branch.
    params = []
    for kh, kw in KERNEL_SIZE_LST:
        key, k1, k2, k3, k4, k5, k6 = jax.random.split(key, 7)
        fan_in = C_IN * kh * kw
        w = jax.random.normal(k1, (OC4, C_IN, kh, kw), dtype=jnp.float32) / np.sqrt(fan_in)
        cb = 0.1 * jax.random.normal(k2, (OC4,), dtype=jnp.float32)
        gamma = 1.0 + 0.1 * jax.random.normal(k3, (OC4,), dtype=jnp.float32)
        beta = 0.05 * jax.random.normal(k4, (OC4,), dtype=jnp.float32)
        mean = 0.1 * jax.random.normal(k5, (OC4,), dtype=jnp.float32)
        var = 0.5 + 0.5 * jnp.abs(jax.random.normal(k6, (OC4,), dtype=jnp.float32))
        params.append((w, cb, gamma, beta, mean, var, EPS))

    # One-time parameter prep (BN fold + block-diagonal weight slab), hoisted
    # out of the jitted forward.
    w_slab, bias = prepare_preproc_params(params, KERNEL_SIZE_LST)

    fwd = jax.jit(functools.partial(preproc_block_forward,
                                    kernel_size_lst=KERNEL_SIZE_LST,
                                    stride=STRIDE))
    out = jax.block_until_ready(fwd(x, w_slab, bias))

    ref = jax.block_until_ready(
        preproc_block_reference(x, params, KERNEL_SIZE_LST, STRIDE))

    assert out.shape == (N, OUT_CHANNELS, (H + 1) // 2, (W + 1) // 2), out.shape
    # bf16 operand streaming (f32 accumulation) -> bf16-level tolerance.
    np.testing.assert_allclose(np.asarray(out), np.asarray(ref), rtol=2e-2, atol=2e-2)

    print("KERNEL_OK")
</pallas_src>

<mosaic_0001>
module attributes {stable_mosaic.version = 11 : i64} {
  func.func @kernel(%arg0: i32, %arg1: i32, %arg2: memref<1x44x4x13xbf16, #tpu.memory_space<vmem>>, %arg3: memref<16x664xbf16, #tpu.memory_space<vmem>>, %arg4: memref<16x1xf32, #tpu.memory_space<vmem>>, %arg5: memref<1x8x16x8xf32, #tpu.memory_space<vmem>>, %arg6: memref<664x8xbf16, #tpu.memory_space<vmem>>) attributes {dimension_semantics = [#tpu.dimension_semantics<parallel>, #tpu.dimension_semantics<parallel>], iteration_bounds = array<i64: 2, 1>, scalar_prefetch = 0 : i64, scratch_operands = 1 : i64, tpu.core_type = #tpu.core_type<tc>, window_params = [{transform_indices = @transform_0, window_bounds = array<i64: 1, 44, 4, 13>}, {pipeline_mode = #tpu.pipeline_mode<synchronous>, transform_indices = @transform_1, window_bounds = array<i64: 16, 664>}, {pipeline_mode = #tpu.pipeline_mode<synchronous>, transform_indices = @transform_2, window_bounds = array<i64: 16, 1>}, {transform_indices = @transform_3, window_bounds = array<i64: 1, 8, 16, 8>}]} {
    %c0 = arith.constant 0 : index
    %c0_0 = arith.constant 0 : index
    %0 = vector.load %arg3[%c0, %c0_0] : memref<16x664xbf16, #tpu.memory_space<vmem>>, vector<16x664xbf16>
    %c0_1 = arith.constant 0 : index
    %c0_2 = arith.constant 0 : index
    %1 = vector.load %arg4[%c0_1, %c0_2] : memref<16x1xf32, #tpu.memory_space<vmem>>, vector<16x1xf32>
    %c8_i32 = arith.constant 8 : i32
    %2 = arith.muli %arg1, %c8_i32 : i32
    %c0_i32 = arith.constant 0 : i32
    %c8_i32_3 = arith.constant 8 : i32
    %3 = arith.addi %c0_i32, %c8_i32_3 : i32
    %c1_i32 = arith.constant 1 : i32
    scf.for %arg7 = %c0_i32 to %3 step %c1_i32  : i32 {
      %4 = arith.addi %2, %arg7 : i32
      %c2_i32 = arith.constant 2 : i32
      %5 = arith.muli %c2_i32, %4 : i32
      %c2_i32_5 = arith.constant 2 : i32
      %6 = arith.addi %5, %c2_i32_5 : i32
      %c22_i32 = arith.constant 22 : i32
      %7 = arith.addi %c22_i32, %6 : i32
      %c0_6 = arith.constant 0 : index
      %8 = arith.index_cast %7 : i32 to index
      %c0_7 = arith.constant 0 : index
      %c0_8 = arith.constant 0 : index
      %9 = vector.load %arg2[%c0_6, %8, %c0_7, %c0_8] : memref<1x44x4x13xbf16, #tpu.memory_space<vmem>>, vector<1x1x4x8xbf16>
      %10 = vector.shape_cast %9 : vector<1x1x4x8xbf16> to vector<4x8xbf16>
      %c0_9 = arith.constant 0 : index
      %c0_10 = arith.constant 0 : index
      %11 = vector.load %arg6[%c0_9, %c0_10] : memref<664x8xbf16, #tpu.memory_space<vmem>>, vector<4x8xbf16>
      tpu.vector_store %arg6[%c0_9, %c0_10], %10 {strides = array<i32>} : memref<664x8xbf16, #tpu.memory_space<vmem>>, vector<4x8xbf16>,
      %c0_i32_11 = arith.constant 0 : i32
      %12 = arith.addi %c0_i32_11, %6 : i32
      %c0_12 = arith.constant 0 : index
      %13 = arith.index_cast %12 : i32 to index
      %c0_13 = arith.constant 0 : index
      %c1 = arith.constant 1 : index
      %14 = vector.load %arg2[%c0_12, %13, %c0_13, %c1] : memref<1x44x4x13xbf16, #tpu.memory_space<vmem>>, vector<1x1x4x8xbf16>
      %15 = vector.shape_cast %14 : vector<1x1x4x8xbf16> to vector<4x8xbf16>
      %c4 = arith.constant 4 : index
      %c0_14 = arith.constant 0 : index
      %16 = vector.load %arg6[%c4, %c0_14] : memref<664x8xbf16, #tpu.memory_space<vmem>>, vector<4x8xbf16>
      tpu.vector_store %arg6[%c4, %c0_14], %15 {strides = array<i32>} : memref<664x8xbf16, #tpu.memory_space<vmem>>, vector<4x8xbf16>,
      %c22_i32_15 = arith.constant 22 : i32
      %17 = arith.addi %c22_i32_15, %6 : i32
      %c0_16 = arith.constant 0 : index
      %18 = arith.index_cast %17 : i32 to index
      %c0_17 = arith.constant 0 : index
      %c1_18 = arith.constant 1 : index
      %19 = vector.load %arg2[%c0_16, %18, %c0_17, %c1_18] : memref<1x44x4x13xbf16, #tpu.memory_space<vmem>>, vector<1x1x4x8xbf16>
      %20 = vector.shape_cast %19 : vector<1x1x4x8xbf16> to vector<4x8xbf16>
      %c8 = arith.constant 8 : index
      %c0_19 = arith.constant 0 : index
      %21 = vector.load %arg6[%c8, %c0_19] : memref<664x8xbf16, #tpu.memory_space<vmem>>, vector<4x8xbf16>
      tpu.vector_store %arg6[%c8, %c0_19], %20 {strides = array<i32>} : memref<664x8xbf16, #tpu.memory_space<vmem>>, vector<4x8xbf16>,
      %c0_i32_20 = arith.constant 0 : i32
      %22 = arith.addi %c0_i32_20, %6 : i32
      %c0_21 = arith.constant 0 : index
      %23 = arith.index_cast %22 : i32 to index
      %c0_22 = arith.constant 0 : index
      %c2 = arith.constant 2 : index
      %24 = vector.load %arg2[%c0_21, %23, %c0_22, %c2] : memref<1x44x4x13xbf16, #tpu.memory_space<vmem>>, vector<1x1x4x8xbf16>
      %25 = vector.shape_cast %24 : vector<1x1x4x8xbf16> to vector<4x8xbf16>
      %c12 = arith.constant 12 : index
      %c0_23 = arith.constant 0 : index
      %26 = vector.load %arg6[%c12, %c0_23] : memref<664x8xbf16, #tpu.memory_space<vmem>>, vector<4x8xbf16>
      tpu.vector_store %arg6[%c12, %c0_23], %25 {strides = array<i32>} : memref<664x8xbf16, #tpu.memory_space<vmem>>, vector<4x8xbf16>,
      %c22_i32_24 = arith.constant 22 : i32
      %27 = arith.addi %c22_i32_24, %6 : i32
      %c0_25 = arith.constant 0 : index
      %28 = arith.index_cast %27 : i32 to index
      %c0_26 = arith.constant 0 : index
      %c2_27 = arith.constant 2 : index
      %29 = vector.load %arg2[%c0_25, %28, %c0_26, %c2_27] : memref<1x44x4x13xbf16, #tpu.memory_space<vmem>>, vector<1x1x4x8xbf16>
      %30 = vector.shape_cast %29 : vector<1x1x4x8xbf16> to vector<4x8xbf16>
      %c16 = arith.constant 16 : index
      %c0_28 = arith.constant 0 : index
      %31 = vector.load %arg6[%c16, %c0_28] : memref<664x8xbf16, #tpu.memory_space<vmem>>, vector<4x8xbf16>
      tpu.vector_store %arg6[%c16, %c0_28], %30 {strides = array<i32>} : memref<664x8xbf16, #tpu.memory_space<vmem>>, vector<4x8xbf16>,
      %c0_i32_29 = arith.constant 0 : i32
      %32 = arith.addi %c0_i32_29, %6 : i32
      %c0_30 = arith.constant 0 : index
      %33 = arith.index_cast %32 : i32 to index
      %c0_31 = arith.constant 0 : index
      %c3 = arith.constant 3 : index
      %34 = vector.load %arg2[%c0_30, %33, %c0_31, %c3] : memref<1x44x4x13xbf16, #tpu.memory_space<vmem>>, vector<1x1x4x8xbf16>
      %35 = vector.shape_cast %34 : vector<1x1x4x8xbf16> to vector<4x8xbf16>
      %c20 = arith.constant 20 : index
      %c0_32 = arith.constant 0 : index
      %36 = vector.load %arg6[%c20, %c0_32] : memref<664x8xbf16, #tpu.memory_space<vmem>>, vector<4x8xbf16>
      tpu.vector_store %arg6[%c20, %c0_32], %35 {strides = array<i32>} : memref<664x8xbf16, #tpu.memory_space<vmem>>, vector<4x8xbf16>,
      %c22_i32_33 = arith.constant 22 : i32
      %37 = arith.addi %c22_i32_33, %6 : i32
      %c0_34 = arith.constant 0 : index
      %38 = arith.index_cast %37 : i32 to index
      %c0_35 = arith.constant 0 : index
      %c3_36 = arith.constant 3 : index
      %39 = vector.load %arg2[%c0_34, %38, %c0_35, %c3_36] : memref<1x44x4x13xbf16, #tpu.memory_space<vmem>>, vector<1x1x4x8xbf16>
      %40 = vector.shape_cast %39 : vector<1x1x4x8xbf16> to vector<4x8xbf16>
      %c24 = arith.constant 24 : index
      %c0_37 = arith.constant 0 : index
      %41 = vector.load %arg6[%c24, %c0_37] : memref<664x8xbf16, #tpu.memory_space<vmem>>, vector<4x8xbf16>
      tpu.vector_store %arg6[%c24, %c0_37], %40 {strides = array<i32>} : memref<664x8xbf16, #tpu.memory_space<vmem>>, vector<4x8xbf16>,
      %c0_i32_38 = arith.constant 0 : i32
      %42 = arith.addi %c0_i32_38, %6 : i32
      %c0_39 = arith.constant 0 : index
      %43 = arith.index_cast %42 : i32 to index
      %c0_40 = arith.constant 0 : index
      %c4_41 = arith.constant 4 : index
      %44 = vector.load %arg2[%c0_39, %43, %c0_40, %c4_41] : memref<1x44x4x13xbf16, #tpu.memory_space<vmem>>, vector<1x1x4x8xbf16>
      %45 = vector.shape_cast %44 : vector<1x1x4x8xbf16> to vector<4x8xbf16>
      %c28 = arith.constant 28 : index
      %c0_42 = arith.constant 0 : index
      %46 = vector.load %arg6[%c28, %c0_42] : memref<664x8xbf16, #tpu.memory_space<vmem>>, vector<4x8xbf16>
      tpu.vector_store %arg6[%c28, %c0_42], %45 {strides = array<i32>} : memref<664x8xbf16, #tpu.memory_space<vmem>>, vector<4x8xbf16>,
      %c22_i32_43 = arith.constant 22 : i32
      %47 = arith.addi %c22_i32_43, %6 : i32
      %c0_44 = arith.constant 0 : index
      %48 = arith.index_cast %47 : i32 to index
      %c0_45 = arith.constant 0 : index
      %c4_46 = arith.constant 4 : index
      %49 = vector.load %arg2[%c0_44, %48, %c0_45, %c4_46] : memref<1x44x4x13xbf16, #tpu.memory_space<vmem>>, vector<1x1x4x8xbf16>
      %50 = vector.shape_cast %49 : vector<1x1x4x8xbf16> to vector<4x8xbf16>
      %c32 = arith.constant 32 : index
      %c0_47 = arith.constant 0 : index
      %51 = vector.load %arg6[%c32, %c0_47] : memref<664x8xbf16, #tpu.memory_space<vmem>>, vector<4x8xbf16>
      tpu.vector_store %arg6[%c32, %c0_47], %50 {strides = array<i32>} : memref<664x8xbf16, #tpu.memory_space<vmem>>, vector<4x8xbf16>,
      %c2_i32_48 = arith.constant 2 : i32
      %52 = arith.muli %c2_i32_48, %4 : i32
      %c3_i32 = arith.constant 3 : i32
      %53 = arith.addi %52, %c3_i32 : i32
      %c22_i32_49 = arith.constant 22 : i32
      %54 = arith.addi %c22_i32_49, %53 : i32
      %c0_50 = arith.constant 0 : index
      %55 = arith.index_cast %54 : i32 to index
      %c0_51 = arith.constant 0 : index
      %c0_52 = arith.constant 0 : index
      %56 = vector.load %arg2[%c0_50, %55, %c0_51, %c0_52] : memref<1x44x4x13xbf16, #tpu.memory_space<vmem>>, vector<1x1x4x8xbf16>
      %57 = vector.shape_cast %56 : vector<1x1x4x8xbf16> to vector<4x8xbf16>
      %c36 = arith.constant 36 : index
      %c0_53 = arith.constant 0 : index
      %58 = vector.load %arg6[%c36, %c0_53] : memref<664x8xbf16, #tpu.memory_space<vmem>>, vector<4x8xbf16>
      tpu.vector_store %arg6[%c36, %c0_53], %57 {strides = array<i32>} : memref<664x8xbf16, #tpu.memory_space<vmem>>, vector<4x8xbf16>,
      %c0_i32_54 = arith.constant 0 : i32
      %59 = arith.addi %c0_i32_54, %53 : i32
      %c0_55 = arith.constant 0 : index
      %60 = arith.index_cast %59 : i32 to index
      %c0_56 = arith.constant 0 : index
      %c1_57 = arith.constant 1 : index
      %61 = vector.load %arg2[%c0_55, %60, %c0_56, %c1_57] : memref<1x44x4x13xbf16, #tpu.memory_space<vmem>>, vector<1x1x4x8xbf16>
      %62 = vector.shape_cast %61 : vector<1x1x4x8xbf16> to vector<4x8xbf16>
      %c40 = arith.constant 40 : index
      %c0_58 = arith.constant 0 : index
      %63 = vector.load %arg6[%c40, %c0_58] : memref<664x8xbf16, #tpu.memory_space<vmem>>, vector<4x8xbf16>
      tpu.vector_store %arg6[%c40, %c0_58], %62 {strides = array<i32>} : memref<664x8xbf16, #tpu.memory_space<vmem>>, vector<4x8xbf16>,
      %c22_i32_59 = arith.constant 22 : i32
      %64 = arith.addi %c22_i32_59, %53 : i32
      %c0_60 = arith.constant 0 : index
      %65 = arith.index_cast %64 : i32 to index
      %c0_61 = arith.constant 0 : index
      %c1_62 = arith.constant 1 : index
      %66 = vector.load %arg2[%c0_60, %65, %c0_61, %c1_62] : memref<1x44x4x13xbf16, #tpu.memory_space<vmem>>, vector<1x1x4x8xbf16>
      %67 = vector.shape_cast %66 : vector<1x1x4x8xbf16> to vector<4x8xbf16>
      %c44 = arith.constant 44 : index
      %c0_63 = arith.constant 0 : index
      %68 = vector.load %arg6[%c44, %c0_63] : memref<664x8xbf16, #tpu.memory_space<vmem>>, vector<4x8xbf16>
      tpu.vector_store %arg6[%c44, %c0_63], %67 {strides = array<i32>} : memref<664x8xbf16, #tpu.memory_space<vmem>>, vector<4x8xbf16>,
      %c0_i32_64 = arith.constant 0 : i32
      %69 = arith.addi %c0_i32_64, %53 : i32
      %c0_65 = arith.constant 0 : index
      %70 = arith.index_cast %69 : i32 to index
      %c0_66 = arith.constant 0 : index
      %c2_67 = arith.constant 2 : index
      %71 = vector.load %arg2[%c0_65, %70, %c0_66, %c2_67] : memref<1x44x4x13xbf16, #tpu.memory_space<vmem>>, vector<1x1x4x8xbf16>
      %72 = vector.shape_cast %71 : vector<1x1x4x8xbf16> to vector<4x8xbf16>
      %c48 = arith.constant 48 : index
      %c0_68 = arith.constant 0 : index
      %73 = vector.load %arg6[%c48, %c0_68] : memref<664x8xbf16, #tpu.memory_space<vmem>>, vector<4x8xbf16>
      tpu.vector_store %arg6[%c48, %c0_68], %72 {strides = array<i32>} : memref<664x8xbf16, #tpu.memory_space<vmem>>, vector<4x8xbf16>,
      %c22_i32_69 = arith.constant 22 : i32
      %74 = arith.addi %c22_i32_69, %53 : i32
      %c0_70 = arith.constant 0 : index
      %75 = arith.index_cast %74 : i32 to index
      %c0_71 = arith.constant 0 : index
      %c2_72 = arith.constant 2 : index
      %76 = vector.load %arg2[%c0_70, %75, %c0_71, %c2_72] : memref<1x44x4x13xbf16, #tpu.memory_space<vmem>>, vector<1x1x4x8xbf16>
      %77 = vector.shape_cast %76 : vector<1x1x4x8xbf16> to vector<4x8xbf16>
      %c52 = arith.constant 52 : index
      %c0_73 = arith.constant 0 : index
      %78 = vector.load %arg6[%c52, %c0_73] : memref<664x8xbf16, #tpu.memory_space<vmem>>, vector<4x8xbf16>
      tpu.vector_store %arg6[%c52, %c0_73], %77 {strides = array<i32>} : memref<664x8xbf16, #tpu.memory_space<vmem>>, vector<4x8xbf16>,
      %c0_i32_74 = arith.constant 0 : i32
      %79 = arith.addi %c0_i32_74, %53 : i32
      %c0_75 = arith.constant 0 : index
      %80 = arith.index_cast %79 : i32 to index
      %c0_76 = arith.constant 0 : index
      %c3_77 = arith.constant 3 : index
      %81 = vector.load %arg2[%c0_75, %80, %c0_76, %c3_77] : memref<1x44x4x13xbf16, #tpu.memory_space<vmem>>, vector<1x1x4x8xbf16>
      %82 = vector.shape_cast %81 : vector<1x1x4x8xbf16> to vector<4x8xbf16>
      %c56 = arith.constant 56 : index
      %c0_78 = arith.constant 0 : index
      %83 = vector.load %arg6[%c56, %c0_78] : memref<664x8xbf16, #tpu.memory_space<vmem>>, vector<4x8xbf16>
      tpu.vector_store %arg6[%c56, %c0_78], %82 {strides = array<i32>} : memref<664x8xbf16, #tpu.memory_space<vmem>>, vector<4x8xbf16>,
      %c22_i32_79 = arith.constant 22 : i32
      %84 = arith.addi %c22_i32_79, %53 : i32
      %c0_80 = arith.constant 0 : index
      %85 = arith.index_cast %84 : i32 to index
      %c0_81 = arith.constant 0 : index
      %c3_82 = arith.constant 3 : index
      %86 = vector.load %arg2[%c0_80, %85, %c0_81, %c3_82] : memref<1x44x4x13xbf16, #tpu.memory_space<vmem>>, vector<1x1x4x8xbf16>
      %87 = vector.shape_cast %86 : vector<1x1x4x8xbf16> to vector<4x8xbf16>
      %c60 = arith.constant 60 : index
      %c0_83 = arith.constant 0 : index
      %88 = vector.load %arg6[%c60, %c0_83] : memref<664x8xbf16, #tpu.memory_space<vmem>>, vector<4x8xbf16>
      tpu.vector_store %arg6[%c60, %c0_83], %87 {strides = array<i32>} : memref<664x8xbf16, #tpu.memory_space<vmem>>, vector<4x8xbf16>,
      %c0_i32_84 = arith.constant 0 : i32
      %89 = arith.addi %c0_i32_84, %53 : i32
      %c0_85 = arith.constant 0 : index
      %90 = arith.index_cast %89 : i32 to index
      %c0_86 = arith.constant 0 : index
      %c4_87 = arith.constant 4 : index
      %91 = vector.load %arg2[%c0_85, %90, %c0_86, %c4_87] : memref<1x44x4x13xbf16, #tpu.memory_space<vmem>>, vector<1x1x4x8xbf16>
      %92 = vector.shape_cast %91 : vector<1x1x4x8xbf16> to vector<4x8xbf16>
      %c64 = arith.constant 64 : index
      %c0_88 = arith.constant 0 : index
      %93 = vector.load %arg6[%c64, %c0_88] : memref<664x8xbf16, #tpu.memory_space<vmem>>, vector<4x8xbf16>
      tpu.vector_store %arg6[%c64, %c0_88], %92 {strides = array<i32>} : memref<664x8xbf16, #tpu.memory_space<vmem>>, vector<4x8xbf16>,
      %c22_i32_89 = arith.constant 22 : i32
      %94 = arith.addi %c22_i32_89, %53 : i32
      %c0_90 = arith.constant 0 : index
      %95 = arith.index_cast %94 : i32 to index
      %c0_91 = arith.constant 0 : index
      %c4_92 = arith.constant 4 : index
      %96 = vector.load %arg2[%c0_90, %95, %c0_91, %c4_92] : memref<1x44x4x13xbf16, #tpu.memory_space<vmem>>, vector<1x1x4x8xbf16>
      %97 = vector.shape_cast %96 : vector<1x1x4x8xbf16> to vector<4x8xbf16>
      %c68 = arith.constant 68 : index
      %c0_93 = arith.constant 0 : index
      %98 = vector.load %arg6[%c68, %c0_93] : memref<664x8xbf16, #tpu.memory_space<vmem>>, vector<4x8xbf16>
      tpu.vector_store %arg6[%c68, %c0_93], %97 {strides = array<i32>} : memref<664x8xbf16, #tpu.memory_space<vmem>>, vector<4x8xbf16>,
      %c2_i32_94 = arith.constant 2 : i32
      %99 = arith.muli %c2_i32_94, %4 : i32
      %c4_i32 = arith.constant 4 : i32
      %100 = arith.addi %99, %c4_i32 : i32
      %c22_i32_95 = arith.constant 22 : i32
      %101 = arith.addi %c22_i32_95, %100 : i32
      %c0_96 = arith.constant 0 : index
      %102 = arith.index_cast %101 : i32 to index
      %c0_97 = arith.constant 0 : index
      %c0_98 = arith.constant 0 : index
      %103 = vector.load %arg2[%c0_96, %102, %c0_97, %c0_98] : memref<1x44x4x13xbf16, #tpu.memory_space<vmem>>, vector<1x1x4x8xbf16>
      %104 = vector.shape_cast %103 : vector<1x1x4x8xbf16> to vector<4x8xbf16>
      %c72 = arith.constant 72 : index
      %c0_99 = arith.constant 0 : index
      %105 = vector.load %arg6[%c72, %c0_99] : memref<664x8xbf16, #tpu.memory_space<vmem>>, vector<4x8xbf16>
      tpu.vector_store %arg6[%c72, %c0_99], %104 {strides = array<i32>} : memref<664x8xbf16, #tpu.memory_space<vmem>>, vector<4x8xbf16>,
      %c0_i32_100 = arith.constant 0 : i32
      %106 = arith.addi %c0_i32_100, %100 : i32
      %c0_101 = arith.constant 0 : index
      %107 = arith.index_cast %106 : i32 to index
      %c0_102 = arith.constant 0 : index
      %c1_103 = arith.constant 1 : index
      %108 = vector.load %arg2[%c0_101, %107, %c0_102, %c1_103] : memref<1x44x4x13xbf16, #tpu.memory_space<vmem>>, vector<1x1x4x8xbf16>
      %109 = vector.shape_cast %108 : vector<1x1x4x8xbf16> to vector<4x8xbf16>
      %c76 = arith.constant 76 : index
      %c0_104 = arith.constant 0 : index
      %110 = vector.load %arg6[%c76, %c0_104] : memref<664x8xbf16, #tpu.memory_space<vmem>>, vector<4x8xbf16>
      tpu.vector_store %arg6[%c76, %c0_104], %109 {strides = array<i32>} : memref<664x8xbf16, #tpu.memory_space<vmem>>, vector<4x8xbf16>,
      %c22_i32_105 = arith.constant 22 : i32
      %111 = arith.addi %c22_i32_105, %100 : i32
      %c0_106 = arith.constant 0 : index
      %112 = arith.index_cast %111 : i32 to index
      %c0_107 = arith.constant 0 : index
      %c1_108 = arith.constant 1 : index
      %113 = vector.load %arg2[%c0_106, %112, %c0_107, %c1_108] : memref<1x44x4x13xbf16, #tpu.memory_space<vmem>>, vector<1x1x4x8xbf16>
      %114 = vector.shape_cast %113 : vector<1x1x4x8xbf16> to vector<4x8xbf16>
      %c80 = arith.constant 80 : index
      %c0_109 = arith.constant 0 : index
      %115 = vector.load %arg6[%c80, %c0_109] : memref<664x8xbf16, #tpu.memory_space<vmem>>, vector<4x8xbf16>
      tpu.vector_store %arg6[%c80, %c0_109], %114 {strides = array<i32>} : memref<664x8xbf16, #tpu.memory_space<vmem>>, vector<4x8xbf16>,
      %c0_i32_110 = arith.constant 0 : i32
      %116 = arith.addi %c0_i32_110, %100 : i32
      %c0_111 = arith.constant 0 : index
      %117 = arith.index_cast %116 : i32 to index
      %c0_112 = arith.constant 0 : index
      %c2_113 = arith.constant 2 : index
      %118 = vector.load %arg2[%c0_111, %117, %c0_112, %c2_113] : memref<1x44x4x13xbf16, #tpu.memory_space<vmem>>, vector<1x1x4x8xbf16>
      %119 = vector.shape_cast %118 : vector<1x1x4x8xbf16> to vector<4x8xbf16>
      %c84 = arith.constant 84 : index
      %c0_114 = arith.constant 0 : index
      %120 = vector.load %arg6[%c84, %c0_114] : memref<664x8xbf16, #tpu.memory_space<vmem>>, vector<4x8xbf16>
      tpu.vector_store %arg6[%c84, %c0_114], %119 {strides = array<i32>} : memref<664x8xbf16, #tpu.memory_space<vmem>>, vector<4x8xbf16>,
      %c22_i32_115 = arith.constant 22 : i32
      %121 = arith.addi %c22_i32_115, %100 : i32
      %c0_116 = arith.constant 0 : index
      %122 = arith.index_cast %121 : i32 to index
      %c0_117 = arith.constant 0 : index
      %c2_118 = arith.constant 2 : index
      %123 = vector.load %arg2[%c0_116, %122, %c0_117, %c2_118] : memref<1x44x4x13xbf16, #tpu.memory_space<vmem>>, vector<1x1x4x8xbf16>
      %124 = vector.shape_cast %123 : vector<1x1x4x8xbf16> to vector<4x8xbf16>
      %c88 = arith.constant 88 : index
      %c0_119 = arith.constant 0 : index
      %125 = vector.load %arg6[%c88, %c0_119] : memref<664x8xbf16, #tpu.memory_space<vmem>>, vector<4x8xbf16>
      tpu.vector_store %arg6[%c88, %c0_119], %124 {strides = array<i32>} : memref<664x8xbf16, #tpu.memory_space<vmem>>, vector<4x8xbf16>,
      %c0_i32_120 = arith.constant 0 : i32
      %126 = arith.addi %c0_i32_120, %100 : i32
      %c0_121 = arith.constant 0 : index
      %127 = arith.index_cast %126 : i32 to index
      %c0_122 = arith.constant 0 : index
      %c3_123 = arith.constant 3 : index
      %128 = vector.load %arg2[%c0_121, %127, %c0_122, %c3_123] : memref<1x44x4x13xbf16, #tpu.memory_space<vmem>>, vector<1x1x4x8xbf16>
      %129 = vector.shape_cast %128 : vector<1x1x4x8xbf16> to vector<4x8xbf16>
      %c92 = arith.constant 92 : index
      %c0_124 = arith.constant 0 : index
      %130 = vector.load %arg6[%c92, %c0_124] : memref<664x8xbf16, #tpu.memory_space<vmem>>, vector<4x8xbf16>
      tpu.vector_store %arg6[%c92, %c0_124], %129 {strides = array<i32>} : memref<664x8xbf16, #tpu.memory_space<vmem>>, vector<4x8xbf16>,
      %c22_i32_125 = arith.constant 22 : i32
      %131 = arith.addi %c22_i32_125, %100 : i32
      %c0_126 = arith.constant 0 : index
      %132 = arith.index_cast %131 : i32 to index
      %c0_127 = arith.constant 0 : index
      %c3_128 = arith.constant 3 : index
      %133 = vector.load %arg2[%c0_126, %132, %c0_127, %c3_128] : memref<1x44x4x13xbf16, #tpu.memory_space<vmem>>, vector<1x1x4x8xbf16>
      %134 = vector.shape_cast %133 : vector<1x1x4x8xbf16> to vector<4x8xbf16>
      %c96 = arith.constant 96 : index
      %c0_129 = arith.constant 0 : index
      %135 = vector.load %arg6[%c96, %c0_129] : memref<664x8xbf16, #tpu.memory_space<vmem>>, vector<4x8xbf16>
      tpu.vector_store %arg6[%c96, %c0_129], %134 {strides = array<i32>} : memref<664x8xbf16, #tpu.memory_space<vmem>>, vector<4x8xbf16>,
      %c0_i32_130 = arith.constant 0 : i32
      %136 = arith.addi %c0_i32_130, %100 : i32
      %c0_131 = arith.constant 0 : index
      %137 = arith.index_cast %136 : i32 to index
      %c0_132 = arith.constant 0 : index
      %c4_133 = arith.constant 4 : index
      %138 = vector.load %arg2[%c0_131, %137, %c0_132, %c4_133] : memref<1x44x4x13xbf16, #tpu.memory_space<vmem>>, vector<1x1x4x8xbf16>
      %139 = vector.shape_cast %138 : vector<1x1x4x8xbf16> to vector<4x8xbf16>
      %c100 = arith.constant 100 : index
      %c0_134 = arith.constant 0 : index
      %140 = vector.load %arg6[%c100, %c0_134] : memref<664x8xbf16, #tpu.memory_space<vmem>>, vector<4x8xbf16>
      tpu.vector_store %arg6[%c100, %c0_134], %139 {strides = array<i32>} : memref<664x8xbf16, #tpu.memory_space<vmem>>, vector<4x8xbf16>,
      %c22_i32_135 = arith.constant 22 : i32
      %141 = arith.addi %c22_i32_135, %100 : i32
      %c0_136 = arith.constant 0 : index
      %142 = arith.index_cast %141 : i32 to index
      %c0_137 = arith.constant 0 : index
      %c4_138 = arith.constant 4 : index
      %143 = vector.load %arg2[%c0_136, %142, %c0_137, %c4_138] : memref<1x44x4x13xbf16, #tpu.memory_space<vmem>>, vector<1x1x4x8xbf16>
      %144 = vector.shape_cast %143 : vector<1x1x4x8xbf16> to vector<4x8xbf16>
      %c104 = arith.constant 104 : index
      %c0_139 = arith.constant 0 : index
      %145 = vector.load %arg6[%c104, %c0_139] : memref<664x8xbf16, #tpu.memory_space<vmem>>, vector<4x8xbf16>
      tpu.vector_store %arg6[%c104, %c0_139], %144 {strides = array<i32>} : memref<664x8xbf16, #tpu.memory_space<vmem>>, vector<4x8xbf16>,
      %c2_i32_140 = arith.constant 2 : i32
      %146 = arith.muli %c2_i32_140, %4 : i32
      %c1_i32_141 = arith.constant 1 : i32
      %147 = arith.addi %146, %c1_i32_141 : i32
      %c0_i32_142 = arith.constant 0 : i32
      %148 = arith.addi %c0_i32_142, %147 : i32
      %c0_143 = arith.constant 0 : index
      %149 = arith.index_cast %148 : i32 to index
      %c0_144 = arith.constant 0 : index
      %c0_145 = arith.constant 0 : index
      %150 = vector.load %arg2[%c0_143, %149, %c0_144, %c0_145] : memref<1x44x4x13xbf16, #tpu.memory_space<vmem>>, vector<1x1x4x8xbf16>
      %151 = vector.shape_cast %150 : vector<1x1x4x8xbf16> to vector<4x8xbf16>
      %c108 = arith.constant 108 : index
      %c0_146 = arith.constant 0 : index
      %152 = vector.load %arg6[%c108, %c0_146] : memref<664x8xbf16, #tpu.memory_space<vmem>>, vector<4x8xbf16>
      tpu.vector_store %arg6[%c108, %c0_146], %151 {strides = array<i32>} : memref<664x8xbf16, #tpu.memory_space<vmem>>, vector<4x8xbf16>,
      %c22_i32_147 = arith.constant 22 : i32
      %153 = arith.addi %c22_i32_147, %147 : i32
      %c0_148 = arith.constant 0 : index
      %154 = arith.index_cast %153 : i32 to index
      %c0_149 = arith.constant 0 : index
      %c0_150 = arith.constant 0 : index
      %155 = vector.load %arg2[%c0_148, %154, %c0_149, %c0_150] : memref<1x44x4x13xbf16, #tpu.memory_space<vmem>>, vector<1x1x4x8xbf16>
      %156 = vector.shape_cast %155 : vector<1x1x4x8xbf16> to vector<4x8xbf16>
      %c112 = arith.constant 112 : index
      %c0_151 = arith.constant 0 : index
      %157 = vector.load %arg6[%c112, %c0_151] : memref<664x8xbf16, #tpu.memory_space<vmem>>, vector<4x8xbf16>
      tpu.vector_store %arg6[%c112, %c0_151], %156 {strides = array<i32>} : memref<664x8xbf16, #tpu.memory_space<vmem>>, vector<4x8xbf16>,
      %c0_i32_152 = arith.constant 0 : i32
      %158 = arith.addi %c0_i32_152, %147 : i32
      %c0_153 = arith.constant 0 : index
      %159 = arith.index_cast %158 : i32 to index
      %c0_154 = arith.constant 0 : index
      %c1_155 = arith.constant 1 : index
      %160 = vector.load %arg2[%c0_153, %159, %c0_154, %c1_155] : memref<1x44x4x13xbf16, #tpu.memory_space<vmem>>, vector<1x1x4x8xbf16>
      %161 = vector.shape_cast %160 : vector<1x1x4x8xbf16> to vector<4x8xbf16>
      %c116 = arith.constant 116 : index
      %c0_156 = arith.constant 0 : index
      %162 = vector.load %arg6[%c116, %c0_156] : memref<664x8xbf16, #tpu.memory_space<vmem>>, vector<4x8xbf16>
      tpu.vector_store %arg6[%c116, %c0_156], %161 {strides = array<i32>} : memref<664x8xbf16, #tpu.memory_space<vmem>>, vector<4x8xbf16>,
      %c22_i32_157 = arith.constant 22 : i32
      %163 = arith.addi %c22_i32_157, %147 : i32
      %c0_158 = arith.constant 0 : index
      %164 = arith.index_cast %163 : i32 to index
      %c0_159 = arith.constant 0 : index
      %c1_160 = arith.constant 1 : index
      %165 = vector.load %arg2[%c0_158, %164, %c0_159, %c1_160] : memref<1x44x4x13xbf16, #tpu.memory_space<vmem>>, vector<1x1x4x8xbf16>
      %166 = vector.shape_cast %165 : vector<1x1x4x8xbf16> to vector<4x8xbf16>
      %c120 = arith.constant 120 : index
      %c0_161 = arith.constant 0 : index
      %167 = vector.load %arg6[%c120, %c0_161] : memref<664x8xbf16, #tpu.memory_space<vmem>>, vector<4x8xbf16>
      tpu.vector_store %arg6[%c120, %c0_161], %166 {strides = array<i32>} : memref<664x8xbf16, #tpu.memory_space<vmem>>, vector<4x8xbf16>,
      %c0_i32_162 = arith.constant 0 : i32
      %168 = arith.addi %c0_i32_162, %147 : i32
      %c0_163 = arith.constant 0 : index
      %169 = arith.index_cast %168 : i32 to index
      %c0_164 = arith.constant 0 : index
      %c2_165 = arith.constant 2 : index
      %170 = vector.load %arg2[%c0_163, %169, %c0_164, %c2_165] : memref<1x44x4x13xbf16, #tpu.memory_space<vmem>>, vector<1x1x4x8xbf16>
      %171 = vector.shape_cast %170 : vector<1x1x4x8xbf16> to vector<4x8xbf16>
      %c124 = arith.constant 124 : index
      %c0_166 = arith.constant 0 : index
      %172 = vector.load %arg6[%c124, %c0_166] : memref<664x8xbf16, #tpu.memory_space<vmem>>, vector<4x8xbf16>
      tpu.vector_store %arg6[%c124, %c0_166], %171 {strides = array<i32>} : memref<664x8xbf16, #tpu.memory_space<vmem>>, vector<4x8xbf16>,
      %c22_i32_167 = arith.constant 22 : i32
      %173 = arith.addi %c22_i32_167, %147 : i32
      %c0_168 = arith.constant 0 : index
      %174 = arith.index_cast %173 : i32 to index
      %c0_169 = arith.constant 0 : index
      %c2_170 = arith.constant 2 : index
      %175 = vector.load %arg2[%c0_168, %174, %c0_169, %c2_170] : memref<1x44x4x13xbf16, #tpu.memory_space<vmem>>, vector<1x1x4x8xbf16>
      %176 = vector.shape_cast %175 : vector<1x1x4x8xbf16> to vector<4x8xbf16>
      %c128 = arith.constant 128 : index
      %c0_171 = arith.constant 0 : index
      %177 = vector.load %arg6[%c128, %c0_171] : memref<664x8xbf16, #tpu.memory_space<vmem>>, vector<4x8xbf16>
      tpu.vector_store %arg6[%c128, %c0_171], %176 {strides = array<i32>} : memref<664x8xbf16, #tpu.memory_space<vmem>>, vector<4x8xbf16>,
      %c0_i32_172 = arith.constant 0 : i32
      %178 = arith.addi %c0_i32_172, %147 : i32
      %c0_173 = arith.constant 0 : index
      %179 = arith.index_cast %178 : i32 to index
      %c0_174 = arith.constant 0 : index
      %c3_175 = arith.constant 3 : index
      %180 = vector.load %arg2[%c0_173, %179, %c0_174, %c3_175] : memref<1x44x4x13xbf16, #tpu.memory_space<vmem>>, vector<1x1x4x8xbf16>
      %181 = vector.shape_cast %180 : vector<1x1x4x8xbf16> to vector<4x8xbf16>
      %c132 = arith.constant 132 : index
      %c0_176 = arith.constant 0 : index
      %182 = vector.load %arg6[%c132, %c0_176] : memref<664x8xbf16, #tpu.memory_space<vmem>>, vector<4x8xbf16>
      tpu.vector_store %arg6[%c132, %c0_176], %181 {strides = array<i32>} : memref<664x8xbf16, #tpu.memory_space<vmem>>, vector<4x8xbf16>,
      %c22_i32_177 = arith.constant 22 : i32
      %183 = arith.addi %c22_i32_177, %147 : i32
      %c0_178 = arith.constant 0 : index
      %184 = arith.index_cast %183 : i32 to index
      %c0_179 = arith.constant 0 : index
      %c3_180 = arith.constant 3 : index
      %185 = vector.load %arg2[%c0_178, %184, %c0_179, %c3_180] : memref<1x44x4x13xbf16, #tpu.memory_space<vmem>>, vector<1x1x4x8xbf16>
      %186 = vector.shape_cast %185 : vector<1x1x4x8xbf16> to vector<4x8xbf16>
      %c136 = arith.constant 136 : index
      %c0_181 = arith.constant 0 : index
      %187 = vector.load %arg6[%c136, %c0_181] : memref<664x8xbf16, #tpu.memory_space<vmem>>, vector<4x8xbf16>
      tpu.vector_store %arg6[%c136, %c0_181], %186 {strides = array<i32>} : memref<664x8xbf16, #tpu.memory_space<vmem>>, vector<4x8xbf16>,
      %c0_i32_182 = arith.constant 0 : i32
      %188 = arith.addi %c0_i32_182, %147 : i32
      %c0_183 = arith.constant 0 : index
      %189 = arith.index_cast %188 : i32 to index
      %c0_184 = arith.constant 0 : index
      %c4_185 = arith.constant 4 : index
      %190 = vector.load %arg2[%c0_183, %189, %c0_184, %c4_185] : memref<1x44x4x13xbf16, #tpu.memory_space<vmem>>, vector<1x1x4x8xbf16>
      %191 = vector.shape_cast %190 : vector<1x1x4x8xbf16> to vector<4x8xbf16>
      %c140 = arith.constant 140 : index
      %c0_186 = arith.constant 0 : index
      %192 = vector.load %arg6[%c140, %c0_186] : memref<664x8xbf16, #tpu.memory_space<vmem>>, vector<4x8xbf16>
      tpu.vector_store %arg6[%c140, %c0_186], %191 {strides = array<i32>} : memref<664x8xbf16, #tpu.memory_space<vmem>>, vector<4x8xbf16>,
      %c22_i32_187 = arith.constant 22 : i32
      %193 = arith.addi %c22_i32_187, %147 : i32
      %c0_188 = arith.constant 0 : index
      %194 = arith.index_cast %193 : i32 to index
      %c0_189 = arith.constant 0 : index
      %c4_190 = arith.constant 4 : index
      %195 = vector.load %arg2[%c0_188, %194, %c0_189, %c4_190] : memref<1x44x4x13xbf16, #tpu.memory_space<vmem>>, vector<1x1x4x8xbf16>
      %196 = vector.shape_cast %195 : vector<1x1x4x8xbf16> to vector<4x8xbf16>
      %c144 = arith.constant 144 : index
      %c0_191 = arith.constant 0 : index
      %197 = vector.load %arg6[%c144, %c0_191] : memref<664x8xbf16, #tpu.memory_space<vmem>>, vector<4x8xbf16>
      tpu.vector_store %arg6[%c144, %c0_191], %196 {strides = array<i32>} : memref<664x8xbf16, #tpu.memory_space<vmem>>, vector<4x8xbf16>,
      %c0_i32_192 = arith.constant 0 : i32
      %198 = arith.addi %c0_i32_192, %147 : i32
      %c0_193 = arith.constant 0 : index
      %199 = arith.index_cast %198 : i32 to index
      %c0_194 = arith.constant 0 : index
      %c5 = arith.constant 5 : index
      %200 = vector.load %arg2[%c0_193, %199, %c0_194, %c5] : memref<1x44x4x13xbf16, #tpu.memory_space<vmem>>, vector<1x1x4x8xbf16>
      %201 = vector.shape_cast %200 : vector<1x1x4x8xbf16> to vector<4x8xbf16>
      %c148 = arith.constant 148 : index
      %c0_195 = arith.constant 0 : index
      %202 = vector.load %arg6[%c148, %c0_195] : memref<664x8xbf16, #tpu.memory_space<vmem>>, vector<4x8xbf16>
      tpu.vector_store %arg6[%c148, %c0_195], %201 {strides = array<i32>} : memref<664x8xbf16, #tpu.memory_space<vmem>>, vector<4x8xbf16>,
      %c2_i32_196 = arith.constant 2 : i32
      %203 = arith.muli %c2_i32_196, %4 : i32
      %c2_i32_197 = arith.constant 2 : i32
      %204 = arith.addi %203, %c2_i32_197 : i32
      %c0_i32_198 = arith.constant 0 : i32
      %205 = arith.addi %c0_i32_198, %204 : i32
      %c0_199 = arith.constant 0 : index
      %206 = arith.index_cast %205 : i32 to index
      %c0_200 = arith.constant 0 : index
      %c0_201 = arith.constant 0 : index
      %207 = vector.load %arg2[%c0_199, %206, %c0_200, %c0_201] : memref<1x44x4x13xbf16, #tpu.memory_space<vmem>>, vector<1x1x4x8xbf16>
      %208 = vector.shape_cast %207 : vector<1x1x4x8xbf16> to vector<4x8xbf16>
      %c152 = arith.constant 152 : index
      %c0_202 = arith.constant 0 : index
      %209 = vector.load %arg6[%c152, %c0_202] : memref<664x8xbf16, #tpu.memory_space<vmem>>, vector<4x8xbf16>
      tpu.vector_store %arg6[%c152, %c0_202], %208 {strides = array<i32>} : memref<664x8xbf16, #tpu.memory_space<vmem>>, vector<4x8xbf16>,
      %c22_i32_203 = arith.constant 22 : i32
      %210 = arith.addi %c22_i32_203, %204 : i32
      %c0_204 = arith.constant 0 : index
      %211 = arith.index_cast %210 : i32 to index
      %c0_205 = arith.constant 0 : index
      %c0_206 = arith.constant 0 : index
      %212 = vector.load %arg2[%c0_204, %211, %c0_205, %c0_206] : memref<1x44x4x13xbf16, #tpu.memory_space<vmem>>, vector<1x1x4x8xbf16>
      %213 = vector.shape_cast %212 : vector<1x1x4x8xbf16> to vector<4x8xbf16>
      %c156 = arith.constant 156 : index
      %c0_207 = arith.constant 0 : index
      %214 = vector.load %arg6[%c156, %c0_207] : memref<664x8xbf16, #tpu.memory_space<vmem>>, vector<4x8xbf16>
      tpu.vector_store %arg6[%c156, %c0_207], %213 {strides = array<i32>} : memref<664x8xbf16, #tpu.memory_space<vmem>>, vector<4x8xbf16>,
      %c0_i32_208 = arith.constant 0 : i32
      %215 = arith.addi %c0_i32_208, %204 : i32
      %c0_209 = arith.constant 0 : index
      %216 = arith.index_cast %215 : i32 to index
      %c0_210 = arith.constant 0 : index
      %c1_211 = arith.constant 1 : index
      %217 = vector.load %arg2[%c0_209, %216, %c0_210, %c1_211] : memref<1x44x4x13xbf16, #tpu.memory_space<vmem>>, vector<1x1x4x8xbf16>
      %218 = vector.shape_cast %217 : vector<1x1x4x8xbf16> to vector<4x8xbf16>
      %c160 = arith.constant 160 : index
      %c0_212 = arith.constant 0 : index
      %219 = vector.load %arg6[%c160, %c0_212] : memref<664x8xbf16, #tpu.memory_space<vmem>>, vector<4x8xbf16>
      tpu.vector_store %arg6[%c160, %c0_212], %218 {strides = array<i32>} : memref<664x8xbf16, #tpu.memory_space<vmem>>, vector<4x8xbf16>,
      %c22_i32_213 = arith.constant 22 : i32
      %220 = arith.addi %c22_i32_213, %204 : i32
      %c0_214 = arith.constant 0 : index
      %221 = arith.index_cast %220 : i32 to index
      %c0_215 = arith.constant 0 : index
      %c1_216 = arith.constant 1 : index
      %222 = vector.load %arg2[%c0_214, %221, %c0_215, %c1_216] : memref<1x44x4x13xbf16, #tpu.memory_space<vmem>>, vector<1x1x4x8xbf16>
      %223 = vector.shape_cast %222 : vector<1x1x4x8xbf16> to vector<4x8xbf16>
      %c164 = arith.constant 164 : index
      %c0_217 = arith.constant 0 : index
      %224 = vector.load %arg6[%c164, %c0_217] : memref<664x8xbf16, #tpu.memory_space<vmem>>, vector<4x8xbf16>
      tpu.vector_store %arg6[%c164, %c0_217], %223 {strides = array<i32>} : memref<664x8xbf16, #tpu.memory_space<vmem>>, vector<4x8xbf16>,
      %c0_i32_218 = arith.constant 0 : i32
      %225 = arith.addi %c0_i32_218, %204 : i32
      %c0_219 = arith.constant 0 : index
      %226 = arith.index_cast %225 : i32 to index
      %c0_220 = arith.constant 0 : index
      %c2_221 = arith.constant 2 : index
      %227 = vector.load %arg2[%c0_219, %226, %c0_220, %c2_221] : memref<1x44x4x13xbf16, #tpu.memory_space<vmem>>, vector<1x1x4x8xbf16>
      %228 = vector.shape_cast %227 : vector<1x1x4x8xbf16> to vector<4x8xbf16>
      %c168 = arith.constant 168 : index
      %c0_222 = arith.constant 0 : index
      %229 = vector.load %arg6[%c168, %c0_222] : memref<664x8xbf16, #tpu.memory_space<vmem>>, vector<4x8xbf16>
      tpu.vector_store %arg6[%c168, %c0_222], %228 {strides = array<i32>} : memref<664x8xbf16, #tpu.memory_space<vmem>>, vector<4x8xbf16>,
      %c22_i32_223 = arith.constant 22 : i32
      %230 = arith.addi %c22_i32_223, %204 : i32
      %c0_224 = arith.constant 0 : index
      %231 = arith.index_cast %230 : i32 to index
      %c0_225 = arith.constant 0 : index
      %c2_226 = arith.constant 2 : index
      %232 = vector.load %arg2[%c0_224, %231, %c0_225, %c2_226] : memref<1x44x4x13xbf16, #tpu.memory_space<vmem>>, vector<1x1x4x8xbf16>
      %233 = vector.shape_cast %232 : vector<1x1x4x8xbf16> to vector<4x8xbf16>
      %c172 = arith.constant 172 : index
      %c0_227 = arith.constant 0 : index
      %234 = vector.load %arg6[%c172, %c0_227] : memref<664x8xbf16, #tpu.memory_space<vmem>>, vector<4x8xbf16>
      tpu.vector_store %arg6[%c172, %c0_227], %233 {strides = array<i32>} : memref<664x8xbf16, #tpu.memory_space<vmem>>, vector<4x8xbf16>,
      %c0_i32_228 = arith.constant 0 : i32
      %235 = arith.addi %c0_i32_228, %204 : i32
      %c0_229 = arith.constant 0 : index
      %236 = arith.index_cast %235 : i32 to index
      %c0_230 = arith.constant 0 : index
      %c3_231 = arith.constant 3 : index
      %237 = vector.load %arg2[%c0_229, %236, %c0_230, %c3_231] : memref<1x44x4x13xbf16, #tpu.memory_space<vmem>>, vector<1x1x4x8xbf16>
      %238 = vector.shape_cast %237 : vector<1x1x4x8xbf16> to vector<4x8xbf16>
      %c176 = arith.constant 176 : index
      %c0_232 = arith.constant 0 : index
      %239 = vector.load %arg6[%c176, %c0_232] : memref<664x8xbf16, #tpu.memory_space<vmem>>, vector<4x8xbf16>
      tpu.vector_store %arg6[%c176, %c0_232], %238 {strides = array<i32>} : memref<664x8xbf16, #tpu.memory_space<vmem>>, vector<4x8xbf16>,
      %c22_i32_233 = arith.constant 22 : i32
      %240 = arith.addi %c22_i32_233, %204 : i32
      %c0_234 = arith.constant 0 : index
      %241 = arith.index_cast %240 : i32 to index
      %c0_235 = arith.constant 0 : index
      %c3_236 = arith.constant 3 : index
      %242 = vector.load %arg2[%c0_234, %241, %c0_235, %c3_236] : memref<1x44x4x13xbf16, #tpu.memory_space<vmem>>, vector<1x1x4x8xbf16>
      %243 = vector.shape_cast %242 : vector<1x1x4x8xbf16> to vector<4x8xbf16>
      %c180 = arith.constant 180 : index
      %c0_237 = arith.constant 0 : index
      %244 = vector.load %arg6[%c180, %c0_237] : memref<664x8xbf16, #tpu.memory_space<vmem>>, vector<4x8xbf16>
      tpu.vector_store %arg6[%c180, %c0_237], %243 {strides = array<i32>} : memref<664x8xbf16, #tpu.memory_space<vmem>>, vector<4x8xbf16>,
      %c0_i32_238 = arith.constant 0 : i32
      %245 = arith.addi %c0_i32_238, %204 : i32
      %c0_239 = arith.constant 0 : index
      %246 = arith.index_cast %245 : i32 to index
      %c0_240 = arith.constant 0 : index
      %c4_241 = arith.constant 4 : index
      %247 = vector.load %arg2[%c0_239, %246, %c0_240, %c4_241] : memref<1x44x4x13xbf16, #tpu.memory_space<vmem>>, vector<1x1x4x8xbf16>
      %248 = vector.shape_cast %247 : vector<1x1x4x8xbf16> to vector<4x8xbf16>
      %c184 = arith.constant 184 : index
      %c0_242 = arith.constant 0 : index
      %249 = vector.load %arg6[%c184, %c0_242] : memref<664x8xbf16, #tpu.memory_space<vmem>>, vector<4x8xbf16>
      tpu.vector_store %arg6[%c184, %c0_242], %248 {strides = array<i32>} : memref<664x8xbf16, #tpu.memory_space<vmem>>, vector<4x8xbf16>,
      %c22_i32_243 = arith.constant 22 : i32
      %250 = arith.addi %c22_i32_243, %204 : i32
      %c0_244 = arith.constant 0 : index
      %251 = arith.index_cast %250 : i32 to index
      %c0_245 = arith.constant 0 : index
      %c4_246 = arith.constant 4 : index
      %252 = vector.load %arg2[%c0_244, %251, %c0_245, %c4_246] : memref<1x44x4x13xbf16, #tpu.memory_space<vmem>>, vector<1x1x4x8xbf16>
      %253 = vector.shape_cast %252 : vector<1x1x4x8xbf16> to vector<4x8xbf16>
      %c188 = arith.constant 188 : index
      %c0_247 = arith.constant 0 : index
      %254 = vector.load %arg6[%c188, %c0_247] : memref<664x8xbf16, #tpu.memory_space<vmem>>, vector<4x8xbf16>
      tpu.vector_store %arg6[%c188, %c0_247], %253 {strides = array<i32>} : memref<664x8xbf16, #tpu.memory_space<vmem>>, vector<4x8xbf16>,
      %c0_i32_248 = arith.constant 0 : i32
      %255 = arith.addi %c0_i32_248, %204 : i32
      %c0_249 = arith.constant 0 : index
      %256 = arith.index_cast %255 : i32 to index
      %c0_250 = arith.constant 0 : index
      %c5_251 = arith.constant 5 : index
      %257 = vector.load %arg2[%c0_249, %256, %c0_250, %c5_251] : memref<1x44x4x13xbf16, #tpu.memory_space<vmem>>, vector<1x1x4x8xbf16>
      %258 = vector.shape_cast %257 : vector<1x1x4x8xbf16> to vector<4x8xbf16>
      %c192 = arith.constant 192 : index
      %c0_252 = arith.constant 0 : index
      %259 = vector.load %arg6[%c192, %c0_252] : memref<664x8xbf16, #tpu.memory_space<vmem>>, vector<4x8xbf16>
      tpu.vector_store %arg6[%c192, %c0_252], %258 {strides = array<i32>} : memref<664x8xbf16, #tpu.memory_space<vmem>>, vector<4x8xbf16>,
      %c2_i32_253 = arith.constant 2 : i32
      %260 = arith.muli %c2_i32_253, %4 : i32
      %c3_i32_254 = arith.constant 3 : i32
      %261 = arith.addi %260, %c3_i32_254 : i32
      %c0_i32_255 = arith.constant 0 : i32
      %262 = arith.addi %c0_i32_255, %261 : i32
      %c0_256 = arith.constant 0 : index
      %263 = arith.index_cast %262 : i32 to index
      %c0_257 = arith.constant 0 : index
      %c0_258 = arith.constant 0 : index
      %264 = vector.load %arg2[%c0_256, %263, %c0_257, %c0_258] : memref<1x44x4x13xbf16, #tpu.memory_space<vmem>>, vector<1x1x4x8xbf16>
      %265 = vector.shape_cast %264 : vector<1x1x4x8xbf16> to vector<4x8xbf16>
      %c196 = arith.constant 196 : index
      %c0_259 = arith.constant 0 : index
      %266 = vector.load %arg6[%c196, %c0_259] : memref<664x8xbf16, #tpu.memory_space<vmem>>, vector<4x8xbf16>
      tpu.vector_store %arg6[%c196, %c0_259], %265 {strides = array<i32>} : memref<664x8xbf16, #tpu.memory_space<vmem>>, vector<4x8xbf16>,
      %c22_i32_260 = arith.constant 22 : i32
      %267 = arith.addi %c22_i32_260, %261 : i32
      %c0_261 = arith.constant 0 : index
      %268 = arith.index_cast %267 : i32 to index
      %c0_262 = arith.constant 0 : index
      %c0_263 = arith.constant 0 : index
      %269 = vector.load %arg2[%c0_261, %268, %c0_262, %c0_263] : memref<1x44x4x13xbf16, #tpu.memory_space<vmem>>, vector<1x1x4x8xbf16>
      %270 = vector.shape_cast %269 : vector<1x1x4x8xbf16> to vector<4x8xbf16>
      %c200 = arith.constant 200 : index
      %c0_264 = arith.constant 0 : index
      %271 = vector.load %arg6[%c200, %c0_264] : memref<664x8xbf16, #tpu.memory_space<vmem>>, vector<4x8xbf16>
      tpu.vector_store %arg6[%c200, %c0_264], %270 {strides = array<i32>} : memref<664x8xbf16, #tpu.memory_space<vmem>>, vector<4x8xbf16>,
      %c0_i32_265 = arith.constant 0 : i32
      %272 = arith.addi %c0_i32_265, %261 : i32
      %c0_266 = arith.constant 0 : index
      %273 = arith.index_cast %272 : i32 to index
      %c0_267 = arith.constant 0 : index
      %c1_268 = arith.constant 1 : index
      %274 = vector.load %arg2[%c0_266, %273, %c0_267, %c1_268] : memref<1x44x4x13xbf16, #tpu.memory_space<vmem>>, vector<1x1x4x8xbf16>
      %275 = vector.shape_cast %274 : vector<1x1x4x8xbf16> to vector<4x8xbf16>
      %c204 = arith.constant 204 : index
      %c0_269 = arith.constant 0 : index
      %276 = vector.load %arg6[%c204, %c0_269] : memref<664x8xbf16, #tpu.memory_space<vmem>>, vector<4x8xbf16>
      tpu.vector_store %arg6[%c204, %c0_269], %275 {strides = array<i32>} : memref<664x8xbf16, #tpu.memory_space<vmem>>, vector<4x8xbf16>,
      %c22_i32_270 = arith.constant 22 : i32
      %277 = arith.addi %c22_i32_270, %261 : i32
      %c0_271 = arith.constant 0 : index
      %278 = arith.index_cast %277 : i32 to index
      %c0_272 = arith.constant 0 : index
      %c1_273 = arith.constant 1 : index
      %279 = vector.load %arg2[%c0_271, %278, %c0_272, %c1_273] : memref<1x44x4x13xbf16, #tpu.memory_space<vmem>>, vector<1x1x4x8xbf16>
      %280 = vector.shape_cast %279 : vector<1x1x4x8xbf16> to vector<4x8xbf16>
      %c208 = arith.constant 208 : index
      %c0_274 = arith.constant 0 : index
      %281 = vector.load %arg6[%c208, %c0_274] : memref<664x8xbf16, #tpu.memory_space<vmem>>, vector<4x8xbf16>
      tpu.vector_store %arg6[%c208, %c0_274], %280 {strides = array<i32>} : memref<664x8xbf16, #tpu.memory_space<vmem>>, vector<4x8xbf16>,
      %c0_i32_275 = arith.constant 0 : i32
      %282 = arith.addi %c0_i32_275, %261 : i32
      %c0_276 = arith.constant 0 : index
      %283 = arith.index_cast %282 : i32 to index
      %c0_277 = arith.constant 0 : index
      %c2_278 = arith.constant 2 : index
      %284 = vector.load %arg2[%c0_276, %283, %c0_277, %c2_278] : memref<1x44x4x13xbf16, #tpu.memory_space<vmem>>, vector<1x1x4x8xbf16>
      %285 = vector.shape_cast %284 : vector<1x1x4x8xbf16> to vector<4x8xbf16>
      %c212 = arith.constant 212 : index
      %c0_279 = arith.constant 0 : index
      %286 = vector.load %arg6[%c212, %c0_279] : memref<664x8xbf16, #tpu.memory_space<vmem>>, vector<4x8xbf16>
      tpu.vector_store %arg6[%c212, %c0_279], %285 {strides = array<i32>} : memref<664x8xbf16, #tpu.memory_space<vmem>>, vector<4x8xbf16>,
      %c22_i32_280 = arith.constant 22 : i32
      %287 = arith.addi %c22_i32_280, %261 : i32
      %c0_281 = arith.constant 0 : index
      %288 = arith.index_cast %287 : i32 to index
      %c0_282 = arith.constant 0 : index
      %c2_283 = arith.constant 2 : index
      %289 = vector.load %arg2[%c0_281, %288, %c0_282, %c2_283] : memref<1x44x4x13xbf16, #tpu.memory_space<vmem>>, vector<1x1x4x8xbf16>
      %290 = vector.shape_cast %289 : vector<1x1x4x8xbf16> to vector<4x8xbf16>
      %c216 = arith.constant 216 : index
      %c0_284 = arith.constant 0 : index
      %291 = vector.load %arg6[%c216, %c0_284] : memref<664x8xbf16, #tpu.memory_space<vmem>>, vector<4x8xbf16>
      tpu.vector_store %arg6[%c216, %c0_284], %290 {strides = array<i32>} : memref<664x8xbf16, #tpu.memory_space<vmem>>, vector<4x8xbf16>,
      %c0_i32_285 = arith.constant 0 : i32
      %292 = arith.addi %c0_i32_285, %261 : i32
      %c0_286 = arith.constant 0 : index
      %293 = arith.index_cast %292 : i32 to index
      %c0_287 = arith.constant 0 : index
      %c3_288 = arith.constant 3 : index
      %294 = vector.load %arg2[%c0_286, %293, %c0_287, %c3_288] : memref<1x44x4x13xbf16, #tpu.memory_space<vmem>>, vector<1x1x4x8xbf16>
      %295 = vector.shape_cast %294 : vector<1x1x4x8xbf16> to vector<4x8xbf16>
      %c220 = arith.constant 220 : index
      %c0_289 = arith.constant 0 : index
      %296 = vector.load %arg6[%c220, %c0_289] : memref<664x8xbf16, #tpu.memory_space<vmem>>, vector<4x8xbf16>
      tpu.vector_store %arg6[%c220, %c0_289], %295 {strides = array<i32>} : memref<664x8xbf16, #tpu.memory_space<vmem>>, vector<4x8xbf16>,
      %c22_i32_290 = arith.constant 22 : i32
      %297 = arith.addi %c22_i32_290, %261 : i32
      %c0_291 = arith.constant 0 : index
      %298 = arith.index_cast %297 : i32 to index
      %c0_292 = arith.constant 0 : index
      %c3_293 = arith.constant 3 : index
      %299 = vector.load %arg2[%c0_291, %298, %c0_292, %c3_293] : memref<1x44x4x13xbf16, #tpu.memory_space<vmem>>, vector<1x1x4x8xbf16>
      %300 = vector.shape_cast %299 : vector<1x1x4x8xbf16> to vector<4x8xbf16>
      %c224 = arith.constant 224 : index
      %c0_294 = arith.constant 0 : index
      %301 = vector.load %arg6[%c224, %c0_294] : memref<664x8xbf16, #tpu.memory_space<vmem>>, vector<4x8xbf16>
      tpu.vector_store %arg6[%c224, %c0_294], %300 {strides = array<i32>} : memref<664x8xbf16, #tpu.memory_space<vmem>>, vector<4x8xbf16>,
      %c0_i32_295 = arith.constant 0 : i32
      %302 = arith.addi %c0_i32_295, %261 : i32
      %c0_296 = arith.constant 0 : index
      %303 = arith.index_cast %302 : i32 to index
      %c0_297 = arith.constant 0 : index
      %c4_298 = arith.constant 4 : index
      %304 = vector.load %arg2[%c0_296, %303, %c0_297, %c4_298] : memref<1x44x4x13xbf16, #tpu.memory_space<vmem>>, vector<1x1x4x8xbf16>
      %305 = vector.shape_cast %304 : vector<1x1x4x8xbf16> to vector<4x8xbf16>
      %c228 = arith.constant 228 : index
      %c0_299 = arith.constant 0 : index
      %306 = vector.load %arg6[%c228, %c0_299] : memref<664x8xbf16, #tpu.memory_space<vmem>>, vector<4x8xbf16>
      tpu.vector_store %arg6[%c228, %c0_299], %305 {strides = array<i32>} : memref<664x8xbf16, #tpu.memory_space<vmem>>, vector<4x8xbf16>,
      %c22_i32_300 = arith.constant 22 : i32
      %307 = arith.addi %c22_i32_300, %261 : i32
      %c0_301 = arith.constant 0 : index
      %308 = arith.index_cast %307 : i32 to index
      %c0_302 = arith.constant 0 : index
      %c4_303 = arith.constant 4 : index
      %309 = vector.load %arg2[%c0_301, %308, %c0_302, %c4_303] : memref<1x44x4x13xbf16, #tpu.memory_space<vmem>>, vector<1x1x4x8xbf16>
      %310 = vector.shape_cast %309 : vector<1x1x4x8xbf16> to vector<4x8xbf16>
      %c232 = arith.constant 232 : index
      %c0_304 = arith.constant 0 : index
      %311 = vector.load %arg6[%c232, %c0_304] : memref<664x8xbf16, #tpu.memory_space<vmem>>, vector<4x8xbf16>
      tpu.vector_store %arg6[%c232, %c0_304], %310 {strides = array<i32>} : memref<664x8xbf16, #tpu.memory_space<vmem>>, vector<4x8xbf16>,
      %c0_i32_305 = arith.constant 0 : i32
      %312 = arith.addi %c0_i32_305, %261 : i32
      %c0_306 = arith.constant 0 : index
      %313 = arith.index_cast %312 : i32 to index
      %c0_307 = arith.constant 0 : index
      %c5_308 = arith.constant 5 : index
      %314 = vector.load %arg2[%c0_306, %313, %c0_307, %c5_308] : memref<1x44x4x13xbf16, #tpu.memory_space<vmem>>, vector<1x1x4x8xbf16>
      %315 = vector.shape_cast %314 : vector<1x1x4x8xbf16> to vector<4x8xbf16>
      %c236 = arith.constant 236 : index
      %c0_309 = arith.constant 0 : index
      %316 = vector.load %arg6[%c236, %c0_309] : memref<664x8xbf16, #tpu.memory_space<vmem>>, vector<4x8xbf16>
      tpu.vector_store %arg6[%c236, %c0_309], %315 {strides = array<i32>} : memref<664x8xbf16, #tpu.memory_space<vmem>>, vector<4x8xbf16>,
      %c2_i32_310 = arith.constant 2 : i32
      %317 = arith.muli %c2_i32_310, %4 : i32
      %c4_i32_311 = arith.constant 4 : i32
      %318 = arith.addi %317, %c4_i32_311 : i32
      %c0_i32_312 = arith.constant 0 : i32
      %319 = arith.addi %c0_i32_312, %318 : i32
      %c0_313 = arith.constant 0 : index
      %320 = arith.index_cast %319 : i32 to index
      %c0_314 = arith.constant 0 : index
      %c0_315 = arith.constant 0 : index
      %321 = vector.load %arg2[%c0_313, %320, %c0_314, %c0_315] : memref<1x44x4x13xbf16, #tpu.memory_space<vmem>>, vector<1x1x4x8xbf16>
      %322 = vector.shape_cast %321 : vector<1x1x4x8xbf16> to vector<4x8xbf16>
      %c240 = arith.constant 240 : index
      %c0_316 = arith.constant 0 : index
      %323 = vector.load %arg6[%c240, %c0_316] : memref<664x8xbf16, #tpu.memory_space<vmem>>, vector<4x8xbf16>
      tpu.vector_store %arg6[%c240, %c0_316], %322 {strides = array<i32>} : memref<664x8xbf16, #tpu.memory_space<vmem>>, vector<4x8xbf16>,
      %c22_i32_317 = arith.constant 22 : i32
      %324 = arith.addi %c22_i32_317, %318 : i32
      %c0_318 = arith.constant 0 : index
      %325 = arith.index_cast %324 : i32 to index
      %c0_319 = arith.constant 0 : index
      %c0_320 = arith.constant 0 : index
      %326 = vector.load %arg2[%c0_318, %325, %c0_319, %c0_320] : memref<1x44x4x13xbf16, #tpu.memory_space<vmem>>, vector<1x1x4x8xbf16>
      %327 = vector.shape_cast %326 : vector<1x1x4x8xbf16> to vector<4x8xbf16>
      %c244 = arith.constant 244 : index
      %c0_321 = arith.constant 0 : index
      %328 = vector.load %arg6[%c244, %c0_321] : memref<664x8xbf16, #tpu.memory_space<vmem>>, vector<4x8xbf16>
      tpu.vector_store %arg6[%c244, %c0_321], %327 {strides = array<i32>} : memref<664x8xbf16, #tpu.memory_space<vmem>>, vector<4x8xbf16>,
      %c0_i32_322 = arith.constant 0 : i32
      %329 = arith.addi %c0_i32_322, %318 : i32
      %c0_323 = arith.constant 0 : index
      %330 = arith.index_cast %329 : i32 to index
      %c0_324 = arith.constant 0 : index
      %c1_325 = arith.constant 1 : index
      %331 = vector.load %arg2[%c0_323, %330, %c0_324, %c1_325] : memref<1x44x4x13xbf16, #tpu.memory_space<vmem>>, vector<1x1x4x8xbf16>
      %332 = vector.shape_cast %331 : vector<1x1x4x8xbf16> to vector<4x8xbf16>
      %c248 = arith.constant 248 : index
      %c0_326 = arith.constant 0 : index
      %333 = vector.load %arg6[%c248, %c0_326] : memref<664x8xbf16, #tpu.memory_space<vmem>>, vector<4x8xbf16>
      tpu.vector_store %arg6[%c248, %c0_326], %332 {strides = array<i32>} : memref<664x8xbf16, #tpu.memory_space<vmem>>, vector<4x8xbf16>,
      %c22_i32_327 = arith.constant 22 : i32
      %334 = arith.addi %c22_i32_327, %318 : i32
      %c0_328 = arith.constant 0 : index
      %335 = arith.index_cast %334 : i32 to index
      %c0_329 = arith.constant 0 : index
      %c1_330 = arith.constant 1 : index
      %336 = vector.load %arg2[%c0_328, %335, %c0_329, %c1_330] : memref<1x44x4x13xbf16, #tpu.memory_space<vmem>>, vector<1x1x4x8xbf16>
      %337 = vector.shape_cast %336 : vector<1x1x4x8xbf16> to vector<4x8xbf16>
      %c252 = arith.constant 252 : index
      %c0_331 = arith.constant 0 : index
      %338 = vector.load %arg6[%c252, %c0_331] : memref<664x8xbf16, #tpu.memory_space<vmem>>, vector<4x8xbf16>
      tpu.vector_store %arg6[%c252, %c0_331], %337 {strides = array<i32>} : memref<664x8xbf16, #tpu.memory_space<vmem>>, vector<4x8xbf16>,
      %c0_i32_332 = arith.constant 0 : i32
      %339 = arith.addi %c0_i32_332, %318 : i32
      %c0_333 = arith.constant 0 : index
      %340 = arith.index_cast %339 : i32 to index
      %c0_334 = arith.constant 0 : index
      %c2_335 = arith.constant 2 : index
      %341 = vector.load %arg2[%c0_333, %340, %c0_334, %c2_335] : memref<1x44x4x13xbf16, #tpu.memory_space<vmem>>, vector<1x1x4x8xbf16>
      %342 = vector.shape_cast %341 : vector<1x1x4x8xbf16> to vector<4x8xbf16>
      %c256 = arith.constant 256 : index
      %c0_336 = arith.constant 0 : index
      %343 = vector.load %arg6[%c256, %c0_336] : memref<664x8xbf16, #tpu.memory_space<vmem>>, vector<4x8xbf16>
      tpu.vector_store %arg6[%c256, %c0_336], %342 {strides = array<i32>} : memref<664x8xbf16, #tpu.memory_space<vmem>>, vector<4x8xbf16>,
      %c22_i32_337 = arith.constant 22 : i32
      %344 = arith.addi %c22_i32_337, %318 : i32
      %c0_338 = arith.constant 0 : index
      %345 = arith.index_cast %344 : i32 to index
      %c0_339 = arith.constant 0 : index
      %c2_340 = arith.constant 2 : index
      %346 = vector.load %arg2[%c0_338, %345, %c0_339, %c2_340] : memref<1x44x4x13xbf16, #tpu.memory_space<vmem>>, vector<1x1x4x8xbf16>
      %347 = vector.shape_cast %346 : vector<1x1x4x8xbf16> to vector<4x8xbf16>
      %c260 = arith.constant 260 : index
      %c0_341 = arith.constant 0 : index
      %348 = vector.load %arg6[%c260, %c0_341] : memref<664x8xbf16, #tpu.memory_space<vmem>>, vector<4x8xbf16>
      tpu.vector_store %arg6[%c260, %c0_341], %347 {strides = array<i32>} : memref<664x8xbf16, #tpu.memory_space<vmem>>, vector<4x8xbf16>,
      %c0_i32_342 = arith.constant 0 : i32
      %349 = arith.addi %c0_i32_342, %318 : i32
      %c0_343 = arith.constant 0 : index
      %350 = arith.index_cast %349 : i32 to index
      %c0_344 = arith.constant 0 : index
      %c3_345 = arith.constant 3 : index
      %351 = vector.load %arg2[%c0_343, %350, %c0_344, %c3_345] : memref<1x44x4x13xbf16, #tpu.memory_space<vmem>>, vector<1x1x4x8xbf16>
      %352 = vector.shape_cast %351 : vector<1x1x4x8xbf16> to vector<4x8xbf16>
      %c264 = arith.constant 264 : index
      %c0_346 = arith.constant 0 : index
      %353 = vector.load %arg6[%c264, %c0_346] : memref<664x8xbf16, #tpu.memory_space<vmem>>, vector<4x8xbf16>
      tpu.vector_store %arg6[%c264, %c0_346], %352 {strides = array<i32>} : memref<664x8xbf16, #tpu.memory_space<vmem>>, vector<4x8xbf16>,
      %c22_i32_347 = arith.constant 22 : i32
      %354 = arith.addi %c22_i32_347, %318 : i32
      %c0_348 = arith.constant 0 : index
      %355 = arith.index_cast %354 : i32 to index
      %c0_349 = arith.constant 0 : index
      %c3_350 = arith.constant 3 : index
      %356 = vector.load %arg2[%c0_348, %355, %c0_349, %c3_350] : memref<1x44x4x13xbf16, #tpu.memory_space<vmem>>, vector<1x1x4x8xbf16>
      %357 = vector.shape_cast %356 : vector<1x1x4x8xbf16> to vector<4x8xbf16>
      %c268 = arith.constant 268 : index
      %c0_351 = arith.constant 0 : index
      %358 = vector.load %arg6[%c268, %c0_351] : memref<664x8xbf16, #tpu.memory_space<vmem>>, vector<4x8xbf16>
      tpu.vector_store %arg6[%c268, %c0_351], %357 {strides = array<i32>} : memref<664x8xbf16, #tpu.memory_space<vmem>>, vector<4x8xbf16>,
      %c0_i32_352 = arith.constant 0 : i32
      %359 = arith.addi %c0_i32_352, %318 : i32
      %c0_353 = arith.constant 0 : index
      %360 = arith.index_cast %359 : i32 to index
      %c0_354 = arith.constant 0 : index
      %c4_355 = arith.constant 4 : index
      %361 = vector.load %arg2[%c0_353, %360, %c0_354, %c4_355] : memref<1x44x4x13xbf16, #tpu.memory_space<vmem>>, vector<1x1x4x8xbf16>
      %362 = vector.shape_cast %361 : vector<1x1x4x8xbf16> to vector<4x8xbf16>
      %c272 = arith.constant 272 : index
      %c0_356 = arith.constant 0 : index
      %363 = vector.load %arg6[%c272, %c0_356] : memref<664x8xbf16, #tpu.memory_space<vmem>>, vector<4x8xbf16>
      tpu.vector_store %arg6[%c272, %c0_356], %362 {strides = array<i32>} : memref<664x8xbf16, #tpu.memory_space<vmem>>, vector<4x8xbf16>,
      %c22_i32_357 = arith.constant 22 : i32
      %364 = arith.addi %c22_i32_357, %318 : i32
      %c0_358 = arith.constant 0 : index
      %365 = arith.index_cast %364 : i32 to index
      %c0_359 = arith.constant 0 : index
      %c4_360 = arith.constant 4 : index
      %366 = vector.load %arg2[%c0_358, %365, %c0_359, %c4_360] : memref<1x44x4x13xbf16, #tpu.memory_space<vmem>>, vector<1x1x4x8xbf16>
      %367 = vector.shape_cast %366 : vector<1x1x4x8xbf16> to vector<4x8xbf16>
      %c276 = arith.constant 276 : index
      %c0_361 = arith.constant 0 : index
      %368 = vector.load %arg6[%c276, %c0_361] : memref<664x8xbf16, #tpu.memory_space<vmem>>, vector<4x8xbf16>
      tpu.vector_store %arg6[%c276, %c0_361], %367 {strides = array<i32>} : memref<664x8xbf16, #tpu.memory_space<vmem>>, vector<4x8xbf16>,
      %c0_i32_362 = arith.constant 0 : i32
      %369 = arith.addi %c0_i32_362, %318 : i32
      %c0_363 = arith.constant 0 : index
      %370 = arith.index_cast %369 : i32 to index
      %c0_364 = arith.constant 0 : index
      %c5_365 = arith.constant 5 : index
      %371 = vector.load %arg2[%c0_363, %370, %c0_364, %c5_365] : memref<1x44x4x13xbf16, #tpu.memory_space<vmem>>, vector<1x1x4x8xbf16>
      %372 = vector.shape_cast %371 : vector<1x1x4x8xbf16> to vector<4x8xbf16>
      %c280 = arith.constant 280 : index
      %c0_366 = arith.constant 0 : index
      %373 = vector.load %arg6[%c280, %c0_366] : memref<664x8xbf16, #tpu.memory_space<vmem>>, vector<4x8xbf16>
      tpu.vector_store %arg6[%c280, %c0_366], %372 {strides = array<i32>} : memref<664x8xbf16, #tpu.memory_space<vmem>>, vector<4x8xbf16>,
      %c2_i32_367 = arith.constant 2 : i32
      %374 = arith.muli %c2_i32_367, %4 : i32
      %c5_i32 = arith.constant 5 : i32
      %375 = arith.addi %374, %c5_i32 : i32
      %c0_i32_368 = arith.constant 0 : i32
      %376 = arith.addi %c0_i32_368, %375 : i32
      %c0_369 = arith.constant 0 : index
      %377 = arith.index_cast %376 : i32 to index
      %c0_370 = arith.constant 0 : index
      %c0_371 = arith.constant 0 : index
      %378 = vector.load %arg2[%c0_369, %377, %c0_370, %c0_371] : memref<1x44x4x13xbf16, #tpu.memory_space<vmem>>, vector<1x1x4x8xbf16>
      %379 = vector.shape_cast %378 : vector<1x1x4x8xbf16> to vector<4x8xbf16>
      %c284 = arith.constant 284 : index
      %c0_372 = arith.constant 0 : index
      %380 = vector.load %arg6[%c284, %c0_372] : memref<664x8xbf16, #tpu.memory_space<vmem>>, vector<4x8xbf16>
      tpu.vector_store %arg6[%c284, %c0_372], %379 {strides = array<i32>} : memref<664x8xbf16, #tpu.memory_space<vmem>>, vector<4x8xbf16>,
      %c22_i32_373 = arith.constant 22 : i32
      %381 = arith.addi %c22_i32_373, %375 : i32
      %c0_374 = arith.constant 0 : index
      %382 = arith.index_cast %381 : i32 to index
      %c0_375 = arith.constant 0 : index
      %c0_376 = arith.constant 0 : index
      %383 = vector.load %arg2[%c0_374, %382, %c0_375, %c0_376] : memref<1x44x4x13xbf16, #tpu.memory_space<vmem>>, vector<1x1x4x8xbf16>
      %384 = vector.shape_cast %383 : vector<1x1x4x8xbf16> to vector<4x8xbf16>
      %c288 = arith.constant 288 : index
      %c0_377 = arith.constant 0 : index
      %385 = vector.load %arg6[%c288, %c0_377] : memref<664x8xbf16, #tpu.memory_space<vmem>>, vector<4x8xbf16>
      tpu.vector_store %arg6[%c288, %c0_377], %384 {strides = array<i32>} : memref<664x8xbf16, #tpu.memory_space<vmem>>, vector<4x8xbf16>,
      %c0_i32_378 = arith.constant 0 : i32
      %386 = arith.addi %c0_i32_378, %375 : i32
      %c0_379 = arith.constant 0 : index
      %387 = arith.index_cast %386 : i32 to index
      %c0_380 = arith.constant 0 : index
      %c1_381 = arith.constant 1 : index
      %388 = vector.load %arg2[%c0_379, %387, %c0_380, %c1_381] : memref<1x44x4x13xbf16, #tpu.memory_space<vmem>>, vector<1x1x4x8xbf16>
      %389 = vector.shape_cast %388 : vector<1x1x4x8xbf16> to vector<4x8xbf16>
      %c292 = arith.constant 292 : index
      %c0_382 = arith.constant 0 : index
      %390 = vector.load %arg6[%c292, %c0_382] : memref<664x8xbf16, #tpu.memory_space<vmem>>, vector<4x8xbf16>
      tpu.vector_store %arg6[%c292, %c0_382], %389 {strides = array<i32>} : memref<664x8xbf16, #tpu.memory_space<vmem>>, vector<4x8xbf16>,
      %c22_i32_383 = arith.constant 22 : i32
      %391 = arith.addi %c22_i32_383, %375 : i32
      %c0_384 = arith.constant 0 : index
      %392 = arith.index_cast %391 : i32 to index
      %c0_385 = arith.constant 0 : index
      %c1_386 = arith.constant 1 : index
      %393 = vector.load %arg2[%c0_384, %392, %c0_385, %c1_386] : memref<1x44x4x13xbf16, #tpu.memory_space<vmem>>, vector<1x1x4x8xbf16>
      %394 = vector.shape_cast %393 : vector<1x1x4x8xbf16> to vector<4x8xbf16>
      %c296 = arith.constant 296 : index
      %c0_387 = arith.constant 0 : index
      %395 = vector.load %arg6[%c296, %c0_387] : memref<664x8xbf16, #tpu.memory_space<vmem>>, vector<4x8xbf16>
      tpu.vector_store %arg6[%c296, %c0_387], %394 {strides = array<i32>} : memref<664x8xbf16, #tpu.memory_space<vmem>>, vector<4x8xbf16>,
      %c0_i32_388 = arith.constant 0 : i32
      %396 = arith.addi %c0_i32_388, %375 : i32
      %c0_389 = arith.constant 0 : index
      %397 = arith.index_cast %396 : i32 to index
      %c0_390 = arith.constant 0 : index
      %c2_391 = arith.constant 2 : index
      %398 = vector.load %arg2[%c0_389, %397, %c0_390, %c2_391] : memref<1x44x4x13xbf16, #tpu.memory_space<vmem>>, vector<1x1x4x8xbf16>
      %399 = vector.shape_cast %398 : vector<1x1x4x8xbf16> to vector<4x8xbf16>
      %c300 = arith.constant 300 : index
      %c0_392 = arith.constant 0 : index
      %400 = vector.load %arg6[%c300, %c0_392] : memref<664x8xbf16, #tpu.memory_space<vmem>>, vector<4x8xbf16>
      tpu.vector_store %arg6[%c300, %c0_392], %399 {strides = array<i32>} : memref<664x8xbf16, #tpu.memory_space<vmem>>, vector<4x8xbf16>,
      %c22_i32_393 = arith.constant 22 : i32
      %401 = arith.addi %c22_i32_393, %375 : i32
      %c0_394 = arith.constant 0 : index
      %402 = arith.index_cast %401 : i32 to index
      %c0_395 = arith.constant 0 : index
      %c2_396 = arith.constant 2 : index
      %403 = vector.load %arg2[%c0_394, %402, %c0_395, %c2_396] : memref<1x44x4x13xbf16, #tpu.memory_space<vmem>>, vector<1x1x4x8xbf16>
      %404 = vector.shape_cast %403 : vector<1x1x4x8xbf16> to vector<4x8xbf16>
      %c304 = arith.constant 304 : index
      %c0_397 = arith.constant 0 : index
      %405 = vector.load %arg6[%c304, %c0_397] : memref<664x8xbf16, #tpu.memory_space<vmem>>, vector<4x8xbf16>
      tpu.vector_store %arg6[%c304, %c0_397], %404 {strides = array<i32>} : memref<664x8xbf16, #tpu.memory_space<vmem>>, vector<4x8xbf16>,
      %c0_i32_398 = arith.constant 0 : i32
      %406 = arith.addi %c0_i32_398, %375 : i32
      %c0_399 = arith.constant 0 : index
      %407 = arith.index_cast %406 : i32 to index
      %c0_400 = arith.constant 0 : index
      %c3_401 = arith.constant 3 : index
      %408 = vector.load %arg2[%c0_399, %407, %c0_400, %c3_401] : memref<1x44x4x13xbf16, #tpu.memory_space<vmem>>, vector<1x1x4x8xbf16>
      %409 = vector.shape_cast %408 : vector<1x1x4x8xbf16> to vector<4x8xbf16>
      %c308 = arith.constant 308 : index
      %c0_402 = arith.constant 0 : index
      %410 = vector.load %arg6[%c308, %c0_402] : memref<664x8xbf16, #tpu.memory_space<vmem>>, vector<4x8xbf16>
      tpu.vector_store %arg6[%c308, %c0_402], %409 {strides = array<i32>} : memref<664x8xbf16, #tpu.memory_space<vmem>>, vector<4x8xbf16>,
      %c22_i32_403 = arith.constant 22 : i32
      %411 = arith.addi %c22_i32_403, %375 : i32
      %c0_404 = arith.constant 0 : index
      %412 = arith.index_cast %411 : i32 to index
      %c0_405 = arith.constant 0 : index
      %c3_406 = arith.constant 3 : index
      %413 = vector.load %arg2[%c0_404, %412, %c0_405, %c3_406] : memref<1x44x4x13xbf16, #tpu.memory_space<vmem>>, vector<1x1x4x8xbf16>
      %414 = vector.shape_cast %413 : vector<1x1x4x8xbf16> to vector<4x8xbf16>
      %c312 = arith.constant 312 : index
      %c0_407 = arith.constant 0 : index
      %415 = vector.load %arg6[%c312, %c0_407] : memref<664x8xbf16, #tpu.memory_space<vmem>>, vector<4x8xbf16>
      tpu.vector_store %arg6[%c312, %c0_407], %414 {strides = array<i32>} : memref<664x8xbf16, #tpu.memory_space<vmem>>, vector<4x8xbf16>,
      %c0_i32_408 = arith.constant 0 : i32
      %416 = arith.addi %c0_i32_408, %375 : i32
      %c0_409 = arith.constant 0 : index
      %417 = arith.index_cast %416 : i32 to index
      %c0_410 = arith.constant 0 : index
      %c4_411 = arith.constant 4 : index
      %418 = vector.load %arg2[%c0_409, %417, %c0_410, %c4_411] : memref<1x44x4x13xbf16, #tpu.memory_space<vmem>>, vector<1x1x4x8xbf16>
      %419 = vector.shape_cast %418 : vector<1x1x4x8xbf16> to vector<4x8xbf16>
      %c316 = arith.constant 316 : index
      %c0_412 = arith.constant 0 : index
      %420 = vector.load %arg6[%c316, %c0_412] : memref<664x8xbf16, #tpu.memory_space<vmem>>, vector<4x8xbf16>
      tpu.vector_store %arg6[%c316, %c0_412], %419 {strides = array<i32>} : memref<664x8xbf16, #tpu.memory_space<vmem>>, vector<4x8xbf16>,
      %c22_i32_413 = arith.constant 22 : i32
      %421 = arith.addi %c22_i32_413, %375 : i32
      %c0_414 = arith.constant 0 : index
      %422 = arith.index_cast %421 : i32 to index
      %c0_415 = arith.constant 0 : index
      %c4_416 = arith.constant 4 : index
      %423 = vector.load %arg2[%c0_414, %422, %c0_415, %c4_416] : memref<1x44x4x13xbf16, #tpu.memory_space<vmem>>, vector<1x1x4x8xbf16>
      %424 = vector.shape_cast %423 : vector<1x1x4x8xbf16> to vector<4x8xbf16>
      %c320 = arith.constant 320 : index
      %c0_417 = arith.constant 0 : index
      %425 = vector.load %arg6[%c320, %c0_417] : memref<664x8xbf16, #tpu.memory_space<vmem>>, vector<4x8xbf16>
      tpu.vector_store %arg6[%c320, %c0_417], %424 {strides = array<i32>} : memref<664x8xbf16, #tpu.memory_space<vmem>>, vector<4x8xbf16>,
      %c0_i32_418 = arith.constant 0 : i32
      %426 = arith.addi %c0_i32_418, %375 : i32
      %c0_419 = arith.constant 0 : index
      %427 = arith.index_cast %426 : i32 to index
      %c0_420 = arith.constant 0 : index
      %c5_421 = arith.constant 5 : index
      %428 = vector.load %arg2[%c0_419, %427, %c0_420, %c5_421] : memref<1x44x4x13xbf16, #tpu.memory_space<vmem>>, vector<1x1x4x8xbf16>
      %429 = vector.shape_cast %428 : vector<1x1x4x8xbf16> to vector<4x8xbf16>
      %c324 = arith.constant 324 : index
      %c0_422 = arith.constant 0 : index
      %430 = vector.load %arg6[%c324, %c0_422] : memref<664x8xbf16, #tpu.memory_space<vmem>>, vector<4x8xbf16>
      tpu.vector_store %arg6[%c324, %c0_422], %429 {strides = array<i32>} : memref<664x8xbf16, #tpu.memory_space<vmem>>, vector<4x8xbf16>,
      %c2_i32_423 = arith.constant 2 : i32
      %431 = arith.muli %c2_i32_423, %4 : i32
      %c1_i32_424 = arith.constant 1 : i32
      %432 = arith.addi %431, %c1_i32_424 : i32
      %c0_i32_425 = arith.constant 0 : i32
      %433 = arith.addi %c0_i32_425, %432 : i32
      %c0_426 = arith.constant 0 : index
      %434 = arith.index_cast %433 : i32 to index
      %c0_427 = arith.constant 0 : index
      %c1_428 = arith.constant 1 : index
      %435 = vector.load %arg2[%c0_426, %434, %c0_427, %c1_428] : memref<1x44x4x13xbf16, #tpu.memory_space<vmem>>, vector<1x1x4x8xbf16>
      %436 = vector.shape_cast %435 : vector<1x1x4x8xbf16> to vector<4x8xbf16>
      %c328 = arith.constant 328 : index
      %c0_429 = arith.constant 0 : index
      %437 = vector.load %arg6[%c328, %c0_429] : memref<664x8xbf16, #tpu.memory_space<vmem>>, vector<4x8xbf16>
      tpu.vector_store %arg6[%c328, %c0_429], %436 {strides = array<i32>} : memref<664x8xbf16, #tpu.memory_space<vmem>>, vector<4x8xbf16>,
      %c22_i32_430 = arith.constant 22 : i32
      %438 = arith.addi %c22_i32_430, %432 : i32
      %c0_431 = arith.constant 0 : index
      %439 = arith.index_cast %438 : i32 to index
      %c0_432 = arith.constant 0 : index
      %c1_433 = arith.constant 1 : index
      %440 = vector.load %arg2[%c0_431, %439, %c0_432, %c1_433] : memref<1x44x4x13xbf16, #tpu.memory_space<vmem>>, vector<1x1x4x8xbf16>
      %441 = vector.shape_cast %440 : vector<1x1x4x8xbf16> to vector<4x8xbf16>
      %c332 = arith.constant 332 : index
      %c0_434 = arith.constant 0 : index
      %442 = vector.load %arg6[%c332, %c0_434] : memref<664x8xbf16, #tpu.memory_space<vmem>>, vector<4x8xbf16>
      tpu.vector_store %arg6[%c332, %c0_434], %441 {strides = array<i32>} : memref<664x8xbf16, #tpu.memory_space<vmem>>, vector<4x8xbf16>,
      %c0_i32_435 = arith.constant 0 : i32
      %443 = arith.addi %c0_i32_435, %432 : i32
      %c0_436 = arith.constant 0 : index
      %444 = arith.index_cast %443 : i32 to index
      %c0_437 = arith.constant 0 : index
      %c2_438 = arith.constant 2 : index
      %445 = vector.load %arg2[%c0_436, %444, %c0_437, %c2_438] : memref<1x44x4x13xbf16, #tpu.memory_space<vmem>>, vector<1x1x4x8xbf16>
      %446 = vector.shape_cast %445 : vector<1x1x4x8xbf16> to vector<4x8xbf16>
      %c336 = arith.constant 336 : index
      %c0_439 = arith.constant 0 : index
      %447 = vector.load %arg6[%c336, %c0_439] : memref<664x8xbf16, #tpu.memory_space<vmem>>, vector<4x8xbf16>
      tpu.vector_store %arg6[%c336, %c0_439], %446 {strides = array<i32>} : memref<664x8xbf16, #tpu.memory_space<vmem>>, vector<4x8xbf16>,
      %c22_i32_440 = arith.constant 22 : i32
      %448 = arith.addi %c22_i32_440, %432 : i32
      %c0_441 = arith.constant 0 : index
      %449 = arith.index_cast %448 : i32 to index
      %c0_442 = arith.constant 0 : index
      %c2_443 = arith.constant 2 : index
      %450 = vector.load %arg2[%c0_441, %449, %c0_442, %c2_443] : memref<1x44x4x13xbf16, #tpu.memory_space<vmem>>, vector<1x1x4x8xbf16>
      %451 = vector.shape_cast %450 : vector<1x1x4x8xbf16> to vector<4x8xbf16>
      %c340 = arith.constant 340 : index
      %c0_444 = arith.constant 0 : index
      %452 = vector.load %arg6[%c340, %c0_444] : memref<664x8xbf16, #tpu.memory_space<vmem>>, vector<4x8xbf16>
      tpu.vector_store %arg6[%c340, %c0_444], %451 {strides = array<i32>} : memref<664x8xbf16, #tpu.memory_space<vmem>>, vector<4x8xbf16>,
      %c0_i32_445 = arith.constant 0 : i32
      %453 = arith.addi %c0_i32_445, %432 : i32
      %c0_446 = arith.constant 0 : index
      %454 = arith.index_cast %453 : i32 to index
      %c0_447 = arith.constant 0 : index
      %c3_448 = arith.constant 3 : index
      %455 = vector.load %arg2[%c0_446, %454, %c0_447, %c3_448] : memref<1x44x4x13xbf16, #tpu.memory_space<vmem>>, vector<1x1x4x8xbf16>
      %456 = vector.shape_cast %455 : vector<1x1x4x8xbf16> to vector<4x8xbf16>
      %c344 = arith.constant 344 : index
      %c0_449 = arith.constant 0 : index
      %457 = vector.load %arg6[%c344, %c0_449] : memref<664x8xbf16, #tpu.memory_space<vmem>>, vector<4x8xbf16>
      tpu.vector_store %arg6[%c344, %c0_449], %456 {strides = array<i32>} : memref<664x8xbf16, #tpu.memory_space<vmem>>, vector<4x8xbf16>,
      %c22_i32_450 = arith.constant 22 : i32
      %458 = arith.addi %c22_i32_450, %432 : i32
      %c0_451 = arith.constant 0 : index
      %459 = arith.index_cast %458 : i32 to index
      %c0_452 = arith.constant 0 : index
      %c3_453 = arith.constant 3 : index
      %460 = vector.load %arg2[%c0_451, %459, %c0_452, %c3_453] : memref<1x44x4x13xbf16, #tpu.memory_space<vmem>>, vector<1x1x4x8xbf16>
      %461 = vector.shape_cast %460 : vector<1x1x4x8xbf16> to vector<4x8xbf16>
      %c348 = arith.constant 348 : index
      %c0_454 = arith.constant 0 : index
      %462 = vector.load %arg6[%c348, %c0_454] : memref<664x8xbf16, #tpu.memory_space<vmem>>, vector<4x8xbf16>
      tpu.vector_store %arg6[%c348, %c0_454], %461 {strides = array<i32>} : memref<664x8xbf16, #tpu.memory_space<vmem>>, vector<4x8xbf16>,
      %c0_i32_455 = arith.constant 0 : i32
      %463 = arith.addi %c0_i32_455, %432 : i32
      %c0_456 = arith.constant 0 : index
      %464 = arith.index_cast %463 : i32 to index
      %c0_457 = arith.constant 0 : index
      %c4_458 = arith.constant 4 : index
      %465 = vector.load %arg2[%c0_456, %464, %c0_457, %c4_458] : memref<1x44x4x13xbf16, #tpu.memory_space<vmem>>, vector<1x1x4x8xbf16>
      %466 = vector.shape_cast %465 : vector<1x1x4x8xbf16> to vector<4x8xbf16>
      %c352 = arith.constant 352 : index
      %c0_459 = arith.constant 0 : index
      %467 = vector.load %arg6[%c352, %c0_459] : memref<664x8xbf16, #tpu.memory_space<vmem>>, vector<4x8xbf16>
      tpu.vector_store %arg6[%c352, %c0_459], %466 {strides = array<i32>} : memref<664x8xbf16, #tpu.memory_space<vmem>>, vector<4x8xbf16>,
      %c2_i32_460 = arith.constant 2 : i32
      %468 = arith.muli %c2_i32_460, %4 : i32
      %c2_i32_461 = arith.constant 2 : i32
      %469 = arith.addi %468, %c2_i32_461 : i32
      %c0_i32_462 = arith.constant 0 : i32
      %470 = arith.addi %c0_i32_462, %469 : i32
      %c0_463 = arith.constant 0 : index
      %471 = arith.index_cast %470 : i32 to index
      %c0_464 = arith.constant 0 : index
      %c1_465 = arith.constant 1 : index
      %472 = vector.load %arg2[%c0_463, %471, %c0_464, %c1_465] : memref<1x44x4x13xbf16, #tpu.memory_space<vmem>>, vector<1x1x4x8xbf16>
      %473 = vector.shape_cast %472 : vector<1x1x4x8xbf16> to vector<4x8xbf16>
      %c356 = arith.constant 356 : index
      %c0_466 = arith.constant 0 : index
      %474 = vector.load %arg6[%c356, %c0_466] : memref<664x8xbf16, #tpu.memory_space<vmem>>, vector<4x8xbf16>
      tpu.vector_store %arg6[%c356, %c0_466], %473 {strides = array<i32>} : memref<664x8xbf16, #tpu.memory_space<vmem>>, vector<4x8xbf16>,
      %c22_i32_467 = arith.constant 22 : i32
      %475 = arith.addi %c22_i32_467, %469 : i32
      %c0_468 = arith.constant 0 : index
      %476 = arith.index_cast %475 : i32 to index
      %c0_469 = arith.constant 0 : index
      %c1_470 = arith.constant 1 : index
      %477 = vector.load %arg2[%c0_468, %476, %c0_469, %c1_470] : memref<1x44x4x13xbf16, #tpu.memory_space<vmem>>, vector<1x1x4x8xbf16>
      %478 = vector.shape_cast %477 : vector<1x1x4x8xbf16> to vector<4x8xbf16>
      %c360 = arith.constant 360 : index
      %c0_471 = arith.constant 0 : index
      %479 = vector.load %arg6[%c360, %c0_471] : memref<664x8xbf16, #tpu.memory_space<vmem>>, vector<4x8xbf16>
      tpu.vector_store %arg6[%c360, %c0_471], %478 {strides = array<i32>} : memref<664x8xbf16, #tpu.memory_space<vmem>>, vector<4x8xbf16>,
      %c0_i32_472 = arith.constant 0 : i32
      %480 = arith.addi %c0_i32_472, %469 : i32
      %c0_473 = arith.constant 0 : index
      %481 = arith.index_cast %480 : i32 to index
      %c0_474 = arith.constant 0 : index
      %c2_475 = arith.constant 2 : index
      %482 = vector.load %arg2[%c0_473, %481, %c0_474, %c2_475] : memref<1x44x4x13xbf16, #tpu.memory_space<vmem>>, vector<1x1x4x8xbf16>
      %483 = vector.shape_cast %482 : vector<1x1x4x8xbf16> to vector<4x8xbf16>
      %c364 = arith.constant 364 : index
      %c0_476 = arith.constant 0 : index
      %484 = vector.load %arg6[%c364, %c0_476] : memref<664x8xbf16, #tpu.memory_space<vmem>>, vector<4x8xbf16>
      tpu.vector_store %arg6[%c364, %c0_476], %483 {strides = array<i32>} : memref<664x8xbf16, #tpu.memory_space<vmem>>, vector<4x8xbf16>,
      %c22_i32_477 = arith.constant 22 : i32
      %485 = arith.addi %c22_i32_477, %469 : i32
      %c0_478 = arith.constant 0 : index
      %486 = arith.index_cast %485 : i32 to index
      %c0_479 = arith.constant 0 : index
      %c2_480 = arith.constant 2 : index
      %487 = vector.load %arg2[%c0_478, %486, %c0_479, %c2_480] : memref<1x44x4x13xbf16, #tpu.memory_space<vmem>>, vector<1x1x4x8xbf16>
      %488 = vector.shape_cast %487 : vector<1x1x4x8xbf16> to vector<4x8xbf16>
      %c368 = arith.constant 368 : index
      %c0_481 = arith.constant 0 : index
      %489 = vector.load %arg6[%c368, %c0_481] : memref<664x8xbf16, #tpu.memory_space<vmem>>, vector<4x8xbf16>
      tpu.vector_store %arg6[%c368, %c0_481], %488 {strides = array<i32>} : memref<664x8xbf16, #tpu.memory_space<vmem>>, vector<4x8xbf16>,
      %c0_i32_482 = arith.constant 0 : i32
      %490 = arith.addi %c0_i32_482, %469 : i32
      %c0_483 = arith.constant 0 : index
      %491 = arith.index_cast %490 : i32 to index
      %c0_484 = arith.constant 0 : index
      %c3_485 = arith.constant 3 : index
      %492 = vector.load %arg2[%c0_483, %491, %c0_484, %c3_485] : memref<1x44x4x13xbf16, #tpu.memory_space<vmem>>, vector<1x1x4x8xbf16>
      %493 = vector.shape_cast %492 : vector<1x1x4x8xbf16> to vector<4x8xbf16>
      %c372 = arith.constant 372 : index
      %c0_486 = arith.constant 0 : index
      %494 = vector.load %arg6[%c372, %c0_486] : memref<664x8xbf16, #tpu.memory_space<vmem>>, vector<4x8xbf16>
      tpu.vector_store %arg6[%c372, %c0_486], %493 {strides = array<i32>} : memref<664x8xbf16, #tpu.memory_space<vmem>>, vector<4x8xbf16>,
      %c22_i32_487 = arith.constant 22 : i32
      %495 = arith.addi %c22_i32_487, %469 : i32
      %c0_488 = arith.constant 0 : index
      %496 = arith.index_cast %495 : i32 to index
      %c0_489 = arith.constant 0 : index
      %c3_490 = arith.constant 3 : index
      %497 = vector.load %arg2[%c0_488, %496, %c0_489, %c3_490] : memref<1x44x4x13xbf16, #tpu.memory_space<vmem>>, vector<1x1x4x8xbf16>
      %498 = vector.shape_cast %497 : vector<1x1x4x8xbf16> to vector<4x8xbf16>
      %c376 = arith.constant 376 : index
      %c0_491 = arith.constant 0 : index
      %499 = vector.load %arg6[%c376, %c0_491] : memref<664x8xbf16, #tpu.memory_space<vmem>>, vector<4x8xbf16>
      tpu.vector_store %arg6[%c376, %c0_491], %498 {strides = array<i32>} : memref<664x8xbf16, #tpu.memory_space<vmem>>, vector<4x8xbf16>,
      %c0_i32_492 = arith.constant 0 : i32
      %500 = arith.addi %c0_i32_492, %469 : i32
      %c0_493 = arith.constant 0 : index
      %501 = arith.index_cast %500 : i32 to index
      %c0_494 = arith.constant 0 : index
      %c4_495 = arith.constant 4 : index
      %502 = vector.load %arg2[%c0_493, %501, %c0_494, %c4_495] : memref<1x44x4x13xbf16, #tpu.memory_space<vmem>>, vector<1x1x4x8xbf16>
      %503 = vector.shape_cast %502 : vector<1x1x4x8xbf16> to vector<4x8xbf16>
      %c380 = arith.constant 380 : index
      %c0_496 = arith.constant 0 : index
      %504 = vector.load %arg6[%c380, %c0_496] : memref<664x8xbf16, #tpu.memory_space<vmem>>, vector<4x8xbf16>
      tpu.vector_store %arg6[%c380, %c0_496], %503 {strides = array<i32>} : memref<664x8xbf16, #tpu.memory_space<vmem>>, vector<4x8xbf16>,
      %c2_i32_497 = arith.constant 2 : i32
      %505 = arith.muli %c2_i32_497, %4 : i32
      %c3_i32_498 = arith.constant 3 : i32
      %506 = arith.addi %505, %c3_i32_498 : i32
      %c0_i32_499 = arith.constant 0 : i32
      %507 = arith.addi %c0_i32_499, %506 : i32
      %c0_500 = arith.constant 0 : index
      %508 = arith.index_cast %507 : i32 to index
      %c0_501 = arith.constant 0 : index
      %c1_502 = arith.constant 1 : index
      %509 = vector.load %arg2[%c0_500, %508, %c0_501, %c1_502] : memref<1x44x4x13xbf16, #tpu.memory_space<vmem>>, vector<1x1x4x8xbf16>
      %510 = vector.shape_cast %509 : vector<1x1x4x8xbf16> to vector<4x8xbf16>
      %c384 = arith.constant 384 : index
      %c0_503 = arith.constant 0 : index
      %511 = vector.load %arg6[%c384, %c0_503] : memref<664x8xbf16, #tpu.memory_space<vmem>>, vector<4x8xbf16>
      tpu.vector_store %arg6[%c384, %c0_503], %510 {strides = array<i32>} : memref<664x8xbf16, #tpu.memory_space<vmem>>, vector<4x8xbf16>,
      %c22_i32_504 = arith.constant 22 : i32
      %512 = arith.addi %c22_i32_504, %506 : i32
      %c0_505 = arith.constant 0 : index
      %513 = arith.index_cast %512 : i32 to index
      %c0_506 = arith.constant 0 : index
      %c1_507 = arith.constant 1 : index
      %514 = vector.load %arg2[%c0_505, %513, %c0_506, %c1_507] : memref<1x44x4x13xbf16, #tpu.memory_space<vmem>>, vector<1x1x4x8xbf16>
      %515 = vector.shape_cast %514 : vector<1x1x4x8xbf16> to vector<4x8xbf16>
      %c388 = arith.constant 388 : index
      %c0_508 = arith.constant 0 : index
      %516 = vector.load %arg6[%c388, %c0_508] : memref<664x8xbf16, #tpu.memory_space<vmem>>, vector<4x8xbf16>
      tpu.vector_store %arg6[%c388, %c0_508], %515 {strides = array<i32>} : memref<664x8xbf16, #tpu.memory_space<vmem>>, vector<4x8xbf16>,
      %c0_i32_509 = arith.constant 0 : i32
      %517 = arith.addi %c0_i32_509, %506 : i32
      %c0_510 = arith.constant 0 : index
      %518 = arith.index_cast %517 : i32 to index
      %c0_511 = arith.constant 0 : index
      %c2_512 = arith.constant 2 : index
      %519 = vector.load %arg2[%c0_510, %518, %c0_511, %c2_512] : memref<1x44x4x13xbf16, #tpu.memory_space<vmem>>, vector<1x1x4x8xbf16>
      %520 = vector.shape_cast %519 : vector<1x1x4x8xbf16> to vector<4x8xbf16>
      %c392 = arith.constant 392 : index
      %c0_513 = arith.constant 0 : index
      %521 = vector.load %arg6[%c392, %c0_513] : memref<664x8xbf16, #tpu.memory_space<vmem>>, vector<4x8xbf16>
      tpu.vector_store %arg6[%c392, %c0_513], %520 {strides = array<i32>} : memref<664x8xbf16, #tpu.memory_space<vmem>>, vector<4x8xbf16>,
      %c22_i32_514 = arith.constant 22 : i32
      %522 = arith.addi %c22_i32_514, %506 : i32
      %c0_515 = arith.constant 0 : index
      %523 = arith.index_cast %522 : i32 to index
      %c0_516 = arith.constant 0 : index
      %c2_517 = arith.constant 2 : index
      %524 = vector.load %arg2[%c0_515, %523, %c0_516, %c2_517] : memref<1x44x4x13xbf16, #tpu.memory_space<vmem>>, vector<1x1x4x8xbf16>
      %525 = vector.shape_cast %524 : vector<1x1x4x8xbf16> to vector<4x8xbf16>
      %c396 = arith.constant 396 : index
      %c0_518 = arith.constant 0 : index
      %526 = vector.load %arg6[%c396, %c0_518] : memref<664x8xbf16, #tpu.memory_space<vmem>>, vector<4x8xbf16>
      tpu.vector_store %arg6[%c396, %c0_518], %525 {strides = array<i32>} : memref<664x8xbf16, #tpu.memory_space<vmem>>, vector<4x8xbf16>,
      %c0_i32_519 = arith.constant 0 : i32
      %527 = arith.addi %c0_i32_519, %506 : i32
      %c0_520 = arith.constant 0 : index
      %528 = arith.index_cast %527 : i32 to index
      %c0_521 = arith.constant 0 : index
      %c3_522 = arith.constant 3 : index
      %529 = vector.load %arg2[%c0_520, %528, %c0_521, %c3_522] : memref<1x44x4x13xbf16, #tpu.memory_space<vmem>>, vector<1x1x4x8xbf16>
      %530 = vector.shape_cast %529 : vector<1x1x4x8xbf16> to vector<4x8xbf16>
      %c400 = arith.constant 400 : index
      %c0_523 = arith.constant 0 : index
      %531 = vector.load %arg6[%c400, %c0_523] : memref<664x8xbf16, #tpu.memory_space<vmem>>, vector<4x8xbf16>
      tpu.vector_store %arg6[%c400, %c0_523], %530 {strides = array<i32>} : memref<664x8xbf16, #tpu.memory_space<vmem>>, vector<4x8xbf16>,
      %c22_i32_524 = arith.constant 22 : i32
      %532 = arith.addi %c22_i32_524, %506 : i32
      %c0_525 = arith.constant 0 : index
      %533 = arith.index_cast %532 : i32 to index
      %c0_526 = arith.constant 0 : index
      %c3_527 = arith.constant 3 : index
      %534 = vector.load %arg2[%c0_525, %533, %c0_526, %c3_527] : memref<1x44x4x13xbf16, #tpu.memory_space<vmem>>, vector<1x1x4x8xbf16>
      %535 = vector.shape_cast %534 : vector<1x1x4x8xbf16> to vector<4x8xbf16>
      %c404 = arith.constant 404 : index
      %c0_528 = arith.constant 0 : index
      %536 = vector.load %arg6[%c404, %c0_528] : memref<664x8xbf16, #tpu.memory_space<vmem>>, vector<4x8xbf16>
      tpu.vector_store %arg6[%c404, %c0_528], %535 {strides = array<i32>} : memref<664x8xbf16, #tpu.memory_space<vmem>>, vector<4x8xbf16>,
      %c0_i32_529 = arith.constant 0 : i32
      %537 = arith.addi %c0_i32_529, %506 : i32
      %c0_530 = arith.constant 0 : index
      %538 = arith.index_cast %537 : i32 to index
      %c0_531 = arith.constant 0 : index
      %c4_532 = arith.constant 4 : index
      %539 = vector.load %arg2[%c0_530, %538, %c0_531, %c4_532] : memref<1x44x4x13xbf16, #tpu.memory_space<vmem>>, vector<1x1x4x8xbf16>
      %540 = vector.shape_cast %539 : vector<1x1x4x8xbf16> to vector<4x8xbf16>
      %c408 = arith.constant 408 : index
      %c0_533 = arith.constant 0 : index
      %541 = vector.load %arg6[%c408, %c0_533] : memref<664x8xbf16, #tpu.memory_space<vmem>>, vector<4x8xbf16>
      tpu.vector_store %arg6[%c408, %c0_533], %540 {strides = array<i32>} : memref<664x8xbf16, #tpu.memory_space<vmem>>, vector<4x8xbf16>,
      %c2_i32_534 = arith.constant 2 : i32
      %542 = arith.muli %c2_i32_534, %4 : i32
      %c4_i32_535 = arith.constant 4 : i32
      %543 = arith.addi %542, %c4_i32_535 : i32
      %c0_i32_536 = arith.constant 0 : i32
      %544 = arith.addi %c0_i32_536, %543 : i32
      %c0_537 = arith.constant 0 : index
      %545 = arith.index_cast %544 : i32 to index
      %c0_538 = arith.constant 0 : index
      %c1_539 = arith.constant 1 : index
      %546 = vector.load %arg2[%c0_537, %545, %c0_538, %c1_539] : memref<1x44x4x13xbf16, #tpu.memory_space<vmem>>, vector<1x1x4x8xbf16>
      %547 = vector.shape_cast %546 : vector<1x1x4x8xbf16> to vector<4x8xbf16>
      %c412 = arith.constant 412 : index
      %c0_540 = arith.constant 0 : index
      %548 = vector.load %arg6[%c412, %c0_540] : memref<664x8xbf16, #tpu.memory_space<vmem>>, vector<4x8xbf16>
      tpu.vector_store %arg6[%c412, %c0_540], %547 {strides = array<i32>} : memref<664x8xbf16, #tpu.memory_space<vmem>>, vector<4x8xbf16>,
      %c22_i32_541 = arith.constant 22 : i32
      %549 = arith.addi %c22_i32_541, %543 : i32
      %c0_542 = arith.constant 0 : index
      %550 = arith.index_cast %549 : i32 to index
      %c0_543 = arith.constant 0 : index
      %c1_544 = arith.constant 1 : index
      %551 = vector.load %arg2[%c0_542, %550, %c0_543, %c1_544] : memref<1x44x4x13xbf16, #tpu.memory_space<vmem>>, vector<1x1x4x8xbf16>
      %552 = vector.shape_cast %551 : vector<1x1x4x8xbf16> to vector<4x8xbf16>
      %c416 = arith.constant 416 : index
      %c0_545 = arith.constant 0 : index
      %553 = vector.load %arg6[%c416, %c0_545] : memref<664x8xbf16, #tpu.memory_space<vmem>>, vector<4x8xbf16>
      tpu.vector_store %arg6[%c416, %c0_545], %552 {strides = array<i32>} : memref<664x8xbf16, #tpu.memory_space<vmem>>, vector<4x8xbf16>,
      %c0_i32_546 = arith.constant 0 : i32
      %554 = arith.addi %c0_i32_546, %543 : i32
      %c0_547 = arith.constant 0 : index
      %555 = arith.index_cast %554 : i32 to index
      %c0_548 = arith.constant 0 : index
      %c2_549 = arith.constant 2 : index
      %556 = vector.load %arg2[%c0_547, %555, %c0_548, %c2_549] : memref<1x44x4x13xbf16, #tpu.memory_space<vmem>>, vector<1x1x4x8xbf16>
      %557 = vector.shape_cast %556 : vector<1x1x4x8xbf16> to vector<4x8xbf16>
      %c420 = arith.constant 420 : index
      %c0_550 = arith.constant 0 : index
      %558 = vector.load %arg6[%c420, %c0_550] : memref<664x8xbf16, #tpu.memory_space<vmem>>, vector<4x8xbf16>
      tpu.vector_store %arg6[%c420, %c0_550], %557 {strides = array<i32>} : memref<664x8xbf16, #tpu.memory_space<vmem>>, vector<4x8xbf16>,
      %c22_i32_551 = arith.constant 22 : i32
      %559 = arith.addi %c22_i32_551, %543 : i32
      %c0_552 = arith.constant 0 : index
      %560 = arith.index_cast %559 : i32 to index
      %c0_553 = arith.constant 0 : index
      %c2_554 = arith.constant 2 : index
      %561 = vector.load %arg2[%c0_552, %560, %c0_553, %c2_554] : memref<1x44x4x13xbf16, #tpu.memory_space<vmem>>, vector<1x1x4x8xbf16>
      %562 = vector.shape_cast %561 : vector<1x1x4x8xbf16> to vector<4x8xbf16>
      %c424 = arith.constant 424 : index
      %c0_555 = arith.constant 0 : index
      %563 = vector.load %arg6[%c424, %c0_555] : memref<664x8xbf16, #tpu.memory_space<vmem>>, vector<4x8xbf16>
      tpu.vector_store %arg6[%c424, %c0_555], %562 {strides = array<i32>} : memref<664x8xbf16, #tpu.memory_space<vmem>>, vector<4x8xbf16>,
      %c0_i32_556 = arith.constant 0 : i32
      %564 = arith.addi %c0_i32_556, %543 : i32
      %c0_557 = arith.constant 0 : index
      %565 = arith.index_cast %564 : i32 to index
      %c0_558 = arith.constant 0 : index
      %c3_559 = arith.constant 3 : index
      %566 = vector.load %arg2[%c0_557, %565, %c0_558, %c3_559] : memref<1x44x4x13xbf16, #tpu.memory_space<vmem>>, vector<1x1x4x8xbf16>
      %567 = vector.shape_cast %566 : vector<1x1x4x8xbf16> to vector<4x8xbf16>
      %c428 = arith.constant 428 : index
      %c0_560 = arith.constant 0 : index
      %568 = vector.load %arg6[%c428, %c0_560] : memref<664x8xbf16, #tpu.memory_space<vmem>>, vector<4x8xbf16>
      tpu.vector_store %arg6[%c428, %c0_560], %567 {strides = array<i32>} : memref<664x8xbf16, #tpu.memory_space<vmem>>, vector<4x8xbf16>,
      %c22_i32_561 = arith.constant 22 : i32
      %569 = arith.addi %c22_i32_561, %543 : i32
      %c0_562 = arith.constant 0 : index
      %570 = arith.index_cast %569 : i32 to index
      %c0_563 = arith.constant 0 : index
      %c3_564 = arith.constant 3 : index
      %571 = vector.load %arg2[%c0_562, %570, %c0_563, %c3_564] : memref<1x44x4x13xbf16, #tpu.memory_space<vmem>>, vector<1x1x4x8xbf16>
      %572 = vector.shape_cast %571 : vector<1x1x4x8xbf16> to vector<4x8xbf16>
      %c432 = arith.constant 432 : index
      %c0_565 = arith.constant 0 : index
      %573 = vector.load %arg6[%c432, %c0_565] : memref<664x8xbf16, #tpu.memory_space<vmem>>, vector<4x8xbf16>
      tpu.vector_store %arg6[%c432, %c0_565], %572 {strides = array<i32>} : memref<664x8xbf16, #tpu.memory_space<vmem>>, vector<4x8xbf16>,
      %c0_i32_566 = arith.constant 0 : i32
      %574 = arith.addi %c0_i32_566, %543 : i32
      %c0_567 = arith.constant 0 : index
      %575 = arith.index_cast %574 : i32 to index
      %c0_568 = arith.constant 0 : index
      %c4_569 = arith.constant 4 : index
      %576 = vector.load %arg2[%c0_567, %575, %c0_568, %c4_569] : memref<1x44x4x13xbf16, #tpu.memory_space<vmem>>, vector<1x1x4x8xbf16>
      %577 = vector.shape_cast %576 : vector<1x1x4x8xbf16> to vector<4x8xbf16>
      %c436 = arith.constant 436 : index
      %c0_570 = arith.constant 0 : index
      %578 = vector.load %arg6[%c436, %c0_570] : memref<664x8xbf16, #tpu.memory_space<vmem>>, vector<4x8xbf16>
      tpu.vector_store %arg6[%c436, %c0_570], %577 {strides = array<i32>} : memref<664x8xbf16, #tpu.memory_space<vmem>>, vector<4x8xbf16>,
      %c2_i32_571 = arith.constant 2 : i32
      %579 = arith.muli %c2_i32_571, %4 : i32
      %c5_i32_572 = arith.constant 5 : i32
      %580 = arith.addi %579, %c5_i32_572 : i32
      %c0_i32_573 = arith.constant 0 : i32
      %581 = arith.addi %c0_i32_573, %580 : i32
      %c0_574 = arith.constant 0 : index
      %582 = arith.index_cast %581 : i32 to index
      %c0_575 = arith.constant 0 : index
      %c1_576 = arith.constant 1 : index
      %583 = vector.load %arg2[%c0_574, %582, %c0_575, %c1_576] : memref<1x44x4x13xbf16, #tpu.memory_space<vmem>>, vector<1x1x4x8xbf16>
      %584 = vector.shape_cast %583 : vector<1x1x4x8xbf16> to vector<4x8xbf16>
      %c440 = arith.constant 440 : index
      %c0_577 = arith.constant 0 : index
      %585 = vector.load %arg6[%c440, %c0_577] : memref<664x8xbf16, #tpu.memory_space<vmem>>, vector<4x8xbf16>
      tpu.vector_store %arg6[%c440, %c0_577], %584 {strides = array<i32>} : memref<664x8xbf16, #tpu.memory_space<vmem>>, vector<4x8xbf16>,
      %c22_i32_578 = arith.constant 22 : i32
      %586 = arith.addi %c22_i32_578, %580 : i32
      %c0_579 = arith.constant 0 : index
      %587 = arith.index_cast %586 : i32 to index
      %c0_580 = arith.constant 0 : index
      %c1_581 = arith.constant 1 : index
      %588 = vector.load %arg2[%c0_579, %587, %c0_580, %c1_581] : memref<1x44x4x13xbf16, #tpu.memory_space<vmem>>, vector<1x1x4x8xbf16>
      %589 = vector.shape_cast %588 : vector<1x1x4x8xbf16> to vector<4x8xbf16>
      %c444 = arith.constant 444 : index
      %c0_582 = arith.constant 0 : index
      %590 = vector.load %arg6[%c444, %c0_582] : memref<664x8xbf16, #tpu.memory_space<vmem>>, vector<4x8xbf16>
      tpu.vector_store %arg6[%c444, %c0_582], %589 {strides = array<i32>} : memref<664x8xbf16, #tpu.memory_space<vmem>>, vector<4x8xbf16>,
      %c0_i32_583 = arith.constant 0 : i32
      %591 = arith.addi %c0_i32_583, %580 : i32
      %c0_584 = arith.constant 0 : index
      %592 = arith.index_cast %591 : i32 to index
      %c0_585 = arith.constant 0 : index
      %c2_586 = arith.constant 2 : index
      %593 = vector.load %arg2[%c0_584, %592, %c0_585, %c2_586] : memref<1x44x4x13xbf16, #tpu.memory_space<vmem>>, vector<1x1x4x8xbf16>
      %594 = vector.shape_cast %593 : vector<1x1x4x8xbf16> to vector<4x8xbf16>
      %c448 = arith.constant 448 : index
      %c0_587 = arith.constant 0 : index
      %595 = vector.load %arg6[%c448, %c0_587] : memref<664x8xbf16, #tpu.memory_space<vmem>>, vector<4x8xbf16>
      tpu.vector_store %arg6[%c448, %c0_587], %594 {strides = array<i32>} : memref<664x8xbf16, #tpu.memory_space<vmem>>, vector<4x8xbf16>,
      %c22_i32_588 = arith.constant 22 : i32
      %596 = arith.addi %c22_i32_588, %580 : i32
      %c0_589 = arith.constant 0 : index
      %597 = arith.index_cast %596 : i32 to index
      %c0_590 = arith.constant 0 : index
      %c2_591 = arith.constant 2 : index
      %598 = vector.load %arg2[%c0_589, %597, %c0_590, %c2_591] : memref<1x44x4x13xbf16, #tpu.memory_space<vmem>>, vector<1x1x4x8xbf16>
      %599 = vector.shape_cast %598 : vector<1x1x4x8xbf16> to vector<4x8xbf16>
      %c452 = arith.constant 452 : index
      %c0_592 = arith.constant 0 : index
      %600 = vector.load %arg6[%c452, %c0_592] : memref<664x8xbf16, #tpu.memory_space<vmem>>, vector<4x8xbf16>
      tpu.vector_store %arg6[%c452, %c0_592], %599 {strides = array<i32>} : memref<664x8xbf16, #tpu.memory_space<vmem>>, vector<4x8xbf16>,
      %c0_i32_593 = arith.constant 0 : i32
      %601 = arith.addi %c0_i32_593, %580 : i32
      %c0_594 = arith.constant 0 : index
      %602 = arith.index_cast %601 : i32 to index
      %c0_595 = arith.constant 0 : index
      %c3_596 = arith.constant 3 : index
      %603 = vector.load %arg2[%c0_594, %602, %c0_595, %c3_596] : memref<1x44x4x13xbf16, #tpu.memory_space<vmem>>, vector<1x1x4x8xbf16>
      %604 = vector.shape_cast %603 : vector<1x1x4x8xbf16> to vector<4x8xbf16>
      %c456 = arith.constant 456 : index
      %c0_597 = arith.constant 0 : index
      %605 = vector.load %arg6[%c456, %c0_597] : memref<664x8xbf16, #tpu.memory_space<vmem>>, vector<4x8xbf16>
      tpu.vector_store %arg6[%c456, %c0_597], %604 {strides = array<i32>} : memref<664x8xbf16, #tpu.memory_space<vmem>>, vector<4x8xbf16>,
      %c22_i32_598 = arith.constant 22 : i32
      %606 = arith.addi %c22_i32_598, %580 : i32
      %c0_599 = arith.constant 0 : index
      %607 = arith.index_cast %606 : i32 to index
      %c0_600 = arith.constant 0 : index
      %c3_601 = arith.constant 3 : index
      %608 = vector.load %arg2[%c0_599, %607, %c0_600, %c3_601] : memref<1x44x4x13xbf16, #tpu.memory_space<vmem>>, vector<1x1x4x8xbf16>
      %609 = vector.shape_cast %608 : vector<1x1x4x8xbf16> to vector<4x8xbf16>
      %c460 = arith.constant 460 : index
      %c0_602 = arith.constant 0 : index
      %610 = vector.load %arg6[%c460, %c0_602] : memref<664x8xbf16, #tpu.memory_space<vmem>>, vector<4x8xbf16>
      tpu.vector_store %arg6[%c460, %c0_602], %609 {strides = array<i32>} : memref<664x8xbf16, #tpu.memory_space<vmem>>, vector<4x8xbf16>,
      %c0_i32_603 = arith.constant 0 : i32
      %611 = arith.addi %c0_i32_603, %580 : i32
      %c0_604 = arith.constant 0 : index
      %612 = arith.index_cast %611 : i32 to index
      %c0_605 = arith.constant 0 : index
      %c4_606 = arith.constant 4 : index
      %613 = vector.load %arg2[%c0_604, %612, %c0_605, %c4_606] : memref<1x44x4x13xbf16, #tpu.memory_space<vmem>>, vector<1x1x4x8xbf16>
      %614 = vector.shape_cast %613 : vector<1x1x4x8xbf16> to vector<4x8xbf16>
      %c464 = arith.constant 464 : index
      %c0_607 = arith.constant 0 : index
      %615 = vector.load %arg6[%c464, %c0_607] : memref<664x8xbf16, #tpu.memory_space<vmem>>, vector<4x8xbf16>
      tpu.vector_store %arg6[%c464, %c0_607], %614 {strides = array<i32>} : memref<664x8xbf16, #tpu.memory_space<vmem>>, vector<4x8xbf16>,
      %c2_i32_608 = arith.constant 2 : i32
      %616 = arith.muli %c2_i32_608, %4 : i32
      %c0_i32_609 = arith.constant 0 : i32
      %617 = arith.addi %616, %c0_i32_609 : i32
      %c0_i32_610 = arith.constant 0 : i32
      %618 = arith.addi %c0_i32_610, %617 : i32
      %c0_611 = arith.constant 0 : index
      %619 = arith.index_cast %618 : i32 to index
      %c0_612 = arith.constant 0 : index
      %c1_613 = arith.constant 1 : index
      %620 = vector.load %arg2[%c0_611, %619, %c0_612, %c1_613] : memref<1x44x4x13xbf16, #tpu.memory_space<vmem>>, vector<1x1x4x8xbf16>
      %621 = vector.shape_cast %620 : vector<1x1x4x8xbf16> to vector<4x8xbf16>
      %c468 = arith.constant 468 : index
      %c0_614 = arith.constant 0 : index
      %622 = vector.load %arg6[%c468, %c0_614] : memref<664x8xbf16, #tpu.memory_space<vmem>>, vector<4x8xbf16>
      tpu.vector_store %arg6[%c468, %c0_614], %621 {strides = array<i32>} : memref<664x8xbf16, #tpu.memory_space<vmem>>, vector<4x8xbf16>,
      %c22_i32_615 = arith.constant 22 : i32
      %623 = arith.addi %c22_i32_615, %617 : i32
      %c0_616 = arith.constant 0 : index
      %624 = arith.index_cast %623 : i32 to index
      %c0_617 = arith.constant 0 : index
      %c1_618 = arith.constant 1 : index
      %625 = vector.load %arg2[%c0_616, %624, %c0_617, %c1_618] : memref<1x44x4x13xbf16, #tpu.memory_space<vmem>>, vector<1x1x4x8xbf16>
      %626 = vector.shape_cast %625 : vector<1x1x4x8xbf16> to vector<4x8xbf16>
      %c472 = arith.constant 472 : index
      %c0_619 = arith.constant 0 : index
      %627 = vector.load %arg6[%c472, %c0_619] : memref<664x8xbf16, #tpu.memory_space<vmem>>, vector<4x8xbf16>
      tpu.vector_store %arg6[%c472, %c0_619], %626 {strides = array<i32>} : memref<664x8xbf16, #tpu.memory_space<vmem>>, vector<4x8xbf16>,
      %c0_i32_620 = arith.constant 0 : i32
      %628 = arith.addi %c0_i32_620, %617 : i32
      %c0_621 = arith.constant 0 : index
      %629 = arith.index_cast %628 : i32 to index
      %c0_622 = arith.constant 0 : index
      %c2_623 = arith.constant 2 : index
      %630 = vector.load %arg2[%c0_621, %629, %c0_622, %c2_623] : memref<1x44x4x13xbf16, #tpu.memory_space<vmem>>, vector<1x1x4x8xbf16>
      %631 = vector.shape_cast %630 : vector<1x1x4x8xbf16> to vector<4x8xbf16>
      %c476 = arith.constant 476 : index
      %c0_624 = arith.constant 0 : index
      %632 = vector.load %arg6[%c476, %c0_624] : memref<664x8xbf16, #tpu.memory_space<vmem>>, vector<4x8xbf16>
      tpu.vector_store %arg6[%c476, %c0_624], %631 {strides = array<i32>} : memref<664x8xbf16, #tpu.memory_space<vmem>>, vector<4x8xbf16>,
      %c22_i32_625 = arith.constant 22 : i32
      %633 = arith.addi %c22_i32_625, %617 : i32
      %c0_626 = arith.constant 0 : index
      %634 = arith.index_cast %633 : i32 to index
      %c0_627 = arith.constant 0 : index
      %c2_628 = arith.constant 2 : index
      %635 = vector.load %arg2[%c0_626, %634, %c0_627, %c2_628] : memref<1x44x4x13xbf16, #tpu.memory_space<vmem>>, vector<1x1x4x8xbf16>
      %636 = vector.shape_cast %635 : vector<1x1x4x8xbf16> to vector<4x8xbf16>
      %c480 = arith.constant 480 : index
      %c0_629 = arith.constant 0 : index
      %637 = vector.load %arg6[%c480, %c0_629] : memref<664x8xbf16, #tpu.memory_space<vmem>>, vector<4x8xbf16>
      tpu.vector_store %arg6[%c480, %c0_629], %636 {strides = array<i32>} : memref<664x8xbf16, #tpu.memory_space<vmem>>, vector<4x8xbf16>,
      %c0_i32_630 = arith.constant 0 : i32
      %638 = arith.addi %c0_i32_630, %617 : i32
      %c0_631 = arith.constant 0 : index
      %639 = arith.index_cast %638 : i32 to index
      %c0_632 = arith.constant 0 : index
      %c3_633 = arith.constant 3 : index
      %640 = vector.load %arg2[%c0_631, %639, %c0_632, %c3_633] : memref<1x44x4x13xbf16, #tpu.memory_space<vmem>>, vector<1x1x4x8xbf16>
      %641 = vector.shape_cast %640 : vector<1x1x4x8xbf16> to vector<4x8xbf16>
      %c484 = arith.constant 484 : index
      %c0_634 = arith.constant 0 : index
      %642 = vector.load %arg6[%c484, %c0_634] : memref<664x8xbf16, #tpu.memory_space<vmem>>, vector<4x8xbf16>
      tpu.vector_store %arg6[%c484, %c0_634], %641 {strides = array<i32>} : memref<664x8xbf16, #tpu.memory_space<vmem>>, vector<4x8xbf16>,
      %c22_i32_635 = arith.constant 22 : i32
      %643 = arith.addi %c22_i32_635, %617 : i32
      %c0_636 = arith.constant 0 : index
      %644 = arith.index_cast %643 : i32 to index
      %c0_637 = arith.constant 0 : index
      %c3_638 = arith.constant 3 : index
      %645 = vector.load %arg2[%c0_636, %644, %c0_637, %c3_638] : memref<1x44x4x13xbf16, #tpu.memory_space<vmem>>, vector<1x1x4x8xbf16>
      %646 = vector.shape_cast %645 : vector<1x1x4x8xbf16> to vector<4x8xbf16>
      %c488 = arith.constant 488 : index
      %c0_639 = arith.constant 0 : index
      %647 = vector.load %arg6[%c488, %c0_639] : memref<664x8xbf16, #tpu.memory_space<vmem>>, vector<4x8xbf16>
      tpu.vector_store %arg6[%c488, %c0_639], %646 {strides = array<i32>} : memref<664x8xbf16, #tpu.memory_space<vmem>>, vector<4x8xbf16>,
      %c0_i32_640 = arith.constant 0 : i32
      %648 = arith.addi %c0_i32_640, %617 : i32
      %c0_641 = arith.constant 0 : index
      %649 = arith.index_cast %648 : i32 to index
      %c0_642 = arith.constant 0 : index
      %c4_643 = arith.constant 4 : index
      %650 = vector.load %arg2[%c0_641, %649, %c0_642, %c4_643] : memref<1x44x4x13xbf16, #tpu.memory_space<vmem>>, vector<1x1x4x8xbf16>
      %651 = vector.shape_cast %650 : vector<1x1x4x8xbf16> to vector<4x8xbf16>
      %c492 = arith.constant 492 : index
      %c0_644 = arith.constant 0 : index
      %652 = vector.load %arg6[%c492, %c0_644] : memref<664x8xbf16, #tpu.memory_space<vmem>>, vector<4x8xbf16>
      tpu.vector_store %arg6[%c492, %c0_644], %651 {strides = array<i32>} : memref<664x8xbf16, #tpu.memory_space<vmem>>, vector<4x8xbf16>,
      %c2_i32_645 = arith.constant 2 : i32
      %653 = arith.muli %c2_i32_645, %4 : i32
      %c1_i32_646 = arith.constant 1 : i32
      %654 = arith.addi %653, %c1_i32_646 : i32
      %c0_i32_647 = arith.constant 0 : i32
      %655 = arith.addi %c0_i32_647, %654 : i32
      %c0_648 = arith.constant 0 : index
      %656 = arith.index_cast %655 : i32 to index
      %c0_649 = arith.constant 0 : index
      %c1_650 = arith.constant 1 : index
      %657 = vector.load %arg2[%c0_648, %656, %c0_649, %c1_650] : memref<1x44x4x13xbf16, #tpu.memory_space<vmem>>, vector<1x1x4x8xbf16>
      %658 = vector.shape_cast %657 : vector<1x1x4x8xbf16> to vector<4x8xbf16>
      %c496 = arith.constant 496 : index
      %c0_651 = arith.constant 0 : index
      %659 = vector.load %arg6[%c496, %c0_651] : memref<664x8xbf16, #tpu.memory_space<vmem>>, vector<4x8xbf16>
      tpu.vector_store %arg6[%c496, %c0_651], %658 {strides = array<i32>} : memref<664x8xbf16, #tpu.memory_space<vmem>>, vector<4x8xbf16>,
      %c22_i32_652 = arith.constant 22 : i32
      %660 = arith.addi %c22_i32_652, %654 : i32
      %c0_653 = arith.constant 0 : index
      %661 = arith.index_cast %660 : i32 to index
      %c0_654 = arith.constant 0 : index
      %c1_655 = arith.constant 1 : index
      %662 = vector.load %arg2[%c0_653, %661, %c0_654, %c1_655] : memref<1x44x4x13xbf16, #tpu.memory_space<vmem>>, vector<1x1x4x8xbf16>
      %663 = vector.shape_cast %662 : vector<1x1x4x8xbf16> to vector<4x8xbf16>
      %c500 = arith.constant 500 : index
      %c0_656 = arith.constant 0 : index
      %664 = vector.load %arg6[%c500, %c0_656] : memref<664x8xbf16, #tpu.memory_space<vmem>>, vector<4x8xbf16>
      tpu.vector_store %arg6[%c500, %c0_656], %663 {strides = array<i32>} : memref<664x8xbf16, #tpu.memory_space<vmem>>, vector<4x8xbf16>,
      %c0_i32_657 = arith.constant 0 : i32
      %665 = arith.addi %c0_i32_657, %654 : i32
      %c0_658 = arith.constant 0 : index
      %666 = arith.index_cast %665 : i32 to index
      %c0_659 = arith.constant 0 : index
      %c2_660 = arith.constant 2 : index
      %667 = vector.load %arg2[%c0_658, %666, %c0_659, %c2_660] : memref<1x44x4x13xbf16, #tpu.memory_space<vmem>>, vector<1x1x4x8xbf16>
      %668 = vector.shape_cast %667 : vector<1x1x4x8xbf16> to vector<4x8xbf16>
      %c504 = arith.constant 504 : index
      %c0_661 = arith.constant 0 : index
      %669 = vector.load %arg6[%c504, %c0_661] : memref<664x8xbf16, #tpu.memory_space<vmem>>, vector<4x8xbf16>
      tpu.vector_store %arg6[%c504, %c0_661], %668 {strides = array<i32>} : memref<664x8xbf16, #tpu.memory_space<vmem>>, vector<4x8xbf16>,
      %c22_i32_662 = arith.constant 22 : i32
      %670 = arith.addi %c22_i32_662, %654 : i32
      %c0_663 = arith.constant 0 : index
      %671 = arith.index_cast %670 : i32 to index
      %c0_664 = arith.constant 0 : index
      %c2_665 = arith.constant 2 : index
      %672 = vector.load %arg2[%c0_663, %671, %c0_664, %c2_665] : memref<1x44x4x13xbf16, #tpu.memory_space<vmem>>, vector<1x1x4x8xbf16>
      %673 = vector.shape_cast %672 : vector<1x1x4x8xbf16> to vector<4x8xbf16>
      %c508 = arith.constant 508 : index
      %c0_666 = arith.constant 0 : index
      %674 = vector.load %arg6[%c508, %c0_666] : memref<664x8xbf16, #tpu.memory_space<vmem>>, vector<4x8xbf16>
      tpu.vector_store %arg6[%c508, %c0_666], %673 {strides = array<i32>} : memref<664x8xbf16, #tpu.memory_space<vmem>>, vector<4x8xbf16>,
      %c0_i32_667 = arith.constant 0 : i32
      %675 = arith.addi %c0_i32_667, %654 : i32
      %c0_668 = arith.constant 0 : index
      %676 = arith.index_cast %675 : i32 to index
      %c0_669 = arith.constant 0 : index
      %c3_670 = arith.constant 3 : index
      %677 = vector.load %arg2[%c0_668, %676, %c0_669, %c3_670] : memref<1x44x4x13xbf16, #tpu.memory_space<vmem>>, vector<1x1x4x8xbf16>
      %678 = vector.shape_cast %677 : vector<1x1x4x8xbf16> to vector<4x8xbf16>
      %c512 = arith.constant 512 : index
      %c0_671 = arith.constant 0 : index
      %679 = vector.load %arg6[%c512, %c0_671] : memref<664x8xbf16, #tpu.memory_space<vmem>>, vector<4x8xbf16>
      tpu.vector_store %arg6[%c512, %c0_671], %678 {strides = array<i32>} : memref<664x8xbf16, #tpu.memory_space<vmem>>, vector<4x8xbf16>,
      %c22_i32_672 = arith.constant 22 : i32
      %680 = arith.addi %c22_i32_672, %654 : i32
      %c0_673 = arith.constant 0 : index
      %681 = arith.index_cast %680 : i32 to index
      %c0_674 = arith.constant 0 : index
      %c3_675 = arith.constant 3 : index
      %682 = vector.load %arg2[%c0_673, %681, %c0_674, %c3_675] : memref<1x44x4x13xbf16, #tpu.memory_space<vmem>>, vector<1x1x4x8xbf16>
      %683 = vector.shape_cast %682 : vector<1x1x4x8xbf16> to vector<4x8xbf16>
      %c516 = arith.constant 516 : index
      %c0_676 = arith.constant 0 : index
      %684 = vector.load %arg6[%c516, %c0_676] : memref<664x8xbf16, #tpu.memory_space<vmem>>, vector<4x8xbf16>
      tpu.vector_store %arg6[%c516, %c0_676], %683 {strides = array<i32>} : memref<664x8xbf16, #tpu.memory_space<vmem>>, vector<4x8xbf16>,
      %c0_i32_677 = arith.constant 0 : i32
      %685 = arith.addi %c0_i32_677, %654 : i32
      %c0_678 = arith.constant 0 : index
      %686 = arith.index_cast %685 : i32 to index
      %c0_679 = arith.constant 0 : index
      %c4_680 = arith.constant 4 : index
      %687 = vector.load %arg2[%c0_678, %686, %c0_679, %c4_680] : memref<1x44x4x13xbf16, #tpu.memory_space<vmem>>, vector<1x1x4x8xbf16>
      %688 = vector.shape_cast %687 : vector<1x1x4x8xbf16> to vector<4x8xbf16>
      %c520 = arith.constant 520 : index
      %c0_681 = arith.constant 0 : index
      %689 = vector.load %arg6[%c520, %c0_681] : memref<664x8xbf16, #tpu.memory_space<vmem>>, vector<4x8xbf16>
      tpu.vector_store %arg6[%c520, %c0_681], %688 {strides = array<i32>} : memref<664x8xbf16, #tpu.memory_space<vmem>>, vector<4x8xbf16>,
      %c2_i32_682 = arith.constant 2 : i32
      %690 = arith.muli %c2_i32_682, %4 : i32
      %c2_i32_683 = arith.constant 2 : i32
      %691 = arith.addi %690, %c2_i32_683 : i32
      %c0_i32_684 = arith.constant 0 : i32
      %692 = arith.addi %c0_i32_684, %691 : i32
      %c0_685 = arith.constant 0 : index
      %693 = arith.index_cast %692 : i32 to index
      %c0_686 = arith.constant 0 : index
      %c1_687 = arith.constant 1 : index
      %694 = vector.load %arg2[%c0_685, %693, %c0_686, %c1_687] : memref<1x44x4x13xbf16, #tpu.memory_space<vmem>>, vector<1x1x4x8xbf16>
      %695 = vector.shape_cast %694 : vector<1x1x4x8xbf16> to vector<4x8xbf16>
      %c524 = arith.constant 524 : index
      %c0_688 = arith.constant 0 : index
      %696 = vector.load %arg6[%c524, %c0_688] : memref<664x8xbf16, #tpu.memory_space<vmem>>, vector<4x8xbf16>
      tpu.vector_store %arg6[%c524, %c0_688], %695 {strides = array<i32>} : memref<664x8xbf16, #tpu.memory_space<vmem>>, vector<4x8xbf16>,
      %c22_i32_689 = arith.constant 22 : i32
      %697 = arith.addi %c22_i32_689, %691 : i32
      %c0_690 = arith.constant 0 : index
      %698 = arith.index_cast %697 : i32 to index
      %c0_691 = arith.constant 0 : index
      %c1_692 = arith.constant 1 : index
      %699 = vector.load %arg2[%c0_690, %698, %c0_691, %c1_692] : memref<1x44x4x13xbf16, #tpu.memory_space<vmem>>, vector<1x1x4x8xbf16>
      %700 = vector.shape_cast %699 : vector<1x1x4x8xbf16> to vector<4x8xbf16>
      %c528 = arith.constant 528 : index
      %c0_693 = arith.constant 0 : index
      %701 = vector.load %arg6[%c528, %c0_693] : memref<664x8xbf16, #tpu.memory_space<vmem>>, vector<4x8xbf16>
      tpu.vector_store %arg6[%c528, %c0_693], %700 {strides = array<i32>} : memref<664x8xbf16, #tpu.memory_space<vmem>>, vector<4x8xbf16>,
      %c0_i32_694 = arith.constant 0 : i32
      %702 = arith.addi %c0_i32_694, %691 : i32
      %c0_695 = arith.constant 0 : index
      %703 = arith.index_cast %702 : i32 to index
      %c0_696 = arith.constant 0 : index
      %c2_697 = arith.constant 2 : index
      %704 = vector.load %arg2[%c0_695, %703, %c0_696, %c2_697] : memref<1x44x4x13xbf16, #tpu.memory_space<vmem>>, vector<1x1x4x8xbf16>
      %705 = vector.shape_cast %704 : vector<1x1x4x8xbf16> to vector<4x8xbf16>
      %c532 = arith.constant 532 : index
      %c0_698 = arith.constant 0 : index
      %706 = vector.load %arg6[%c532, %c0_698] : memref<664x8xbf16, #tpu.memory_space<vmem>>, vector<4x8xbf16>
      tpu.vector_store %arg6[%c532, %c0_698], %705 {strides = array<i32>} : memref<664x8xbf16, #tpu.memory_space<vmem>>, vector<4x8xbf16>,
      %c22_i32_699 = arith.constant 22 : i32
      %707 = arith.addi %c22_i32_699, %691 : i32
      %c0_700 = arith.constant 0 : index
      %708 = arith.index_cast %707 : i32 to index
      %c0_701 = arith.constant 0 : index
      %c2_702 = arith.constant 2 : index
      %709 = vector.load %arg2[%c0_700, %708, %c0_701, %c2_702] : memref<1x44x4x13xbf16, #tpu.memory_space<vmem>>, vector<1x1x4x8xbf16>
      %710 = vector.shape_cast %709 : vector<1x1x4x8xbf16> to vector<4x8xbf16>
      %c536 = arith.constant 536 : index
      %c0_703 = arith.constant 0 : index
      %711 = vector.load %arg6[%c536, %c0_703] : memref<664x8xbf16, #tpu.memory_space<vmem>>, vector<4x8xbf16>
      tpu.vector_store %arg6[%c536, %c0_703], %710 {strides = array<i32>} : memref<664x8xbf16, #tpu.memory_space<vmem>>, vector<4x8xbf16>,
      %c0_i32_704 = arith.constant 0 : i32
      %712 = arith.addi %c0_i32_704, %691 : i32
      %c0_705 = arith.constant 0 : index
      %713 = arith.index_cast %712 : i32 to index
      %c0_706 = arith.constant 0 : index
      %c3_707 = arith.constant 3 : index
      %714 = vector.load %arg2[%c0_705, %713, %c0_706, %c3_707] : memref<1x44x4x13xbf16, #tpu.memory_space<vmem>>, vector<1x1x4x8xbf16>
      %715 = vector.shape_cast %714 : vector<1x1x4x8xbf16> to vector<4x8xbf16>
      %c540 = arith.constant 540 : index
      %c0_708 = arith.constant 0 : index
      %716 = vector.load %arg6[%c540, %c0_708] : memref<664x8xbf16, #tpu.memory_space<vmem>>, vector<4x8xbf16>
      tpu.vector_store %arg6[%c540, %c0_708], %715 {strides = array<i32>} : memref<664x8xbf16, #tpu.memory_space<vmem>>, vector<4x8xbf16>,
      %c22_i32_709 = arith.constant 22 : i32
      %717 = arith.addi %c22_i32_709, %691 : i32
      %c0_710 = arith.constant 0 : index
      %718 = arith.index_cast %717 : i32 to index
      %c0_711 = arith.constant 0 : index
      %c3_712 = arith.constant 3 : index
      %719 = vector.load %arg2[%c0_710, %718, %c0_711, %c3_712] : memref<1x44x4x13xbf16, #tpu.memory_space<vmem>>, vector<1x1x4x8xbf16>
      %720 = vector.shape_cast %719 : vector<1x1x4x8xbf16> to vector<4x8xbf16>
      %c544 = arith.constant 544 : index
      %c0_713 = arith.constant 0 : index
      %721 = vector.load %arg6[%c544, %c0_713] : memref<664x8xbf16, #tpu.memory_space<vmem>>, vector<4x8xbf16>
      tpu.vector_store %arg6[%c544, %c0_713], %720 {strides = array<i32>} : memref<664x8xbf16, #tpu.memory_space<vmem>>, vector<4x8xbf16>,
      %c0_i32_714 = arith.constant 0 : i32
      %722 = arith.addi %c0_i32_714, %691 : i32
      %c0_715 = arith.constant 0 : index
      %723 = arith.index_cast %722 : i32 to index
      %c0_716 = arith.constant 0 : index
      %c4_717 = arith.constant 4 : index
      %724 = vector.load %arg2[%c0_715, %723, %c0_716, %c4_717] : memref<1x44x4x13xbf16, #tpu.memory_space<vmem>>, vector<1x1x4x8xbf16>
      %725 = vector.shape_cast %724 : vector<1x1x4x8xbf16> to vector<4x8xbf16>
      %c548 = arith.constant 548 : index
      %c0_718 = arith.constant 0 : index
      %726 = vector.load %arg6[%c548, %c0_718] : memref<664x8xbf16, #tpu.memory_space<vmem>>, vector<4x8xbf16>
      tpu.vector_store %arg6[%c548, %c0_718], %725 {strides = array<i32>} : memref<664x8xbf16, #tpu.memory_space<vmem>>, vector<4x8xbf16>,
      %c2_i32_719 = arith.constant 2 : i32
      %727 = arith.muli %c2_i32_719, %4 : i32
      %c3_i32_720 = arith.constant 3 : i32
      %728 = arith.addi %727, %c3_i32_720 : i32
      %c0_i32_721 = arith.constant 0 : i32
      %729 = arith.addi %c0_i32_721, %728 : i32
      %c0_722 = arith.constant 0 : index
      %730 = arith.index_cast %729 : i32 to index
      %c0_723 = arith.constant 0 : index
      %c1_724 = arith.constant 1 : index
      %731 = vector.load %arg2[%c0_722, %730, %c0_723, %c1_724] : memref<1x44x4x13xbf16, #tpu.memory_space<vmem>>, vector<1x1x4x8xbf16>
      %732 = vector.shape_cast %731 : vector<1x1x4x8xbf16> to vector<4x8xbf16>
      %c552 = arith.constant 552 : index
      %c0_725 = arith.constant 0 : index
      %733 = vector.load %arg6[%c552, %c0_725] : memref<664x8xbf16, #tpu.memory_space<vmem>>, vector<4x8xbf16>
      tpu.vector_store %arg6[%c552, %c0_725], %732 {strides = array<i32>} : memref<664x8xbf16, #tpu.memory_space<vmem>>, vector<4x8xbf16>,
      %c22_i32_726 = arith.constant 22 : i32
      %734 = arith.addi %c22_i32_726, %728 : i32
      %c0_727 = arith.constant 0 : index
      %735 = arith.index_cast %734 : i32 to index
      %c0_728 = arith.constant 0 : index
      %c1_729 = arith.constant 1 : index
      %736 = vector.load %arg2[%c0_727, %735, %c0_728, %c1_729] : memref<1x44x4x13xbf16, #tpu.memory_space<vmem>>, vector<1x1x4x8xbf16>
      %737 = vector.shape_cast %736 : vector<1x1x4x8xbf16> to vector<4x8xbf16>
      %c556 = arith.constant 556 : index
      %c0_730 = arith.constant 0 : index
      %738 = vector.load %arg6[%c556, %c0_730] : memref<664x8xbf16, #tpu.memory_space<vmem>>, vector<4x8xbf16>
      tpu.vector_store %arg6[%c556, %c0_730], %737 {strides = array<i32>} : memref<664x8xbf16, #tpu.memory_space<vmem>>, vector<4x8xbf16>,
      %c0_i32_731 = arith.constant 0 : i32
      %739 = arith.addi %c0_i32_731, %728 : i32
      %c0_732 = arith.constant 0 : index
      %740 = arith.index_cast %739 : i32 to index
      %c0_733 = arith.constant 0 : index
      %c2_734 = arith.constant 2 : index
      %741 = vector.load %arg2[%c0_732, %740, %c0_733, %c2_734] : memref<1x44x4x13xbf16, #tpu.memory_space<vmem>>, vector<1x1x4x8xbf16>
      %742 = vector.shape_cast %741 : vector<1x1x4x8xbf16> to vector<4x8xbf16>
      %c560 = arith.constant 560 : index
      %c0_735 = arith.constant 0 : index
      %743 = vector.load %arg6[%c560, %c0_735] : memref<664x8xbf16, #tpu.memory_space<vmem>>, vector<4x8xbf16>
      tpu.vector_store %arg6[%c560, %c0_735], %742 {strides = array<i32>} : memref<664x8xbf16, #tpu.memory_space<vmem>>, vector<4x8xbf16>,
      %c22_i32_736 = arith.constant 22 : i32
      %744 = arith.addi %c22_i32_736, %728 : i32
      %c0_737 = arith.constant 0 : index
      %745 = arith.index_cast %744 : i32 to index
      %c0_738 = arith.constant 0 : index
      %c2_739 = arith.constant 2 : index
      %746 = vector.load %arg2[%c0_737, %745, %c0_738, %c2_739] : memref<1x44x4x13xbf16, #tpu.memory_space<vmem>>, vector<1x1x4x8xbf16>
      %747 = vector.shape_cast %746 : vector<1x1x4x8xbf16> to vector<4x8xbf16>
      %c564 = arith.constant 564 : index
      %c0_740 = arith.constant 0 : index
      %748 = vector.load %arg6[%c564, %c0_740] : memref<664x8xbf16, #tpu.memory_space<vmem>>, vector<4x8xbf16>
      tpu.vector_store %arg6[%c564, %c0_740], %747 {strides = array<i32>} : memref<664x8xbf16, #tpu.memory_space<vmem>>, vector<4x8xbf16>,
      %c0_i32_741 = arith.constant 0 : i32
      %749 = arith.addi %c0_i32_741, %728 : i32
      %c0_742 = arith.constant 0 : index
      %750 = arith.index_cast %749 : i32 to index
      %c0_743 = arith.constant 0 : index
      %c3_744 = arith.constant 3 : index
      %751 = vector.load %arg2[%c0_742, %750, %c0_743, %c3_744] : memref<1x44x4x13xbf16, #tpu.memory_space<vmem>>, vector<1x1x4x8xbf16>
      %752 = vector.shape_cast %751 : vector<1x1x4x8xbf16> to vector<4x8xbf16>
      %c568 = arith.constant 568 : index
      %c0_745 = arith.constant 0 : index
      %753 = vector.load %arg6[%c568, %c0_745] : memref<664x8xbf16, #tpu.memory_space<vmem>>, vector<4x8xbf16>
      tpu.vector_store %arg6[%c568, %c0_745], %752 {strides = array<i32>} : memref<664x8xbf16, #tpu.memory_space<vmem>>, vector<4x8xbf16>,
      %c22_i32_746 = arith.constant 22 : i32
      %754 = arith.addi %c22_i32_746, %728 : i32
      %c0_747 = arith.constant 0 : index
      %755 = arith.index_cast %754 : i32 to index
      %c0_748 = arith.constant 0 : index
      %c3_749 = arith.constant 3 : index
      %756 = vector.load %arg2[%c0_747, %755, %c0_748, %c3_749] : memref<1x44x4x13xbf16, #tpu.memory_space<vmem>>, vector<1x1x4x8xbf16>
      %757 = vector.shape_cast %756 : vector<1x1x4x8xbf16> to vector<4x8xbf16>
      %c572 = arith.constant 572 : index
      %c0_750 = arith.constant 0 : index
      %758 = vector.load %arg6[%c572, %c0_750] : memref<664x8xbf16, #tpu.memory_space<vmem>>, vector<4x8xbf16>
      tpu.vector_store %arg6[%c572, %c0_750], %757 {strides = array<i32>} : memref<664x8xbf16, #tpu.memory_space<vmem>>, vector<4x8xbf16>,
      %c0_i32_751 = arith.constant 0 : i32
      %759 = arith.addi %c0_i32_751, %728 : i32
      %c0_752 = arith.constant 0 : index
      %760 = arith.index_cast %759 : i32 to index
      %c0_753 = arith.constant 0 : index
      %c4_754 = arith.constant 4 : index
      %761 = vector.load %arg2[%c0_752, %760, %c0_753, %c4_754] : memref<1x44x4x13xbf16, #tpu.memory_space<vmem>>, vector<1x1x4x8xbf16>
      %762 = vector.shape_cast %761 : vector<1x1x4x8xbf16> to vector<4x8xbf16>
      %c576 = arith.constant 576 : index
      %c0_755 = arith.constant 0 : index
      %763 = vector.load %arg6[%c576, %c0_755] : memref<664x8xbf16, #tpu.memory_space<vmem>>, vector<4x8xbf16>
      tpu.vector_store %arg6[%c576, %c0_755], %762 {strides = array<i32>} : memref<664x8xbf16, #tpu.memory_space<vmem>>, vector<4x8xbf16>,
      %c2_i32_756 = arith.constant 2 : i32
      %764 = arith.muli %c2_i32_756, %4 : i32
      %c4_i32_757 = arith.constant 4 : i32
      %765 = arith.addi %764, %c4_i32_757 : i32
      %c0_i32_758 = arith.constant 0 : i32
      %766 = arith.addi %c0_i32_758, %765 : i32
      %c0_759 = arith.constant 0 : index
      %767 = arith.index_cast %766 : i32 to index
      %c0_760 = arith.constant 0 : index
      %c1_761 = arith.constant 1 : index
      %768 = vector.load %arg2[%c0_759, %767, %c0_760, %c1_761] : memref<1x44x4x13xbf16, #tpu.memory_space<vmem>>, vector<1x1x4x8xbf16>
      %769 = vector.shape_cast %768 : vector<1x1x4x8xbf16> to vector<4x8xbf16>
      %c580 = arith.constant 580 : index
      %c0_762 = arith.constant 0 : index
      %770 = vector.load %arg6[%c580, %c0_762] : memref<664x8xbf16, #tpu.memory_space<vmem>>, vector<4x8xbf16>
      tpu.vector_store %arg6[%c580, %c0_762], %769 {strides = array<i32>} : memref<664x8xbf16, #tpu.memory_space<vmem>>, vector<4x8xbf16>,
      %c22_i32_763 = arith.constant 22 : i32
      %771 = arith.addi %c22_i32_763, %765 : i32
      %c0_764 = arith.constant 0 : index
      %772 = arith.index_cast %771 : i32 to index
      %c0_765 = arith.constant 0 : index
      %c1_766 = arith.constant 1 : index
      %773 = vector.load %arg2[%c0_764, %772, %c0_765, %c1_766] : memref<1x44x4x13xbf16, #tpu.memory_space<vmem>>, vector<1x1x4x8xbf16>
      %774 = vector.shape_cast %773 : vector<1x1x4x8xbf16> to vector<4x8xbf16>
      %c584 = arith.constant 584 : index
      %c0_767 = arith.constant 0 : index
      %775 = vector.load %arg6[%c584, %c0_767] : memref<664x8xbf16, #tpu.memory_space<vmem>>, vector<4x8xbf16>
      tpu.vector_store %arg6[%c584, %c0_767], %774 {strides = array<i32>} : memref<664x8xbf16, #tpu.memory_space<vmem>>, vector<4x8xbf16>,
      %c0_i32_768 = arith.constant 0 : i32
      %776 = arith.addi %c0_i32_768, %765 : i32
      %c0_769 = arith.constant 0 : index
      %777 = arith.index_cast %776 : i32 to index
      %c0_770 = arith.constant 0 : index
      %c2_771 = arith.constant 2 : index
      %778 = vector.load %arg2[%c0_769, %777, %c0_770, %c2_771] : memref<1x44x4x13xbf16, #tpu.memory_space<vmem>>, vector<1x1x4x8xbf16>
      %779 = vector.shape_cast %778 : vector<1x1x4x8xbf16> to vector<4x8xbf16>
      %c588 = arith.constant 588 : index
      %c0_772 = arith.constant 0 : index
      %780 = vector.load %arg6[%c588, %c0_772] : memref<664x8xbf16, #tpu.memory_space<vmem>>, vector<4x8xbf16>
      tpu.vector_store %arg6[%c588, %c0_772], %779 {strides = array<i32>} : memref<664x8xbf16, #tpu.memory_space<vmem>>, vector<4x8xbf16>,
      %c22_i32_773 = arith.constant 22 : i32
      %781 = arith.addi %c22_i32_773, %765 : i32
      %c0_774 = arith.constant 0 : index
      %782 = arith.index_cast %781 : i32 to index
      %c0_775 = arith.constant 0 : index
      %c2_776 = arith.constant 2 : index
      %783 = vector.load %arg2[%c0_774, %782, %c0_775, %c2_776] : memref<1x44x4x13xbf16, #tpu.memory_space<vmem>>, vector<1x1x4x8xbf16>
      %784 = vector.shape_cast %783 : vector<1x1x4x8xbf16> to vector<4x8xbf16>
      %c592 = arith.constant 592 : index
      %c0_777 = arith.constant 0 : index
      %785 = vector.load %arg6[%c592, %c0_777] : memref<664x8xbf16, #tpu.memory_space<vmem>>, vector<4x8xbf16>
      tpu.vector_store %arg6[%c592, %c0_777], %784 {strides = array<i32>} : memref<664x8xbf16, #tpu.memory_space<vmem>>, vector<4x8xbf16>,
      %c0_i32_778 = arith.constant 0 : i32
      %786 = arith.addi %c0_i32_778, %765 : i32
      %c0_779 = arith.constant 0 : index
      %787 = arith.index_cast %786 : i32 to index
      %c0_780 = arith.constant 0 : index
      %c3_781 = arith.constant 3 : index
      %788 = vector.load %arg2[%c0_779, %787, %c0_780, %c3_781] : memref<1x44x4x13xbf16, #tpu.memory_space<vmem>>, vector<1x1x4x8xbf16>
      %789 = vector.shape_cast %788 : vector<1x1x4x8xbf16> to vector<4x8xbf16>
      %c596 = arith.constant 596 : index
      %c0_782 = arith.constant 0 : index
      %790 = vector.load %arg6[%c596, %c0_782] : memref<664x8xbf16, #tpu.memory_space<vmem>>, vector<4x8xbf16>
      tpu.vector_store %arg6[%c596, %c0_782], %789 {strides = array<i32>} : memref<664x8xbf16, #tpu.memory_space<vmem>>, vector<4x8xbf16>,
      %c22_i32_783 = arith.constant 22 : i32
      %791 = arith.addi %c22_i32_783, %765 : i32
      %c0_784 = arith.constant 0 : index
      %792 = arith.index_cast %791 : i32 to index
      %c0_785 = arith.constant 0 : index
      %c3_786 = arith.constant 3 : index
      %793 = vector.load %arg2[%c0_784, %792, %c0_785, %c3_786] : memref<1x44x4x13xbf16, #tpu.memory_space<vmem>>, vector<1x1x4x8xbf16>
      %794 = vector.shape_cast %793 : vector<1x1x4x8xbf16> to vector<4x8xbf16>
      %c600 = arith.constant 600 : index
      %c0_787 = arith.constant 0 : index
      %795 = vector.load %arg6[%c600, %c0_787] : memref<664x8xbf16, #tpu.memory_space<vmem>>, vector<4x8xbf16>
      tpu.vector_store %arg6[%c600, %c0_787], %794 {strides = array<i32>} : memref<664x8xbf16, #tpu.memory_space<vmem>>, vector<4x8xbf16>,
      %c0_i32_788 = arith.constant 0 : i32
      %796 = arith.addi %c0_i32_788, %765 : i32
      %c0_789 = arith.constant 0 : index
      %797 = arith.index_cast %796 : i32 to index
      %c0_790 = arith.constant 0 : index
      %c4_791 = arith.constant 4 : index
      %798 = vector.load %arg2[%c0_789, %797, %c0_790, %c4_791] : memref<1x44x4x13xbf16, #tpu.memory_space<vmem>>, vector<1x1x4x8xbf16>
      %799 = vector.shape_cast %798 : vector<1x1x4x8xbf16> to vector<4x8xbf16>
      %c604 = arith.constant 604 : index
      %c0_792 = arith.constant 0 : index
      %800 = vector.load %arg6[%c604, %c0_792] : memref<664x8xbf16, #tpu.memory_space<vmem>>, vector<4x8xbf16>
      tpu.vector_store %arg6[%c604, %c0_792], %799 {strides = array<i32>} : memref<664x8xbf16, #tpu.memory_space<vmem>>, vector<4x8xbf16>,
      %c2_i32_793 = arith.constant 2 : i32
      %801 = arith.muli %c2_i32_793, %4 : i32
      %c5_i32_794 = arith.constant 5 : i32
      %802 = arith.addi %801, %c5_i32_794 : i32
      %c0_i32_795 = arith.constant 0 : i32
      %803 = arith.addi %c0_i32_795, %802 : i32
      %c0_796 = arith.constant 0 : index
      %804 = arith.index_cast %803 : i32 to index
      %c0_797 = arith.constant 0 : index
      %c1_798 = arith.constant 1 : index
      %805 = vector.load %arg2[%c0_796, %804, %c0_797, %c1_798] : memref<1x44x4x13xbf16, #tpu.memory_space<vmem>>, vector<1x1x4x8xbf16>
      %806 = vector.shape_cast %805 : vector<1x1x4x8xbf16> to vector<4x8xbf16>
      %c608 = arith.constant 608 : index
      %c0_799 = arith.constant 0 : index
      %807 = vector.load %arg6[%c608, %c0_799] : memref<664x8xbf16, #tpu.memory_space<vmem>>, vector<4x8xbf16>
      tpu.vector_store %arg6[%c608, %c0_799], %806 {strides = array<i32>} : memref<664x8xbf16, #tpu.memory_space<vmem>>, vector<4x8xbf16>,
      %c22_i32_800 = arith.constant 22 : i32
      %808 = arith.addi %c22_i32_800, %802 : i32
      %c0_801 = arith.constant 0 : index
      %809 = arith.index_cast %808 : i32 to index
      %c0_802 = arith.constant 0 : index
      %c1_803 = arith.constant 1 : index
      %810 = vector.load %arg2[%c0_801, %809, %c0_802, %c1_803] : memref<1x44x4x13xbf16, #tpu.memory_space<vmem>>, vector<1x1x4x8xbf16>
      %811 = vector.shape_cast %810 : vector<1x1x4x8xbf16> to vector<4x8xbf16>
      %c612 = arith.constant 612 : index
      %c0_804 = arith.constant 0 : index
      %812 = vector.load %arg6[%c612, %c0_804] : memref<664x8xbf16, #tpu.memory_space<vmem>>, vector<4x8xbf16>
      tpu.vector_store %arg6[%c612, %c0_804], %811 {strides = array<i32>} : memref<664x8xbf16, #tpu.memory_space<vmem>>, vector<4x8xbf16>,
      %c0_i32_805 = arith.constant 0 : i32
      %813 = arith.addi %c0_i32_805, %802 : i32
      %c0_806 = arith.constant 0 : index
      %814 = arith.index_cast %813 : i32 to index
      %c0_807 = arith.constant 0 : index
      %c2_808 = arith.constant 2 : index
      %815 = vector.load %arg2[%c0_806, %814, %c0_807, %c2_808] : memref<1x44x4x13xbf16, #tpu.memory_space<vmem>>, vector<1x1x4x8xbf16>
      %816 = vector.shape_cast %815 : vector<1x1x4x8xbf16> to vector<4x8xbf16>
      %c616 = arith.constant 616 : index
      %c0_809 = arith.constant 0 : index
      %817 = vector.load %arg6[%c616, %c0_809] : memref<664x8xbf16, #tpu.memory_space<vmem>>, vector<4x8xbf16>
      tpu.vector_store %arg6[%c616, %c0_809], %816 {strides = array<i32>} : memref<664x8xbf16, #tpu.memory_space<vmem>>, vector<4x8xbf16>,
      %c22_i32_810 = arith.constant 22 : i32
      %818 = arith.addi %c22_i32_810, %802 : i32
      %c0_811 = arith.constant 0 : index
      %819 = arith.index_cast %818 : i32 to index
      %c0_812 = arith.constant 0 : index
      %c2_813 = arith.constant 2 : index
      %820 = vector.load %arg2[%c0_811, %819, %c0_812, %c2_813] : memref<1x44x4x13xbf16, #tpu.memory_space<vmem>>, vector<1x1x4x8xbf16>
      %821 = vector.shape_cast %820 : vector<1x1x4x8xbf16> to vector<4x8xbf16>
      %c620 = arith.constant 620 : index
      %c0_814 = arith.constant 0 : index
      %822 = vector.load %arg6[%c620, %c0_814] : memref<664x8xbf16, #tpu.memory_space<vmem>>, vector<4x8xbf16>
      tpu.vector_store %arg6[%c620, %c0_814], %821 {strides = array<i32>} : memref<664x8xbf16, #tpu.memory_space<vmem>>, vector<4x8xbf16>,
      %c0_i32_815 = arith.constant 0 : i32
      %823 = arith.addi %c0_i32_815, %802 : i32
      %c0_816 = arith.constant 0 : index
      %824 = arith.index_cast %823 : i32 to index
      %c0_817 = arith.constant 0 : index
      %c3_818 = arith.constant 3 : index
      %825 = vector.load %arg2[%c0_816, %824, %c0_817, %c3_818] : memref<1x44x4x13xbf16, #tpu.memory_space<vmem>>, vector<1x1x4x8xbf16>
      %826 = vector.shape_cast %825 : vector<1x1x4x8xbf16> to vector<4x8xbf16>
      %c624 = arith.constant 624 : index
      %c0_819 = arith.constant 0 : index
      %827 = vector.load %arg6[%c624, %c0_819] : memref<664x8xbf16, #tpu.memory_space<vmem>>, vector<4x8xbf16>
      tpu.vector_store %arg6[%c624, %c0_819], %826 {strides = array<i32>} : memref<664x8xbf16, #tpu.memory_space<vmem>>, vector<4x8xbf16>,
      %c22_i32_820 = arith.constant 22 : i32
      %828 = arith.addi %c22_i32_820, %802 : i32
      %c0_821 = arith.constant 0 : index
      %829 = arith.index_cast %828 : i32 to index
      %c0_822 = arith.constant 0 : index
      %c3_823 = arith.constant 3 : index
      %830 = vector.load %arg2[%c0_821, %829, %c0_822, %c3_823] : memref<1x44x4x13xbf16, #tpu.memory_space<vmem>>, vector<1x1x4x8xbf16>
      %831 = vector.shape_cast %830 : vector<1x1x4x8xbf16> to vector<4x8xbf16>
      %c628 = arith.constant 628 : index
      %c0_824 = arith.constant 0 : index
      %832 = vector.load %arg6[%c628, %c0_824] : memref<664x8xbf16, #tpu.memory_space<vmem>>, vector<4x8xbf16>
      tpu.vector_store %arg6[%c628, %c0_824], %831 {strides = array<i32>} : memref<664x8xbf16, #tpu.memory_space<vmem>>, vector<4x8xbf16>,
      %c0_i32_825 = arith.constant 0 : i32
      %833 = arith.addi %c0_i32_825, %802 : i32
      %c0_826 = arith.constant 0 : index
      %834 = arith.index_cast %833 : i32 to index
      %c0_827 = arith.constant 0 : index
      %c4_828 = arith.constant 4 : index
      %835 = vector.load %arg2[%c0_826, %834, %c0_827, %c4_828] : memref<1x44x4x13xbf16, #tpu.memory_space<vmem>>, vector<1x1x4x8xbf16>
      %836 = vector.shape_cast %835 : vector<1x1x4x8xbf16> to vector<4x8xbf16>
      %c632 = arith.constant 632 : index
      %c0_829 = arith.constant 0 : index
      %837 = vector.load %arg6[%c632, %c0_829] : memref<664x8xbf16, #tpu.memory_space<vmem>>, vector<4x8xbf16>
      tpu.vector_store %arg6[%c632, %c0_829], %836 {strides = array<i32>} : memref<664x8xbf16, #tpu.memory_space<vmem>>, vector<4x8xbf16>,
      %c2_i32_830 = arith.constant 2 : i32
      %838 = arith.muli %c2_i32_830, %4 : i32
      %c6_i32 = arith.constant 6 : i32
      %839 = arith.addi %838, %c6_i32 : i32
      %c0_i32_831 = arith.constant 0 : i32
      %840 = arith.addi %c0_i32_831, %839 : i32
      %c0_832 = arith.constant 0 : index
      %841 = arith.index_cast %840 : i32 to index
      %c0_833 = arith.constant 0 : index
      %c1_834 = arith.constant 1 : index
      %842 = vector.load %arg2[%c0_832, %841, %c0_833, %c1_834] : memref<1x44x4x13xbf16, #tpu.memory_space<vmem>>, vector<1x1x4x8xbf16>
      %843 = vector.shape_cast %842 : vector<1x1x4x8xbf16> to vector<4x8xbf16>
      %c636 = arith.constant 636 : index
      %c0_835 = arith.constant 0 : index
      %844 = vector.load %arg6[%c636, %c0_835] : memref<664x8xbf16, #tpu.memory_space<vmem>>, vector<4x8xbf16>
      tpu.vector_store %arg6[%c636, %c0_835], %843 {strides = array<i32>} : memref<664x8xbf16, #tpu.memory_space<vmem>>, vector<4x8xbf16>,
      %c22_i32_836 = arith.constant 22 : i32
      %845 = arith.addi %c22_i32_836, %839 : i32
      %c0_837 = arith.constant 0 : index
      %846 = arith.index_cast %845 : i32 to index
      %c0_838 = arith.constant 0 : index
      %c1_839 = arith.constant 1 : index
      %847 = vector.load %arg2[%c0_837, %846, %c0_838, %c1_839] : memref<1x44x4x13xbf16, #tpu.memory_space<vmem>>, vector<1x1x4x8xbf16>
      %848 = vector.shape_cast %847 : vector<1x1x4x8xbf16> to vector<4x8xbf16>
      %c640 = arith.constant 640 : index
      %c0_840 = arith.constant 0 : index
      %849 = vector.load %arg6[%c640, %c0_840] : memref<664x8xbf16, #tpu.memory_space<vmem>>, vector<4x8xbf16>
      tpu.vector_store %arg6[%c640, %c0_840], %848 {strides = array<i32>} : memref<664x8xbf16, #tpu.memory_space<vmem>>, vector<4x8xbf16>,
      %c0_i32_841 = arith.constant 0 : i32
      %850 = arith.addi %c0_i32_841, %839 : i32
      %c0_842 = arith.constant 0 : index
      %851 = arith.index_cast %850 : i32 to index
      %c0_843 = arith.constant 0 : index
      %c2_844 = arith.constant 2 : index
      %852 = vector.load %arg2[%c0_842, %851, %c0_843, %c2_844] : memref<1x44x4x13xbf16, #tpu.memory_space<vmem>>, vector<1x1x4x8xbf16>
      %853 = vector.shape_cast %852 : vector<1x1x4x8xbf16> to vector<4x8xbf16>
      %c644 = arith.constant 644 : index
      %c0_845 = arith.constant 0 : index
      %854 = vector.load %arg6[%c644, %c0_845] : memref<664x8xbf16, #tpu.memory_space<vmem>>, vector<4x8xbf16>
      tpu.vector_store %arg6[%c644, %c0_845], %853 {strides = array<i32>} : memref<664x8xbf16, #tpu.memory_space<vmem>>, vector<4x8xbf16>,
      %c22_i32_846 = arith.constant 22 : i32
      %855 = arith.addi %c22_i32_846, %839 : i32
      %c0_847 = arith.constant 0 : index
      %856 = arith.index_cast %855 : i32 to index
      %c0_848 = arith.constant 0 : index
      %c2_849 = arith.constant 2 : index
      %857 = vector.load %arg2[%c0_847, %856, %c0_848, %c2_849] : memref<1x44x4x13xbf16, #tpu.memory_space<vmem>>, vector<1x1x4x8xbf16>
      %858 = vector.shape_cast %857 : vector<1x1x4x8xbf16> to vector<4x8xbf16>
      %c648 = arith.constant 648 : index
      %c0_850 = arith.constant 0 : index
      %859 = vector.load %arg6[%c648, %c0_850] : memref<664x8xbf16, #tpu.memory_space<vmem>>, vector<4x8xbf16>
      tpu.vector_store %arg6[%c648, %c0_850], %858 {strides = array<i32>} : memref<664x8xbf16, #tpu.memory_space<vmem>>, vector<4x8xbf16>,
      %c0_i32_851 = arith.constant 0 : i32
      %860 = arith.addi %c0_i32_851, %839 : i32
      %c0_852 = arith.constant 0 : index
      %861 = arith.index_cast %860 : i32 to index
      %c0_853 = arith.constant 0 : index
      %c3_854 = arith.constant 3 : index
      %862 = vector.load %arg2[%c0_852, %861, %c0_853, %c3_854] : memref<1x44x4x13xbf16, #tpu.memory_space<vmem>>, vector<1x1x4x8xbf16>
      %863 = vector.shape_cast %862 : vector<1x1x4x8xbf16> to vector<4x8xbf16>
      %c652 = arith.constant 652 : index
      %c0_855 = arith.constant 0 : index
      %864 = vector.load %arg6[%c652, %c0_855] : memref<664x8xbf16, #tpu.memory_space<vmem>>, vector<4x8xbf16>
      tpu.vector_store %arg6[%c652, %c0_855], %863 {strides = array<i32>} : memref<664x8xbf16, #tpu.memory_space<vmem>>, vector<4x8xbf16>,
      %c22_i32_856 = arith.constant 22 : i32
      %865 = arith.addi %c22_i32_856, %839 : i32
      %c0_857 = arith.constant 0 : index
      %866 = arith.index_cast %865 : i32 to index
      %c0_858 = arith.constant 0 : index
      %c3_859 = arith.constant 3 : index
      %867 = vector.load %arg2[%c0_857, %866, %c0_858, %c3_859] : memref<1x44x4x13xbf16, #tpu.memory_space<vmem>>, vector<1x1x4x8xbf16>
      %868 = vector.shape_cast %867 : vector<1x1x4x8xbf16> to vector<4x8xbf16>
      %c656 = arith.constant 656 : index
      %c0_860 = arith.constant 0 : index
      %869 = vector.load %arg6[%c656, %c0_860] : memref<664x8xbf16, #tpu.memory_space<vmem>>, vector<4x8xbf16>
      tpu.vector_store %arg6[%c656, %c0_860], %868 {strides = array<i32>} : memref<664x8xbf16, #tpu.memory_space<vmem>>, vector<4x8xbf16>,
      %c0_i32_861 = arith.constant 0 : i32
      %870 = arith.addi %c0_i32_861, %839 : i32
      %c0_862 = arith.constant 0 : index
      %871 = arith.index_cast %870 : i32 to index
      %c0_863 = arith.constant 0 : index
      %c4_864 = arith.constant 4 : index
      %872 = vector.load %arg2[%c0_862, %871, %c0_863, %c4_864] : memref<1x44x4x13xbf16, #tpu.memory_space<vmem>>, vector<1x1x4x8xbf16>
      %873 = vector.shape_cast %872 : vector<1x1x4x8xbf16> to vector<4x8xbf16>
      %c660 = arith.constant 660 : index
      %c0_865 = arith.constant 0 : index
      %874 = vector.load %arg6[%c660, %c0_865] : memref<664x8xbf16, #tpu.memory_space<vmem>>, vector<4x8xbf16>
      tpu.vector_store %arg6[%c660, %c0_865], %873 {strides = array<i32>} : memref<664x8xbf16, #tpu.memory_space<vmem>>, vector<4x8xbf16>,
      %c0_866 = arith.constant 0 : index
      %c0_867 = arith.constant 0 : index
      %875 = vector.load %arg6[%c0_866, %c0_867] : memref<664x8xbf16, #tpu.memory_space<vmem>>, vector<664x8xbf16>
      %cst = arith.constant dense<0.000000e+00> : vector<16x8xf32>
      %876 = tpu.matmul %0, %875, %cst {dimension_numbers = #tpu.dot_dimension_numbers<[1], [0], [0], [1], [0, 0, 1, 1], [], []>} : vector<16x664xbf16>, vector<664x8xbf16>, vector<16x8xf32> -> vector<16x8xf32>
      %877 = vector.broadcast %1 : vector<16x1xf32> to vector<16x8xf32>
      %878 = arith.addf %876, %877 : vector<16x8xf32>
      %cst_868 = arith.constant 0.000000e+00 : f32
      %879 = vector.broadcast %cst_868 : f32 to vector<16x8xf32>
      %880 = arith.maximumf %878, %879 : vector<16x8xf32>
      %c0_869 = arith.constant 0 : index
      %881 = arith.index_cast %arg7 : i32 to index
      %c0_870 = arith.constant 0 : index
      %c0_871 = arith.constant 0 : index
      %882 = vector.load %arg5[%c0_869, %881, %c0_870, %c0_871] : memref<1x8x16x8xf32, #tpu.memory_space<vmem>>, vector<1x1x16x8xf32>
      %883 = vector.shape_cast %882 : vector<1x1x16x8xf32> to vector<16x8xf32>
      %884 = vector.shape_cast %880 : vector<16x8xf32> to vector<1x1x16x8xf32>
      tpu.vector_store %arg5[%c0_869, %881, %c0_870, %c0_871], %884 {strides = array<i32>} : memref<1x8x16x8xf32, #tpu.memory_space<vmem>>, vector<1x1x16x8xf32>,
    }
    %c8_i32_4 = arith.constant 8 : i32
    return
  }
  func.func @transform_0(%arg0: i32, %arg1: i32) -> (i32, i32, i32, i32) {
    %c0_i32 = arith.constant 0 : i32
    %c0_i32_0 = arith.constant 0 : i32
    %c0_i32_1 = arith.constant 0 : i32
    %c0_i32_2 = arith.constant 0 : i32
    return %arg0, %c0_i32, %c0_i32_0, %c0_i32_1 : i32, i32, i32, i32
  }
  func.func @transform_1(%arg0: i32, %arg1: i32) -> (i32, i32) {
    %c0_i32 = arith.constant 0 : i32
    %c0_i32_0 = arith.constant 0 : i32
    %c0_i32_1 = arith.constant 0 : i32
    return %c0_i32, %c0_i32_0 : i32, i32
  }
  func.func @transform_2(%arg0: i32, %arg1: i32) -> (i32, i32) {
    %c0_i32 = arith.constant 0 : i32
    %c0_i32_0 = arith.constant 0 : i32
    %c0_i32_1 = arith.constant 0 : i32
    return %c0_i32, %c0_i32_0 : i32, i32
  }
  func.func @transform_3(%arg0: i32, %arg1: i32) -> (i32, i32, i32, i32) {
    %c0_i32 = arith.constant 0 : i32
    %c0_i32_0 = arith.constant 0 : i32
    %c0_i32_1 = arith.constant 0 : i32
    return %arg0, %arg1, %c0_i32, %c0_i32_0 : i32, i32, i32, i32
  }
}

</mosaic_0001>

<llo_original>
// kernel: preproc_block_forward.1
$region0: #{preproc_block_forward.1}
  #allocation0 [shape = 'u32[]', space=smem, size = 0x4, offset = 0x4, fixed_abs, tag = 'smem constant byte address 0x4 - core index']
  #allocation1 [shape = 'u32[72,128]{1,0:T(1,128)}', space=vmem, size = 0x9000, scoped, tag = 'internal scratch']
  #allocation2 [shape = 'bf16[664,8]{1,0:T(8,128)(2,1)}', space=vmem, size = 0x29800, scoped, tag = 'scratch operand']
  %s0 = inlined_call_operand.vmem [shape: bf16[2,44,4,13], index: 0, kind: input, shape index: {}]
  %s1 = inlined_call_operand.vmem [shape: bf16[16,664], index: 1, kind: input, shape index: {}]
  %s2 = inlined_call_operand.vmem [shape: f32[16,1], index: 2, kind: input, shape index: {}]
  %s3 = inlined_call_operand.vmem [shape: f32[2,8,16,8], index: 3, kind: output, shape index: {}]
  %s4 = sld [smem:[#allocation0]]
  $region52: #{preproc_block_forward.1} parent=0
    _
  %s6 = ssub.s32 1, %s4
  %s7 = scalar_select 0, %s6, %s4
  loop: start=0, step=1, limit=4
  $region2: #{preproc_block_forward.1} parent=0 // loop_pre_header
    _
  $region3: #{preproc_block_forward.1} parent=0 // loop_header
    %s9 = sphi 0, %s13
    %p10 = scmp.ge.s32.totalorder %s9, 4
    %s16 = sphi 0, %s28
    %s17 = sphi 0, %s24
    %s18 = sphi 0, %s16
    %s19 = sphi 0, %s17
    %s20 = sphi 0, %s18
    %s21 = sphi 0, %s19
    %s31 = sphi 0, %s33
    %s34 = sphi 0, %s31
    %s35 = sphi 0, %s34
    %s51 = sphi 0, %s35
    %s55 = sphi 0, %s55
    %s57 = sphi 0, %s55
    %s58 = sphi 0, %s57
    %s72 = sphi 0, %s58
    %s76 = sphi 0, %s76
    %s78 = sphi 0, %s76
    %s79 = sphi 0, %s78
    %s93 = sphi 0, %s79
    %s101 = sphi 0, %s103
    %s104 = sphi 0, %s101
    %s105 = sphi 0, %s104
    %s121 = sphi 0, %s105
  $region4: #{preproc_block_forward.1} parent=0 // loop_header_branch
    %12 = sbr.rel (%p10) target = $region8
  $region5: #{preproc_block_forward.1} parent=0 // loop_body
    %s14 = ssub.s32 %s9, 1
    %s15 = ssub.s32 %s9, 2
    %s22 = sadd.s32 1, %s17
    %p23 = scmp.ge.s32.totalorder %s22, 1
    %s24 = scalar_select %p23, 0, %s22
    %s25 = sadd.s32 1, %s16
    %s26 = scalar_select %p23, %s25, %s16
    %p27 = scmp.ge.s32.totalorder %s26, 2
    %s28 = scalar_select %p27, 0, %s26
    %s29 = ssub.s32 %s16, %s28
    %p30 = scmp.eq.s32.totalorder %s29, 0
    %s32 = sadd.s32 %s31, 1
    %s33 = scalar_select %p30, %s31, %s32
    %p36 = pneg %p30
    %p37 = scmp.eq.s32.totalorder %s9, 1
    %p38 = por %p36, %p37
    %p39 = scmp.ne.s32.totalorder %s31, %s34
    %p40 = scmp.eq.s32.totalorder %s9, 0
    %p41 = por %p39, %p40
    %p42 = scmp.ne.s32.totalorder %s31, %s34
    %p43 = scmp.eq.s32.totalorder %s14, 1
    %p44 = por %p42, %p43
    %p45 = scmp.ne.s32.totalorder %s34, %s35
    %p46 = scmp.eq.s32.totalorder %s14, 0
    %p47 = por %p45, %p46
    %p48 = scmp.ne.s32.totalorder %s34, %s35
    %p49 = scmp.eq.s32.totalorder %s15, 1
    %p50 = por %p48, %p49
    %p52 = scmp.ne.s32.totalorder %s35, %s51
    %p53 = scmp.eq.s32.totalorder %s15, 0
    %p54 = por %p52, %p53
    %s56 = sadd.s32 %s55, 1
    %p59 = scmp.eq.s32.totalorder %s9, 1
    %p60 = scmp.ne.s32.totalorder %s55, %s57
    %p61 = scmp.eq.s32.totalorder %s9, 0
    %p62 = por %p60, %p61
    %p63 = scmp.ne.s32.totalorder %s55, %s57
    %p64 = scmp.eq.s32.totalorder %s14, 1
    %p65 = por %p63, %p64
    %p66 = scmp.ne.s32.totalorder %s57, %s58
    %p67 = scmp.eq.s32.totalorder %s14, 0
    %p68 = por %p66, %p67
    %p69 = scmp.ne.s32.totalorder %s57, %s58
    %p70 = scmp.eq.s32.totalorder %s15, 1
    %p71 = por %p69, %p70
    %p73 = scmp.ne.s32.totalorder %s58, %s72
    %p74 = scmp.eq.s32.totalorder %s15, 0
    %p75 = por %p73, %p74
    %s77 = sadd.s32 %s76, 1
    %p80 = scmp.eq.s32.totalorder %s9, 1
    %p81 = scmp.ne.s32.totalorder %s76, %s78
    %p82 = scmp.eq.s32.totalorder %s9, 0
    %p83 = por %p81, %p82
    %p84 = scmp.ne.s32.totalorder %s76, %s78
    %p85 = scmp.eq.s32.totalorder %s14, 1
    %p86 = por %p84, %p85
    %p87 = scmp.ne.s32.totalorder %s78, %s79
    %p88 = scmp.eq.s32.totalorder %s14, 0
    %p89 = por %p87, %p88
    %p90 = scmp.ne.s32.totalorder %s78, %s79
    %p91 = scmp.eq.s32.totalorder %s15, 1
    %p92 = por %p90, %p91
    %p94 = scmp.ne.s32.totalorder %s79, %s93
    %p95 = scmp.eq.s32.totalorder %s15, 0
    %p96 = por %p94, %p95
    %s97 = ssub.s32 %s16, %s28
    %s98 = ssub.s32 %s17, %s24
    %s99 = sor.u32 %s97, %s98
    %p100 = scmp.eq.s32.totalorder %s99, 0
    %s102 = sadd.s32 %s101, 1
    %s103 = scalar_select %p100, %s101, %s102
    %p106 = pneg %p100
    %p107 = scmp.eq.s32.totalorder %s9, 1
    %p108 = por %p106, %p107
    %p109 = scmp.ne.s32.totalorder %s101, %s104
    %p110 = scmp.eq.s32.totalorder %s9, 0
    %p111 = por %p109, %p110
    %p112 = scmp.ne.s32.totalorder %s101, %s104
    %p113 = scmp.eq.s32.totalorder %s14, 1
    %p114 = por %p112, %p113
    %p115 = scmp.ne.s32.totalorder %s104, %s105
    %p116 = scmp.eq.s32.totalorder %s14, 0
    %p117 = por %p115, %p116
    %p118 = scmp.ne.s32.totalorder %s104, %s105
    %p119 = scmp.eq.s32.totalorder %s15, 1
    %p120 = por %p118, %p119
    %p122 = scmp.ne.s32.totalorder %s105, %s121
    %p123 = scmp.eq.s32.totalorder %s15, 0
    %p124 = por %p122, %p123
    %p125 = scmp.le.s32.totalorder 1, %s9
    %p126 = scmp.lt.s32.totalorder %s9, 3
    %p127 = pnand %p125, %p126
    %p128 = pneg %p127
    // Predicated region
    $region9: #{preproc_block_forward.1} parent=5 // pred_check
      _
    $region10: #{preproc_block_forward.1} parent=5 // pred_check_branch
      %130 = sbr.rel (%p127) target = $region12
    $region11: #{preproc_block_forward.1} parent=5 // pred_region
      %s131 = ssub.s32 %s9, 1
      // Predicated region
      $region13: #{preproc_block_forward.1} parent=11 // pred_check
        %p132 = pneg %p68
      $region14: #{preproc_block_forward.1} parent=11 // pred_check_branch
        %134 = sbr.rel (%p132) target = $region16
      $region15: #{preproc_block_forward.1} parent=11 // pred_region
        _
      $region16: #{preproc_block_forward.1} parent=11 // pred_fallthru
        _
      // Predicated region
      $region17: #{preproc_block_forward.1} parent=11 // pred_check
        %p135 = pneg %p89
      $region18: #{preproc_block_forward.1} parent=11 // pred_check_branch
        %137 = sbr.rel (%p135) target = $region20
      $region19: #{preproc_block_forward.1} parent=11 // pred_region
        _
      $region20: #{preproc_block_forward.1} parent=11 // pred_fallthru
        _
    $region12: #{preproc_block_forward.1} parent=5 // pred_fallthru
      _
    %p138 = scmp.lt.s32.totalorder %s9, 2
    // Predicated region
    $region21: #{preproc_block_forward.1} parent=5 // pred_check
      %p139 = pneg %p138
    $region22: #{preproc_block_forward.1} parent=5 // pred_check_branch
      %141 = sbr.rel (%p139) target = $region24
    $region23: #{preproc_block_forward.1} parent=5 // pred_region
      // Predicated region
      $region25: #{preproc_block_forward.1} parent=23 // pred_check
        %p142 = pneg %p41
      $region26: #{preproc_block_forward.1} parent=23 // pred_check_branch
        %144 = sbr.rel (%p142) target = $region28
      $region27: #{preproc_block_forward.1} parent=23 // pred_region
        %p145 = scmp.lt.s32.totalorder %s16, 1
        %s146 = scalar_select %p145, %s16, 1
        %s147 = smul.addr %s146, 44
        %s148 = smul.addr %s147, 2
        %s149 = scalar_lea.vmem %s0, %s148
      $region28: #{preproc_block_forward.1} parent=23 // pred_fallthru
        _
    $region24: #{preproc_block_forward.1} parent=5 // pred_fallthru
      _
    %p150 = scmp.le.s32.totalorder 1, %s9
    %p151 = scmp.lt.s32.totalorder %s9, 3
    %p152 = pnand %p150, %p151
    %p153 = pneg %p152
    // Predicated region
    $region29: #{preproc_block_forward.1} parent=5 // pred_check
      _
    $region30: #{preproc_block_forward.1} parent=5 // pred_check_branch
      %155 = sbr.rel (%p152) target = $region32
    $region31: #{preproc_block_forward.1} parent=5 // pred_region
      %s156 = ssub.s32 %s9, 1
      %p157 = scmp.lt.s32.totalorder %s18, 1
      %s158 = scalar_select %p157, %s18, 1
      %s159 = smul.addr %s158, 44
      %s160 = smul.addr %s159, 2
      %s161 = scalar_lea.vmem %s0, %s160
      %p162 = pneg %p47
      %p163 = pneg %p44
      %p164 = pneg %p68
      %p165 = pneg %p65
      %p166 = pneg %p89
      %p167 = pneg %p86
      %p168 = pneg %p117
      %p169 = pneg %p114
      %s170 = smul.u32 8, %s19
      %p171 = scmp.lt.s32.totalorder %s18, 1
      %s172 = scalar_select %p171, %s18, 1
      %p173 = scmp.lt.s32.totalorder %s170, 7
      %s174 = scalar_select %p173, %s170, 7
      %s175 = smul.addr %s174, 2
      %s176 = smul.addr %s172, 16
      %s177 = sadd.s32 %s175, %s176
      %s178 = smul.addr %s177, 8
      %s179 = scalar_lea.vmem %s3, %s178
      %p180 = scmp.lt.s32.totalorder %s18, 1
      %s181 = scalar_select %p180, %s18, 1
      %s182 = smul.addr %s181, 44
      %s183 = smul.addr %s182, 2
      %s184 = scalar_lea.vmem %s0, %s183
      %s185 = smul.u32 8, %s19
      %p186 = scmp.lt.s32.totalorder %s18, 1
      %s187 = scalar_select %p186, %s18, 1
      %p188 = scmp.lt.s32.totalorder %s185, 7
      %s189 = scalar_select %p188, %s185, 7
      %s190 = smul.addr %s189, 2
      %s191 = smul.addr %s187, 16
      %s192 = sadd.s32 %s190, %s191
      %s193 = smul.addr %s192, 8
      %s194 = scalar_lea.vmem %s3, %s193
      %s195 = smul.u32 8, %s19
      %v197 = vld [vmem:[%s1] sm:$0xff]
      %v198 = vld [vmem:[%s1 + $0x8] sm:$0xff]
      %v199 = vld [vmem:[%s1 + $0x10] sm:$0xff]
      %v200 = vld [vmem:[%s1 + $0x18] sm:$0xff]
      %v201 = vld [vmem:[%s1 + $0x20] sm:$0xff]
      %v202 = vld [vmem:[%s1 + $0x28] sm:$0xff]
      %v203 = vld [vmem:[%s2] sm:$0xff]
      %v204 = vld [vmem:[%s2 + $0x8] sm:$0xff]
      %s205 = smul.u32 %s19, 8
      loop: start=0, step=1, limit=8
      $region33: #{preproc_block_forward.1} parent=31 // loop_pre_header
        _
      $region34: #{preproc_block_forward.1} parent=31 // loop_header
        %s207 = sphi 0, %s211
        %p208 = scmp.ge.s32.totalorder %s207, 8
      $region35: #{preproc_block_forward.1} parent=31 // loop_header_branch
        %210 = sbr.rel (%p208) target = $region39
      $region36: #{preproc_block_forward.1} parent=31 // loop_body
        %s212 = sadd.s32 %s205, %s207
        %s213 = smul.u32 %s212, 2
        %s214 = sadd.s32 %s213, 2
        %s215 = sadd.s32 %s213, 24
        %s216 = smul.addr %s215, 2
        %s217 = scalar_lea.vmem %s184, %s216
        %v218 = vld [vmem:[%s217] sm:$0x3]
        %vm219 = vcmask 58368
        %220 = vst.msk [vmem:[#allocation2] sm:$0x3] %vm219, %v218
        %s221 = smul.addr %s214, 2
        %s222 = scalar_lea.vmem %s184, %s221
        %v223 = vld [vmem:[%s222] sm:$0x3]
        %s225 = scalar_lea.vmem [#allocation1], 1
        %226 = vst [vmem:[%s225] ss:$2 sm:$0xff] %v223
        %v227 = vld.sshfl [vmem:[#allocation1] sm:$0xff pattern:$0x75643120]
        %229 = vrot.lane.b32.xlu0 %v227, 127
        %v230 = vpop.permute.xlu0 %229
        %vm232 = vcmask 60418
        %233 = vst.msk [vmem:[#allocation2] sm:$0xc] %vm232, %v230
        %v234 = vld [vmem:[%s217] sm:$0x3]
        %236 = vst [vmem:[#allocation1] ss:$2 sm:$0xff] %v234
        %v237 = vld.sshfl [vmem:[#allocation1] sm:$0xff pattern:$0x75643120]
        %239 = vrot.lane.b32.xlu0 %v237, 127
        %v240 = vpop.permute.xlu0 %239
        %242 = vst.msk [vmem:[#allocation2 + $0x4] sm:$0x3] %vm219, %v240
        %v243 = vld [vmem:[%s222] sm:$0x3]
        %s245 = scalar_lea.vmem [#allocation1], 1
        %246 = vst [vmem:[%s245] ss:$2 sm:$0xff] %v243
        %v247 = vld.sshfl [vmem:[#allocation1] sm:$0xff pattern:$0x75643120]
        %249 = vrot.lane.b32.xlu0 %v247, 126
        %v250 = vpop.permute.xlu0 %249
        %252 = vst.msk [vmem:[#allocation2 + $0x4] sm:$0xc] %vm232, %v250
        %v253 = vld [vmem:[%s217] sm:$0x3]
        %255 = vst [vmem:[#allocation1] ss:$2 sm:$0xff] %v253
        %v256 = vld.sshfl [vmem:[#allocation1] sm:$0xff pattern:$0x75643120]
        %258 = vrot.lane.b32.xlu0 %v256, 126
        %v259 = vpop.permute.xlu0 %258
        %261 = vst.msk [vmem:[#allocation2 + $0x8] sm:$0x3] %vm219, %v259
        %v262 = vld [vmem:[%s222] sm:$0x3]
        %s264 = scalar_lea.vmem [#allocation1], 1
        %265 = vst [vmem:[%s264] ss:$2 sm:$0xff] %v262
        %v266 = vld.sshfl [vmem:[#allocation1] sm:$0xff pattern:$0x75643120]
        %268 = vrot.lane.b32.xlu0 %v266, 125
        %v269 = vpop.permute.xlu0 %268
        %271 = vst.msk [vmem:[#allocation2 + $0x8] sm:$0xc] %vm232, %v269
        %v272 = vld [vmem:[%s217] sm:$0x3]
        %274 = vst [vmem:[#allocation1] ss:$2 sm:$0xff] %v272
        %v275 = vld.sshfl [vmem:[#allocation1] sm:$0xff pattern:$0x75643120]
        %277 = vrot.lane.b32.xlu0 %v275, 125
        %v278 = vpop.permute.xlu0 %277
        %280 = vst.msk [vmem:[#allocation2 + $0xc] sm:$0x3] %vm219, %v278
        %v281 = vld [vmem:[%s222] sm:$0x3]
        %s283 = scalar_lea.vmem [#allocation1], 1
        %284 = vst [vmem:[%s283] ss:$2 sm:$0xff] %v281
        %v285 = vld.sshfl [vmem:[#allocation1] sm:$0xff pattern:$0x75643120]
        %287 = vrot.lane.b32.xlu0 %v285, 124
        %v288 = vpop.permute.xlu0 %287
        %290 = vst.msk [vmem:[#allocation2 + $0xc] sm:$0xc] %vm232, %v288
        %v291 = vld [vmem:[%s217] sm:$0x3]
        %293 = vst [vmem:[#allocation1] ss:$2 sm:$0xff] %v291
        %v294 = vld.sshfl [vmem:[#allocation1] sm:$0xff pattern:$0x75643120]
        %296 = vrot.lane.b32.xlu0 %v294, 124
        %v297 = vpop.permute.xlu0 %296
        %299 = vst.msk [vmem:[#allocation2 + $0x10] sm:$0x3] %vm219, %v297
        %s300 = sadd.s32 %s213, 3
        %s301 = sadd.s32 %s213, 25
        %s302 = smul.addr %s301, 2
        %s303 = scalar_lea.vmem %s184, %s302
        %v304 = vld [vmem:[%s303] sm:$0x3]
        %s306 = scalar_lea.vmem [#allocation1], 1
        %307 = vst [vmem:[%s306] ss:$2 sm:$0xff] %v304
        %v308 = vld.sshfl [vmem:[#allocation1] sm:$0xff pattern:$0x75643120]
        %310 = vst.msk [vmem:[#allocation2 + $0x10] sm:$0xc] %vm232, %v308
        %s311 = smul.addr %s300, 2
        %s312 = scalar_lea.vmem %s184, %s311
        %v313 = vld [vmem:[%s312] sm:$0x3]
        %315 = vst [vmem:[#allocation1] ss:$2 sm:$0xff] %v313
        %v316 = vld.sshfl [vmem:[#allocation1] sm:$0xff pattern:$0x75643120]
        %318 = vrot.lane.b32.xlu0 %v316, 127
        %v319 = vpop.permute.xlu0 %318
        %321 = vst.msk [vmem:[#allocation2 + $0x14] sm:$0x3] %vm219, %v319
        %v322 = vld [vmem:[%s303] sm:$0x3]
        %s324 = scalar_lea.vmem [#allocation1], 1
        %325 = vst [vmem:[%s324] ss:$2 sm:$0xff] %v322
        %v326 = vld.sshfl [vmem:[#allocation1] sm:$0xff pattern:$0x75643120]
        %328 = vrot.lane.b32.xlu0 %v326, 127
        %v329 = vpop.permute.xlu0 %328
        %331 = vst.msk [vmem:[#allocation2 + $0x14] sm:$0xc] %vm232, %v329
        %v332 = vld [vmem:[%s312] sm:$0x3]
        %334 = vst [vmem:[#allocation1] ss:$2 sm:$0xff] %v332
        %v335 = vld.sshfl [vmem:[#allocation1] sm:$0xff pattern:$0x75643120]
        %337 = vrot.lane.b32.xlu0 %v335, 126
        %v338 = vpop.permute.xlu0 %337
        %340 = vst.msk [vmem:[#allocation2 + $0x18] sm:$0x3] %vm219, %v338
        %v341 = vld [vmem:[%s303] sm:$0x3]
        %s343 = scalar_lea.vmem [#allocation1], 1
        %344 = vst [vmem:[%s343] ss:$2 sm:$0xff] %v341
        %v345 = vld.sshfl [vmem:[#allocation1] sm:$0xff pattern:$0x75643120]
        %347 = vrot.lane.b32.xlu0 %v345, 126
        %v348 = vpop.permute.xlu0 %347
        %350 = vst.msk [vmem:[#allocation2 + $0x18] sm:$0xc] %vm232, %v348
        %v351 = vld [vmem:[%s312] sm:$0x3]
        %353 = vst [vmem:[#allocation1] ss:$2 sm:$0xff] %v351
        %v354 = vld.sshfl [vmem:[#allocation1] sm:$0xff pattern:$0x75643120]
        %356 = vrot.lane.b32.xlu0 %v354, 125
        %v357 = vpop.permute.xlu0 %356
        %359 = vst.msk [vmem:[#allocation2 + $0x1c] sm:$0x3] %vm219, %v357
        %v360 = vld [vmem:[%s303] sm:$0x3]
        %s362 = scalar_lea.vmem [#allocation1], 1
        %363 = vst [vmem:[%s362] ss:$2 sm:$0xff] %v360
        %v364 = vld.sshfl [vmem:[#allocation1] sm:$0xff pattern:$0x75643120]
        %366 = vrot.lane.b32.xlu0 %v364, 125
        %v367 = vpop.permute.xlu0 %366
        %369 = vst.msk [vmem:[#allocation2 + $0x1c] sm:$0xc] %vm232, %v367
        %v370 = vld [vmem:[%s312] sm:$0x3]
        %372 = vst [vmem:[#allocation1] ss:$2 sm:$0xff] %v370
        %v373 = vld.sshfl [vmem:[#allocation1] sm:$0xff pattern:$0x75643120]
        %375 = vrot.lane.b32.xlu0 %v373, 124
        %v376 = vpop.permute.xlu0 %375
        %378 = vst.msk [vmem:[#allocation2 + $0x20] sm:$0x3] %vm219, %v376
        %v379 = vld [vmem:[%s303] sm:$0x3]
        %s381 = scalar_lea.vmem [#allocation1], 1
        %382 = vst [vmem:[%s381] ss:$2 sm:$0xff] %v379
        %v383 = vld.sshfl [vmem:[#allocation1] sm:$0xff pattern:$0x75643120]
        %385 = vrot.lane.b32.xlu0 %v383, 124
        %v386 = vpop.permute.xlu0 %385
        %388 = vst.msk [vmem:[#allocation2 + $0x20] sm:$0xc] %vm232, %v386
        %s389 = sadd.s32 %s213, 4
        %s390 = sadd.s32 %s213, 26
        %s391 = smul.addr %s390, 2
        %s392 = scalar_lea.vmem %s184, %s391
        %v393 = vld [vmem:[%s392] sm:$0x3]
        %394 = vst.msk [vmem:[#allocation2 + $0x24] sm:$0x3] %vm219, %v393
        %s395 = smul.addr %s389, 2
        %s396 = scalar_lea.vmem %s184, %s395
        %v397 = vld [vmem:[%s396] sm:$0x3]
        %s399 = scalar_lea.vmem [#allocation1], 1
        %400 = vst [vmem:[%s399] ss:$2 sm:$0xff] %v397
        %v401 = vld.sshfl [vmem:[#allocation1] sm:$0xff pattern:$0x75643120]
        %403 = vrot.lane.b32.xlu0 %v401, 127
        %v404 = vpop.permute.xlu0 %403
        %406 = vst.msk [vmem:[#allocation2 + $0x24] sm:$0xc] %vm232, %v404
        %v407 = vld [vmem:[%s392] sm:$0x3]
        %409 = vst [vmem:[#allocation1] ss:$2 sm:$0xff] %v407
        %v410 = vld.sshfl [vmem:[#allocation1] sm:$0xff pattern:$0x75643120]
        %412 = vrot.lane.b32.xlu0 %v410, 127
        %v413 = vpop.permute.xlu0 %412
        %415 = vst.msk [vmem:[#allocation2 + $0x28] sm:$0x3] %vm219, %v413
        %v416 = vld [vmem:[%s396] sm:$0x3]
        %s418 = scalar_lea.vmem [#allocation1], 1
        %419 = vst [vmem:[%s418] ss:$2 sm:$0xff] %v416
        %v420 = vld.sshfl [vmem:[#allocation1] sm:$0xff pattern:$0x75643120]
        %422 = vrot.lane.b32.xlu0 %v420, 126
        %v423 = vpop.permute.xlu0 %422
        %425 = vst.msk [vmem:[#allocation2 + $0x28] sm:$0xc] %vm232, %v423
        %v426 = vld [vmem:[%s392] sm:$0x3]
        %428 = vst [vmem:[#allocation1] ss:$2 sm:$0xff] %v426
        %v429 = vld.sshfl [vmem:[#allocation1] sm:$0xff pattern:$0x75643120]
        %431 = vrot.lane.b32.xlu0 %v429, 126
        %v432 = vpop.permute.xlu0 %431
        %434 = vst.msk [vmem:[#allocation2 + $0x2c] sm:$0x3] %vm219, %v432
        %v435 = vld [vmem:[%s396] sm:$0x3]
        %s437 = scalar_lea.vmem [#allocation1], 1
        %438 = vst [vmem:[%s437] ss:$2 sm:$0xff] %v435
        %v439 = vld.sshfl [vmem:[#allocation1] sm:$0xff pattern:$0x75643120]
        %441 = vrot.lane.b32.xlu0 %v439, 125
        %v442 = vpop.permute.xlu0 %441
        %444 = vst.msk [vmem:[#allocation2 + $0x2c] sm:$0xc] %vm232, %v442
        %v445 = vld [vmem:[%s392] sm:$0x3]
        %447 = vst [vmem:[#allocation1] ss:$2 sm:$0xff] %v445
        %v448 = vld.sshfl [vmem:[#allocation1] sm:$0xff pattern:$0x75643120]
        %450 = vrot.lane.b32.xlu0 %v448, 125
        %v451 = vpop.permute.xlu0 %450
        %453 = vst.msk [vmem:[#allocation2 + $0x30] sm:$0x3] %vm219, %v451
        %v454 = vld [vmem:[%s396] sm:$0x3]
        %s456 = scalar_lea.vmem [#allocation1], 1
        %457 = vst [vmem:[%s456] ss:$2 sm:$0xff] %v454
        %v458 = vld.sshfl [vmem:[#allocation1] sm:$0xff pattern:$0x75643120]
        %460 = vrot.lane.b32.xlu0 %v458, 124
        %v461 = vpop.permute.xlu0 %460
        %463 = vst.msk [vmem:[#allocation2 + $0x30] sm:$0xc] %vm232, %v461
        %v464 = vld [vmem:[%s392] sm:$0x3]
        %466 = vst [vmem:[#allocation1] ss:$2 sm:$0xff] %v464
        %v467 = vld.sshfl [vmem:[#allocation1] sm:$0xff pattern:$0x75643120]
        %469 = vrot.lane.b32.xlu0 %v467, 124
        %v470 = vpop.permute.xlu0 %469
        %472 = vst.msk [vmem:[#allocation2 + $0x34] sm:$0x3] %vm219, %v470
        %s473 = sadd.s32 %s213, 1
        %s474 = smul.addr %s473, 2
        %s475 = scalar_lea.vmem %s184, %s474
        %v476 = vld [vmem:[%s475] sm:$0x3]
        %s478 = scalar_lea.vmem [#allocation1], 1
        %479 = vst [vmem:[%s478] ss:$2 sm:$0xff] %v476
        %v480 = vld.sshfl [vmem:[#allocation1] sm:$0xff pattern:$0x75643120]
        %482 = vst.msk [vmem:[#allocation2 + $0x34] sm:$0xc] %vm232, %v480
        %s483 = sadd.s32 %s213, 23
        %s484 = smul.addr %s483, 2
        %s485 = scalar_lea.vmem %s184, %s484
        %v486 = vld [vmem:[%s485] sm:$0x3]
        %487 = vst.msk [vmem:[#allocation2 + $0x38] sm:$0x3] %vm219, %v486
        %v488 = vld [vmem:[%s475] sm:$0x3]
        %s490 = scalar_lea.vmem [#allocation1], 1
        %491 = vst [vmem:[%s490] ss:$2 sm:$0xff] %v488
        %v492 = vld.sshfl [vmem:[#allocation1] sm:$0xff pattern:$0x75643120]
        %494 = vrot.lane.b32.xlu0 %v492, 127
        %v495 = vpop.permute.xlu0 %494
        %497 = vst.msk [vmem:[#allocation2 + $0x38] sm:$0xc] %vm232, %v495
        %v498 = vld [vmem:[%s485] sm:$0x3]
        %500 = vst [vmem:[#allocation1] ss:$2 sm:$0xff] %v498
        %v501 = vld.sshfl [vmem:[#allocation1] sm:$0xff pattern:$0x75643120]
        %503 = vrot.lane.b32.xlu0 %v501, 127
        %v504 = vpop.permute.xlu0 %503
        %506 = vst.msk [vmem:[#allocation2 + $0x3c] sm:$0x3] %vm219, %v504
        %v507 = vld [vmem:[%s475] sm:$0x3]
        %s509 = scalar_lea.vmem [#allocation1], 1
        %510 = vst [vmem:[%s509] ss:$2 sm:$0xff] %v507
        %v511 = vld.sshfl [vmem:[#allocation1] sm:$0xff pattern:$0x75643120]
        %513 = vrot.lane.b32.xlu0 %v511, 126
        %v514 = vpop.permute.xlu0 %513
        %516 = vst.msk [vmem:[#allocation2 + $0x3c] sm:$0xc] %vm232, %v514
        %v517 = vld [vmem:[%s485] sm:$0x3]
        %519 = vst [vmem:[#allocation1] ss:$2 sm:$0xff] %v517
        %v520 = vld.sshfl [vmem:[#allocation1] sm:$0xff pattern:$0x75643120]
        %522 = vrot.lane.b32.xlu0 %v520, 126
        %v523 = vpop.permute.xlu0 %522
        %525 = vst.msk [vmem:[#allocation2 + $0x40] sm:$0x3] %vm219, %v523
        %v526 = vld [vmem:[%s475] sm:$0x3]
        %s528 = scalar_lea.vmem [#allocation1], 1
        %529 = vst [vmem:[%s528] ss:$2 sm:$0xff] %v526
        %v530 = vld.sshfl [vmem:[#allocation1] sm:$0xff pattern:$0x75643120]
        %532 = vrot.lane.b32.xlu0 %v530, 125
        %v533 = vpop.permute.xlu0 %532
        %535 = vst.msk [vmem:[#allocation2 + $0x40] sm:$0xc] %vm232, %v533
        %v536 = vld [vmem:[%s485] sm:$0x3]
        %538 = vst [vmem:[#allocation1] ss:$2 sm:$0xff] %v536
        %v539 = vld.sshfl [vmem:[#allocation1] sm:$0xff pattern:$0x75643120]
        %541 = vrot.lane.b32.xlu0 %v539, 125
        %v542 = vpop.permute.xlu0 %541
        %544 = vst.msk [vmem:[#allocation2 + $0x44] sm:$0x3] %vm219, %v542
        %v545 = vld [vmem:[%s475] sm:$0x3]
        %s547 = scalar_lea.vmem [#allocation1], 1
        %548 = vst [vmem:[%s547] ss:$2 sm:$0xff] %v545
        %v549 = vld.sshfl [vmem:[#allocation1] sm:$0xff pattern:$0x75643120]
        %551 = vrot.lane.b32.xlu0 %v549, 124
        %v552 = vpop.permute.xlu0 %551
        %554 = vst.msk [vmem:[#allocation2 + $0x44] sm:$0xc] %vm232, %v552
        %v555 = vld [vmem:[%s485] sm:$0x3]
        %557 = vst [vmem:[#allocation1] ss:$2 sm:$0xff] %v555
        %v558 = vld.sshfl [vmem:[#allocation1] sm:$0xff pattern:$0x75643120]
        %560 = vrot.lane.b32.xlu0 %v558, 124
        %v561 = vpop.permute.xlu0 %560
        %563 = vst.msk [vmem:[#allocation2 + $0x48] sm:$0x3] %vm219, %v561
        %v564 = vld [vmem:[%s475] sm:$0x3]
        %s566 = scalar_lea.vmem [#allocation1], 1
        %567 = vst [vmem:[%s566] ss:$2 sm:$0xff] %v564
        %v568 = vld.sshfl [vmem:[#allocation1] sm:$0xff pattern:$0x75643120]
        %570 = vrot.lane.b32.xlu0 %v568, 123
        %v571 = vpop.permute.xlu0 %570
        %573 = vst.msk [vmem:[#allocation2 + $0x48] sm:$0xc] %vm232, %v571
        %v574 = vld [vmem:[%s222] sm:$0x3]
        %575 = vst.msk [vmem:[#allocation2 + $0x4c] sm:$0x3] %vm219, %v574
        %v576 = vld [vmem:[%s217] sm:$0x3]
        %s578 = scalar_lea.vmem [#allocation1], 1
        %579 = vst [vmem:[%s578] ss:$2 sm:$0xff] %v576
        %v580 = vld.sshfl [vmem:[#allocation1] sm:$0xff pattern:$0x75643120]
        %582 = vst.msk [vmem:[#allocation2 + $0x4c] sm:$0xc] %vm232, %v580
        %v583 = vld [vmem:[%s222] sm:$0x3]
        %585 = vst [vmem:[#allocation1] ss:$2 sm:$0xff] %v583
        %v586 = vld.sshfl [vmem:[#allocation1] sm:$0xff pattern:$0x75643120]
        %588 = vrot.lane.b32.xlu0 %v586, 127
        %v589 = vpop.permute.xlu0 %588
        %591 = vst.msk [vmem:[#allocation2 + $0x50] sm:$0x3] %vm219, %v589
        %v592 = vld [vmem:[%s217] sm:$0x3]
        %s594 = scalar_lea.vmem [#allocation1], 1
        %595 = vst [vmem:[%s594] ss:$2 sm:$0xff] %v592
        %v596 = vld.sshfl [vmem:[#allocation1] sm:$0xff pattern:$0x75643120]
        %598 = vrot.lane.b32.xlu0 %v596, 127
        %v599 = vpop.permute.xlu0 %598
        %601 = vst.msk [vmem:[#allocation2 + $0x50] sm:$0xc] %vm232, %v599
        %v602 = vld [vmem:[%s222] sm:$0x3]
        %604 = vst [vmem:[#allocation1] ss:$2 sm:$0xff] %v602
        %v605 = vld.sshfl [vmem:[#allocation1] sm:$0xff pattern:$0x75643120]
        %607 = vrot.lane.b32.xlu0 %v605, 126
        %v608 = vpop.permute.xlu0 %607
        %610 = vst.msk [vmem:[#allocation2 + $0x54] sm:$0x3] %vm219, %v608
        %v611 = vld [vmem:[%s217] sm:$0x3]
        %s613 = scalar_lea.vmem [#allocation1], 1
        %614 = vst [vmem:[%s613] ss:$2 sm:$0xff] %v611
        %v615 = vld.sshfl [vmem:[#allocation1] sm:$0xff pattern:$0x75643120]
        %617 = vrot.lane.b32.xlu0 %v615, 126
        %v618 = vpop.permute.xlu0 %617
        %620 = vst.msk [vmem:[#allocation2 + $0x54] sm:$0xc] %vm232, %v618
        %v621 = vld [vmem:[%s222] sm:$0x3]
        %623 = vst [vmem:[#allocation1] ss:$2 sm:$0xff] %v621
        %v624 = vld.sshfl [vmem:[#allocation1] sm:$0xff pattern:$0x75643120]
        %626 = vrot.lane.b32.xlu0 %v624, 125
        %v627 = vpop.permute.xlu0 %626
        %629 = vst.msk [vmem:[#allocation2 + $0x58] sm:$0x3] %vm219, %v627
        %v630 = vld [vmem:[%s217] sm:$0x3]
        %s632 = scalar_lea.vmem [#allocation1], 1
        %633 = vst [vmem:[%s632] ss:$2 sm:$0xff] %v630
        %v634 = vld.sshfl [vmem:[#allocation1] sm:$0xff pattern:$0x75643120]
        %636 = vrot.lane.b32.xlu0 %v634, 125
        %v637 = vpop.permute.xlu0 %636
        %639 = vst.msk [vmem:[#allocation2 + $0x58] sm:$0xc] %vm232, %v637
        %v640 = vld [vmem:[%s222] sm:$0x3]
        %642 = vst [vmem:[#allocation1] ss:$2 sm:$0xff] %v640
        %v643 = vld.sshfl [vmem:[#allocation1] sm:$0xff pattern:$0x75643120]
        %645 = vrot.lane.b32.xlu0 %v643, 124
        %v646 = vpop.permute.xlu0 %645
        %648 = vst.msk [vmem:[#allocation2 + $0x5c] sm:$0x3] %vm219, %v646
        %v649 = vld [vmem:[%s217] sm:$0x3]
        %s651 = scalar_lea.vmem [#allocation1], 1
        %652 = vst [vmem:[%s651] ss:$2 sm:$0xff] %v649
        %v653 = vld.sshfl [vmem:[#allocation1] sm:$0xff pattern:$0x75643120]
        %655 = vrot.lane.b32.xlu0 %v653, 124
        %v656 = vpop.permute.xlu0 %655
        %658 = vst.msk [vmem:[#allocation2 + $0x5c] sm:$0xc] %vm232, %v656
        %v659 = vld [vmem:[%s222] sm:$0x3]
        %661 = vst [vmem:[#allocation1] ss:$2 sm:$0xff] %v659
        %v662 = vld.sshfl [vmem:[#allocation1] sm:$0xff pattern:$0x75643120]
        %664 = vrot.lane.b32.xlu0 %v662, 123
        %v665 = vpop.permute.xlu0 %664
        %667 = vst.msk [vmem:[#allocation2 + $0x60] sm:$0x3] %vm219, %v665
        %v668 = vld [vmem:[%s312] sm:$0x3]
        %s670 = scalar_lea.vmem [#allocation1], 1
        %671 = vst [vmem:[%s670] ss:$2 sm:$0xff] %v668
        %v672 = vld.sshfl [vmem:[#allocation1] sm:$0xff pattern:$0x75643120]
        %674 = vst.msk [vmem:[#allocation2 + $0x60] sm:$0xc] %vm232, %v672
        %v675 = vld [vmem:[%s303] sm:$0x3]
        %676 = vst.msk [vmem:[#allocation2 + $0x64] sm:$0x3] %vm219, %v675
        %v677 = vld [vmem:[%s312] sm:$0x3]
        %s679 = scalar_lea.vmem [#allocation1], 1
        %680 = vst [vmem:[%s679] ss:$2 sm:$0xff] %v677
        %v681 = vld.sshfl [vmem:[#allocation1] sm:$0xff pattern:$0x75643120]
        %683 = vrot.lane.b32.xlu0 %v681, 127
        %v684 = vpop.permute.xlu0 %683
        %686 = vst.msk [vmem:[#allocation2 + $0x64] sm:$0xc] %vm232, %v684
        %v687 = vld [vmem:[%s303] sm:$0x3]
        %689 = vst [vmem:[#allocation1] ss:$2 sm:$0xff] %v687
        %v690 = vld.sshfl [vmem:[#allocation1] sm:$0xff pattern:$0x75643120]
        %692 = vrot.lane.b32.xlu0 %v690, 127
        %v693 = vpop.permute.xlu0 %692
        %695 = vst.msk [vmem:[#allocation2 + $0x68] sm:$0x3] %vm219, %v693
        %v696 = vld [vmem:[%s312] sm:$0x3]
        %s698 = scalar_lea.vmem [#allocation1], 1
        %699 = vst [vmem:[%s698] ss:$2 sm:$0xff] %v696
        %v700 = vld.sshfl [vmem:[#allocation1] sm:$0xff pattern:$0x75643120]
        %702 = vrot.lane.b32.xlu0 %v700, 126
        %v703 = vpop.permute.xlu0 %702
        %705 = vst.msk [vmem:[#allocation2 + $0x68] sm:$0xc] %vm232, %v703
        %v706 = vld [vmem:[%s303] sm:$0x3]
        %708 = vst [vmem:[#allocation1] ss:$2 sm:$0xff] %v706
        %v709 = vld.sshfl [vmem:[#allocation1] sm:$0xff pattern:$0x75643120]
        %711 = vrot.lane.b32.xlu0 %v709, 126
        %v712 = vpop.permute.xlu0 %711
        %714 = vst.msk [vmem:[#allocation2 + $0x6c] sm:$0x3] %vm219, %v712
        %v715 = vld [vmem:[%s312] sm:$0x3]
        %s717 = scalar_lea.vmem [#allocation1], 1
        %718 = vst [vmem:[%s717] ss:$2 sm:$0xff] %v715
        %v719 = vld.sshfl [vmem:[#allocation1] sm:$0xff pattern:$0x75643120]
        %721 = vrot.lane.b32.xlu0 %v719, 125
        %v722 = vpop.permute.xlu0 %721
        %724 = vst.msk [vmem:[#allocation2 + $0x6c] sm:$0xc] %vm232, %v722
        %v725 = vld [vmem:[%s303] sm:$0x3]
        %727 = vst [vmem:[#allocation1] ss:$2 sm:$0xff] %v725
        %v728 = vld.sshfl [vmem:[#allocation1] sm:$0xff pattern:$0x75643120]
        %730 = vrot.lane.b32.xlu0 %v728, 125
        %v731 = vpop.permute.xlu0 %730
        %733 = vst.msk [vmem:[#allocation2 + $0x70] sm:$0x3] %vm219, %v731
        %v734 = vld [vmem:[%s312] sm:$0x3]
        %s736 = scalar_lea.vmem [#allocation1], 1
        %737 = vst [vmem:[%s736] ss:$2 sm:$0xff] %v734
        %v738 = vld.sshfl [vmem:[#allocation1] sm:$0xff pattern:$0x75643120]
        %740 = vrot.lane.b32.xlu0 %v738, 124
        %v741 = vpop.permute.xlu0 %740
        %743 = vst.msk [vmem:[#allocation2 + $0x70] sm:$0xc] %vm232, %v741
        %v744 = vld [vmem:[%s303] sm:$0x3]
        %746 = vst [vmem:[#allocation1] ss:$2 sm:$0xff] %v744
        %v747 = vld.sshfl [vmem:[#allocation1] sm:$0xff pattern:$0x75643120]
        %749 = vrot.lane.b32.xlu0 %v747, 124
        %v750 = vpop.permute.xlu0 %749
        %752 = vst.msk [vmem:[#allocation2 + $0x74] sm:$0x3] %vm219, %v750
        %v753 = vld [vmem:[%s312] sm:$0x3]
        %s755 = scalar_lea.vmem [#allocation1], 1
        %756 = vst [vmem:[%s755] ss:$2 sm:$0xff] %v753
        %v757 = vld.sshfl [vmem:[#allocation1] sm:$0xff pattern:$0x75643120]
        %759 = vrot.lane.b32.xlu0 %v757, 123
        %v760 = vpop.permute.xlu0 %759
        %762 = vst.msk [vmem:[#allocation2 + $0x74] sm:$0xc] %vm232, %v760
        %v763 = vld [vmem:[%s396] sm:$0x3]
        %764 = vst.msk [vmem:[#allocation2 + $0x78] sm:$0x3] %vm219, %v763
        %v765 = vld [vmem:[%s392] sm:$0x3]
        %s767 = scalar_lea.vmem [#allocation1], 1
        %768 = vst [vmem:[%s767] ss:$2 sm:$0xff] %v765
        %v769 = vld.sshfl [vmem:[#allocation1] sm:$0xff pattern:$0x75643120]
        %771 = vst.msk [vmem:[#allocation2 + $0x78] sm:$0xc] %vm232, %v769
        %v772 = vld [vmem:[%s396] sm:$0x3]
        %774 = vst [vmem:[#allocation1] ss:$2 sm:$0xff] %v772
        %v775 = vld.sshfl [vmem:[#allocation1] sm:$0xff pattern:$0x75643120]
        %777 = vrot.lane.b32.xlu0 %v775, 127
        %v778 = vpop.permute.xlu0 %777
        %780 = vst.msk [vmem:[#allocation2 + $0x7c] sm:$0x3] %vm219, %v778
        %v781 = vld [vmem:[%s392] sm:$0x3]
        %s783 = scalar_lea.vmem [#allocation1], 1
        %784 = vst [vmem:[%s783] ss:$2 sm:$0xff] %v781
        %v785 = vld.sshfl [vmem:[#allocation1] sm:$0xff pattern:$0x75643120]
        %787 = vrot.lane.b32.xlu0 %v785, 127
        %v788 = vpop.permute.xlu0 %787
        %790 = vst.msk [vmem:[#allocation2 + $0x7c] sm:$0xc] %vm232, %v788
        %v791 = vld [vmem:[%s396] sm:$0x3]
        %793 = vst [vmem:[#allocation1] ss:$2 sm:$0xff] %v791
        %v794 = vld.sshfl [vmem:[#allocation1] sm:$0xff pattern:$0x75643120]
        %796 = vrot.lane.b32.xlu0 %v794, 126
        %v797 = vpop.permute.xlu0 %796
        %799 = vst.msk [vmem:[#allocation2 + $0x80] sm:$0x3] %vm219, %v797
        %v800 = vld [vmem:[%s392] sm:$0x3]
        %s802 = scalar_lea.vmem [#allocation1], 1
        %803 = vst [vmem:[%s802] ss:$2 sm:$0xff] %v800
        %v804 = vld.sshfl [vmem:[#allocation1] sm:$0xff pattern:$0x75643120]
        %806 = vrot.lane.b32.xlu0 %v804, 126
        %v807 = vpop.permute.xlu0 %806
        %809 = vst.msk [vmem:[#allocation2 + $0x80] sm:$0xc] %vm232, %v807
        %v810 = vld [vmem:[%s396] sm:$0x3]
        %812 = vst [vmem:[#allocation1] ss:$2 sm:$0xff] %v810
        %v813 = vld.sshfl [vmem:[#allocation1] sm:$0xff pattern:$0x75643120]
        %815 = vrot.lane.b32.xlu0 %v813, 125
        %v816 = vpop.permute.xlu0 %815
        %818 = vst.msk [vmem:[#allocation2 + $0x84] sm:$0x3] %vm219, %v816
        %v819 = vld [vmem:[%s392] sm:$0x3]
        %s821 = scalar_lea.vmem [#allocation1], 1
        %822 = vst [vmem:[%s821] ss:$2 sm:$0xff] %v819
        %v823 = vld.sshfl [vmem:[#allocation1] sm:$0xff pattern:$0x75643120]
        %825 = vrot.lane.b32.xlu0 %v823, 125
        %v826 = vpop.permute.xlu0 %825
        %828 = vst.msk [vmem:[#allocation2 + $0x84] sm:$0xc] %vm232, %v826
        %v829 = vld [vmem:[%s396] sm:$0x3]
        %831 = vst [vmem:[#allocation1] ss:$2 sm:$0xff] %v829
        %v832 = vld.sshfl [vmem:[#allocation1] sm:$0xff pattern:$0x75643120]
        %834 = vrot.lane.b32.xlu0 %v832, 124
        %v835 = vpop.permute.xlu0 %834
        %837 = vst.msk [vmem:[#allocation2 + $0x88] sm:$0x3] %vm219, %v835
        %v838 = vld [vmem:[%s392] sm:$0x3]
        %s840 = scalar_lea.vmem [#allocation1], 1
        %841 = vst [vmem:[%s840] ss:$2 sm:$0xff] %v838
        %v842 = vld.sshfl [vmem:[#allocation1] sm:$0xff pattern:$0x75643120]
        %844 = vrot.lane.b32.xlu0 %v842, 124
        %v845 = vpop.permute.xlu0 %844
        %847 = vst.msk [vmem:[#allocation2 + $0x88] sm:$0xc] %vm232, %v845
        %v848 = vld [vmem:[%s396] sm:$0x3]
        %850 = vst [vmem:[#allocation1] ss:$2 sm:$0xff] %v848
        %v851 = vld.sshfl [vmem:[#allocation1] sm:$0xff pattern:$0x75643120]
        %853 = vrot.lane.b32.xlu0 %v851, 123
        %v854 = vpop.permute.xlu0 %853
        %856 = vst.msk [vmem:[#allocation2 + $0x8c] sm:$0x3] %vm219, %v854
        %s857 = sadd.s32 %s213, 5
        %s858 = smul.addr %s857, 2
        %s859 = scalar_lea.vmem %s184, %s858
        %v860 = vld [vmem:[%s859] sm:$0x3]
        %s862 = scalar_lea.vmem [#allocation1], 1
        %863 = vst [vmem:[%s862] ss:$2 sm:$0xff] %v860
        %v864 = vld.sshfl [vmem:[#allocation1] sm:$0xff pattern:$0x75643120]
        %866 = vst.msk [vmem:[#allocation2 + $0x8c] sm:$0xc] %vm232, %v864
        %s867 = sadd.s32 %s213, 27
        %s868 = smul.addr %s867, 2
        %s869 = scalar_lea.vmem %s184, %s868
        %v870 = vld [vmem:[%s869] sm:$0x3]
        %871 = vst.msk [vmem:[#allocation2 + $0x90] sm:$0x3] %vm219, %v870
        %v872 = vld [vmem:[%s859] sm:$0x3]
        %s874 = scalar_lea.vmem [#allocation1], 1
        %875 = vst [vmem:[%s874] ss:$2 sm:$0xff] %v872
        %v876 = vld.sshfl [vmem:[#allocation1] sm:$0xff pattern:$0x75643120]
        %878 = vrot.lane.b32.xlu0 %v876, 127
        %v879 = vpop.permute.xlu0 %878
        %881 = vst.msk [vmem:[#allocation2 + $0x90] sm:$0xc] %vm232, %v879
        %v882 = vld [vmem:[%s869] sm:$0x3]
        %884 = vst [vmem:[#allocation1] ss:$2 sm:$0xff] %v882
        %v885 = vld.sshfl [vmem:[#allocation1] sm:$0xff pattern:$0x75643120]
        %887 = vrot.lane.b32.xlu0 %v885, 127
        %v888 = vpop.permute.xlu0 %887
        %890 = vst.msk [vmem:[#allocation2 + $0x94] sm:$0x3] %vm219, %v888
        %v891 = vld [vmem:[%s859] sm:$0x3]
        %s893 = scalar_lea.vmem [#allocation1], 1
        %894 = vst [vmem:[%s893] ss:$2 sm:$0xff] %v891
        %v895 = vld.sshfl [vmem:[#allocation1] sm:$0xff pattern:$0x75643120]
        %897 = vrot.lane.b32.xlu0 %v895, 126
        %v898 = vpop.permute.xlu0 %897
        %900 = vst.msk [vmem:[#allocation2 + $0x94] sm:$0xc] %vm232, %v898
        %v901 = vld [vmem:[%s869] sm:$0x3]
        %903 = vst [vmem:[#allocation1] ss:$2 sm:$0xff] %v901
        %v904 = vld.sshfl [vmem:[#allocation1] sm:$0xff pattern:$0x75643120]
        %906 = vrot.lane.b32.xlu0 %v904, 126
        %v907 = vpop.permute.xlu0 %906
        %909 = vst.msk [vmem:[#allocation2 + $0x98] sm:$0x3] %vm219, %v907
        %v910 = vld [vmem:[%s859] sm:$0x3]
        %s912 = scalar_lea.vmem [#allocation1], 1
        %913 = vst [vmem:[%s912] ss:$2 sm:$0xff] %v910
        %v914 = vld.sshfl [vmem:[#allocation1] sm:$0xff pattern:$0x75643120]
        %916 = vrot.lane.b32.xlu0 %v914, 125
        %v917 = vpop.permute.xlu0 %916
        %919 = vst.msk [vmem:[#allocation2 + $0x98] sm:$0xc] %vm232, %v917
        %v920 = vld [vmem:[%s869] sm:$0x3]
        %922 = vst [vmem:[#allocation1] ss:$2 sm:$0xff] %v920
        %v923 = vld.sshfl [vmem:[#allocation1] sm:$0xff pattern:$0x75643120]
        %925 = vrot.lane.b32.xlu0 %v923, 125
        %v926 = vpop.permute.xlu0 %925
        %928 = vst.msk [vmem:[#allocation2 + $0x9c] sm:$0x3] %vm219, %v926
        %v929 = vld [vmem:[%s859] sm:$0x3]
        %s931 = scalar_lea.vmem [#allocation1], 1
        %932 = vst [vmem:[%s931] ss:$2 sm:$0xff] %v929
        %v933 = vld.sshfl [vmem:[#allocation1] sm:$0xff pattern:$0x75643120]
        %935 = vrot.lane.b32.xlu0 %v933, 124
        %v936 = vpop.permute.xlu0 %935
        %938 = vst.msk [vmem:[#allocation2 + $0x9c] sm:$0xc] %vm232, %v936
        %v939 = vld [vmem:[%s869] sm:$0x3]
        %941 = vst [vmem:[#allocation1] ss:$2 sm:$0xff] %v939
        %v942 = vld.sshfl [vmem:[#allocation1] sm:$0xff pattern:$0x75643120]
        %944 = vrot.lane.b32.xlu0 %v942, 124
        %v945 = vpop.permute.xlu0 %944
        %947 = vst.msk [vmem:[#allocation2 + $0xa0] sm:$0x3] %vm219, %v945
        %v948 = vld [vmem:[%s859] sm:$0x3]
        %s950 = scalar_lea.vmem [#allocation1], 1
        %951 = vst [vmem:[%s950] ss:$2 sm:$0xff] %v948
        %v952 = vld.sshfl [vmem:[#allocation1] sm:$0xff pattern:$0x75643120]
        %954 = vrot.lane.b32.xlu0 %v952, 123
        %v955 = vpop.permute.xlu0 %954
        %957 = vst.msk [vmem:[#allocation2 + $0xa0] sm:$0xc] %vm232, %v955
        %v958 = vld [vmem:[%s475] sm:$0x3]
        %960 = vst [vmem:[#allocation1] ss:$2 sm:$0xff] %v958
        %v961 = vld.sshfl [vmem:[#allocation1] sm:$0xff pattern:$0x75643120]
        %963 = vrot.lane.b32.xlu0 %v961, 127
        %v964 = vpop.permute.xlu0 %963
        %966 = vst.msk [vmem:[#allocation2 + $0xa4] sm:$0x3] %vm219, %v964
        %v967 = vld [vmem:[%s485] sm:$0x3]
        %s969 = scalar_lea.vmem [#allocation1], 1
        %970 = vst [vmem:[%s969] ss:$2 sm:$0xff] %v967
        %v971 = vld.sshfl [vmem:[#allocation1] sm:$0xff pattern:$0x75643120]
        %973 = vrot.lane.b32.xlu0 %v971, 127
        %v974 = vpop.permute.xlu0 %973
        %976 = vst.msk [vmem:[#allocation2 + $0xa4] sm:$0xc] %vm232, %v974
        %v977 = vld [vmem:[%s475] sm:$0x3]
        %979 = vst [vmem:[#allocation1] ss:$2 sm:$0xff] %v977
        %v980 = vld.sshfl [vmem:[#allocation1] sm:$0xff pattern:$0x75643120]
        %982 = vrot.lane.b32.xlu0 %v980, 126
        %v983 = vpop.permute.xlu0 %982
        %985 = vst.msk [vmem:[#allocation2 + $0xa8] sm:$0x3] %vm219, %v983
        %v986 = vld [vmem:[%s485] sm:$0x3]
        %s988 = scalar_lea.vmem [#allocation1], 1
        %989 = vst [vmem:[%s988] ss:$2 sm:$0xff] %v986
        %v990 = vld.sshfl [vmem:[#allocation1] sm:$0xff pattern:$0x75643120]
        %992 = vrot.lane.b32.xlu0 %v990, 126
        %v993 = vpop.permute.xlu0 %992
        %995 = vst.msk [vmem:[#allocation2 + $0xa8] sm:$0xc] %vm232, %v993
        %v996 = vld [vmem:[%s475] sm:$0x3]
        %998 = vst [vmem:[#allocation1] ss:$2 sm:$0xff] %v996
        %v999 = vld.sshfl [vmem:[#allocation1] sm:$0xff pattern:$0x75643120]
        %1001 = vrot.lane.b32.xlu0 %v999, 125
        %v1002 = vpop.permute.xlu0 %1001
        %1004 = vst.msk [vmem:[#allocation2 + $0xac] sm:$0x3] %vm219, %v1002
        %v1005 = vld [vmem:[%s485] sm:$0x3]
        %s1007 = scalar_lea.vmem [#allocation1], 1
        %1008 = vst [vmem:[%s1007] ss:$2 sm:$0xff] %v1005
        %v1009 = vld.sshfl [vmem:[#allocation1] sm:$0xff pattern:$0x75643120]
        %1011 = vrot.lane.b32.xlu0 %v1009, 125
        %v1012 = vpop.permute.xlu0 %1011
        %1014 = vst.msk [vmem:[#allocation2 + $0xac] sm:$0xc] %vm232, %v1012
        %v1015 = vld [vmem:[%s475] sm:$0x3]
        %1017 = vst [vmem:[#allocation1] ss:$2 sm:$0xff] %v1015
        %v1018 = vld.sshfl [vmem:[#allocation1] sm:$0xff pattern:$0x75643120]
        %1020 = vrot.lane.b32.xlu0 %v1018, 124
        %v1021 = vpop.permute.xlu0 %1020
        %1023 = vst.msk [vmem:[#allocation2 + $0xb0] sm:$0x3] %vm219, %v1021
        %v1024 = vld [vmem:[%s222] sm:$0x3]
        %s1026 = scalar_lea.vmem [#allocation1], 1
        %1027 = vst [vmem:[%s1026] ss:$2 sm:$0xff] %v1024
        %v1028 = vld.sshfl [vmem:[#allocation1] sm:$0xff pattern:$0x75643120]
        %1030 = vrot.lane.b32.xlu0 %v1028, 127
        %v1031 = vpop.permute.xlu0 %1030
        %1033 = vst.msk [vmem:[#allocation2 + $0xb0] sm:$0xc] %vm232, %v1031
        %v1034 = vld [vmem:[%s217] sm:$0x3]
        %1036 = vst [vmem:[#allocation1] ss:$2 sm:$0xff] %v1034
        %v1037 = vld.sshfl [vmem:[#allocation1] sm:$0xff pattern:$0x75643120]
        %1039 = vrot.lane.b32.xlu0 %v1037, 127
        %v1040 = vpop.permute.xlu0 %1039
        %1042 = vst.msk [vmem:[#allocation2 + $0xb4] sm:$0x3] %vm219, %v1040
        %v1043 = vld [vmem:[%s222] sm:$0x3]
        %s1045 = scalar_lea.vmem [#allocation1], 1
        %1046 = vst [vmem:[%s1045] ss:$2 sm:$0xff] %v1043
        %v1047 = vld.sshfl [vmem:[#allocation1] sm:$0xff pattern:$0x75643120]
        %1049 = vrot.lane.b32.xlu0 %v1047, 126
        %v1050 = vpop.permute.xlu0 %1049
        %1052 = vst.msk [vmem:[#allocation2 + $0xb4] sm:$0xc] %vm232, %v1050
        %v1053 = vld [vmem:[%s217] sm:$0x3]
        %1055 = vst [vmem:[#allocation1] ss:$2 sm:$0xff] %v1053
        %v1056 = vld.sshfl [vmem:[#allocation1] sm:$0xff pattern:$0x75643120]
        %1058 = vrot.lane.b32.xlu0 %v1056, 126
        %v1059 = vpop.permute.xlu0 %1058
        %1061 = vst.msk [vmem:[#allocation2 + $0xb8] sm:$0x3] %vm219, %v1059
        %v1062 = vld [vmem:[%s222] sm:$0x3]
        %s1064 = scalar_lea.vmem [#allocation1], 1
        %1065 = vst [vmem:[%s1064] ss:$2 sm:$0xff] %v1062
        %v1066 = vld.sshfl [vmem:[#allocation1] sm:$0xff pattern:$0x75643120]
        %1068 = vrot.lane.b32.xlu0 %v1066, 125
        %v1069 = vpop.permute.xlu0 %1068
        %1071 = vst.msk [vmem:[#allocation2 + $0xb8] sm:$0xc] %vm232, %v1069
        %v1072 = vld [vmem:[%s217] sm:$0x3]
        %1074 = vst [vmem:[#allocation1] ss:$2 sm:$0xff] %v1072
        %v1075 = vld.sshfl [vmem:[#allocation1] sm:$0xff pattern:$0x75643120]
        %1077 = vrot.lane.b32.xlu0 %v1075, 125
        %v1078 = vpop.permute.xlu0 %1077
        %1080 = vst.msk [vmem:[#allocation2 + $0xbc] sm:$0x3] %vm219, %v1078
        %v1081 = vld [vmem:[%s222] sm:$0x3]
        %s1083 = scalar_lea.vmem [#allocation1], 1
        %1084 = vst [vmem:[%s1083] ss:$2 sm:$0xff] %v1081
        %v1085 = vld.sshfl [vmem:[#allocation1] sm:$0xff pattern:$0x75643120]
        %1087 = vrot.lane.b32.xlu0 %v1085, 124
        %v1088 = vpop.permute.xlu0 %1087
        %1090 = vst.msk [vmem:[#allocation2 + $0xbc] sm:$0xc] %vm232, %v1088
        %v1091 = vld [vmem:[%s312] sm:$0x3]
        %1093 = vst [vmem:[#allocation1] ss:$2 sm:$0xff] %v1091
        %v1094 = vld.sshfl [vmem:[#allocation1] sm:$0xff pattern:$0x75643120]
        %1096 = vrot.lane.b32.xlu0 %v1094, 127
        %v1097 = vpop.permute.xlu0 %1096
        %1099 = vst.msk [vmem:[#allocation2 + $0xc0] sm:$0x3] %vm219, %v1097
        %v1100 = vld [vmem:[%s303] sm:$0x3]
        %s1102 = scalar_lea.vmem [#allocation1], 1
        %1103 = vst [vmem:[%s1102] ss:$2 sm:$0xff] %v1100
        %v1104 = vld.sshfl [vmem:[#allocation1] sm:$0xff pattern:$0x75643120]
        %1106 = vrot.lane.b32.xlu0 %v1104, 127
        %v1107 = vpop.permute.xlu0 %1106
        %1109 = vst.msk [vmem:[#allocation2 + $0xc0] sm:$0xc] %vm232, %v1107
        %v1110 = vld [vmem:[%s312] sm:$0x3]
        %1112 = vst [vmem:[#allocation1] ss:$2 sm:$0xff] %v1110
        %v1113 = vld.sshfl [vmem:[#allocation1] sm:$0xff pattern:$0x75643120]
        %1115 = vrot.lane.b32.xlu0 %v1113, 126
        %v1116 = vpop.permute.xlu0 %1115
        %1118 = vst.msk [vmem:[#allocation2 + $0xc4] sm:$0x3] %vm219, %v1116
        %v1119 = vld [vmem:[%s303] sm:$0x3]
        %s1121 = scalar_lea.vmem [#allocation1], 1
        %1122 = vst [vmem:[%s1121] ss:$2 sm:$0xff] %v1119
        %v1123 = vld.sshfl [vmem:[#allocation1] sm:$0xff pattern:$0x75643120]
        %1125 = vrot.lane.b32.xlu0 %v1123, 126
        %v1126 = vpop.permute.xlu0 %1125
        %1128 = vst.msk [vmem:[#allocation2 + $0xc4] sm:$0xc] %vm232, %v1126
        %v1129 = vld [vmem:[%s312] sm:$0x3]
        %1131 = vst [vmem:[#allocation1] ss:$2 sm:$0xff] %v1129
        %v1132 = vld.sshfl [vmem:[#allocation1] sm:$0xff pattern:$0x75643120]
        %1134 = vrot.lane.b32.xlu0 %v1132, 125
        %v1135 = vpop.permute.xlu0 %1134
        %1137 = vst.msk [vmem:[#allocation2 + $0xc8] sm:$0x3] %vm219, %v1135
        %v1138 = vld [vmem:[%s303] sm:$0x3]
        %s1140 = scalar_lea.vmem [#allocation1], 1
        %1141 = vst [vmem:[%s1140] ss:$2 sm:$0xff] %v1138
        %v1142 = vld.sshfl [vmem:[#allocation1] sm:$0xff pattern:$0x75643120]
        %1144 = vrot.lane.b32.xlu0 %v1142, 125
        %v1145 = vpop.permute.xlu0 %1144
        %1147 = vst.msk [vmem:[#allocation2 + $0xc8] sm:$0xc] %vm232, %v1145
        %v1148 = vld [vmem:[%s312] sm:$0x3]
        %1150 = vst [vmem:[#allocation1] ss:$2 sm:$0xff] %v1148
        %v1151 = vld.sshfl [vmem:[#allocation1] sm:$0xff pattern:$0x75643120]
        %1153 = vrot.lane.b32.xlu0 %v1151, 124
        %v1154 = vpop.permute.xlu0 %1153
        %1156 = vst.msk [vmem:[#allocation2 + $0xcc] sm:$0x3] %vm219, %v1154
        %v1157 = vld [vmem:[%s396] sm:$0x3]
        %s1159 = scalar_lea.vmem [#allocation1], 1
        %1160 = vst [vmem:[%s1159] ss:$2 sm:$0xff] %v1157
        %v1161 = vld.sshfl [vmem:[#allocation1] sm:$0xff pattern:$0x75643120]
        %1163 = vrot.lane.b32.xlu0 %v1161, 127
        %v1164 = vpop.permute.xlu0 %1163
        %1166 = vst.msk [vmem:[#allocation2 + $0xcc] sm:$0xc] %vm232, %v1164
        %v1167 = vld [vmem:[%s392] sm:$0x3]
        %1169 = vst [vmem:[#allocation1] ss:$2 sm:$0xff] %v1167
        %v1170 = vld.sshfl [vmem:[#allocation1] sm:$0xff pattern:$0x75643120]
        %1172 = vrot.lane.b32.xlu0 %v1170, 127
        %v1173 = vpop.permute.xlu0 %1172
        %1175 = vst.msk [vmem:[#allocation2 + $0xd0] sm:$0x3] %vm219, %v1173
        %v1176 = vld [vmem:[%s396] sm:$0x3]
        %s1178 = scalar_lea.vmem [#allocation1], 1
        %1179 = vst [vmem:[%s1178] ss:$2 sm:$0xff] %v1176
        %v1180 = vld.sshfl [vmem:[#allocation1] sm:$0xff pattern:$0x75643120]
        %1182 = vrot.lane.b32.xlu0 %v1180, 126
        %v1183 = vpop.permute.xlu0 %1182
        %1185 = vst.msk [vmem:[#allocation2 + $0xd0] sm:$0xc] %vm232, %v1183
        %v1186 = vld [vmem:[%s392] sm:$0x3]
        %1188 = vst [vmem:[#allocation1] ss:$2 sm:$0xff] %v1186
        %v1189 = vld.sshfl [vmem:[#allocation1] sm:$0xff pattern:$0x75643120]
        %1191 = vrot.lane.b32.xlu0 %v1189, 126
        %v1192 = vpop.permute.xlu0 %1191
        %1194 = vst.msk [vmem:[#allocation2 + $0xd4] sm:$0x3] %vm219, %v1192
        %v1195 = vld [vmem:[%s396] sm:$0x3]
        %s1197 = scalar_lea.vmem [#allocation1], 1
        %1198 = vst [vmem:[%s1197] ss:$2 sm:$0xff] %v1195
        %v1199 = vld.sshfl [vmem:[#allocation1] sm:$0xff pattern:$0x75643120]
        %1201 = vrot.lane.b32.xlu0 %v1199, 125
        %v1202 = vpop.permute.xlu0 %1201
        %1204 = vst.msk [vmem:[#allocation2 + $0xd4] sm:$0xc] %vm232, %v1202
        %v1205 = vld [vmem:[%s392] sm:$0x3]
        %1207 = vst [vmem:[#allocation1] ss:$2 sm:$0xff] %v1205
        %v1208 = vld.sshfl [vmem:[#allocation1] sm:$0xff pattern:$0x75643120]
        %1210 = vrot.lane.b32.xlu0 %v1208, 125
        %v1211 = vpop.permute.xlu0 %1210
        %1213 = vst.msk [vmem:[#allocation2 + $0xd8] sm:$0x3] %vm219, %v1211
        %v1214 = vld [vmem:[%s396] sm:$0x3]
        %s1216 = scalar_lea.vmem [#allocation1], 1
        %1217 = vst [vmem:[%s1216] ss:$2 sm:$0xff] %v1214
        %v1218 = vld.sshfl [vmem:[#allocation1] sm:$0xff pattern:$0x75643120]
        %1220 = vrot.lane.b32.xlu0 %v1218, 124
        %v1221 = vpop.permute.xlu0 %1220
        %1223 = vst.msk [vmem:[#allocation2 + $0xd8] sm:$0xc] %vm232, %v1221
        %v1224 = vld [vmem:[%s859] sm:$0x3]
        %1226 = vst [vmem:[#allocation1] ss:$2 sm:$0xff] %v1224
        %v1227 = vld.sshfl [vmem:[#allocation1] sm:$0xff pattern:$0x75643120]
        %1229 = vrot.lane.b32.xlu0 %v1227, 127
        %v1230 = vpop.permute.xlu0 %1229
        %1232 = vst.msk [vmem:[#allocation2 + $0xdc] sm:$0x3] %vm219, %v1230
        %v1233 = vld [vmem:[%s869] sm:$0x3]
        %s1235 = scalar_lea.vmem [#allocation1], 1
        %1236 = vst [vmem:[%s1235] ss:$2 sm:$0xff] %v1233
        %v1237 = vld.sshfl [vmem:[#allocation1] sm:$0xff pattern:$0x75643120]
        %1239 = vrot.lane.b32.xlu0 %v1237, 127
        %v1240 = vpop.permute.xlu0 %1239
        %1242 = vst.msk [vmem:[#allocation2 + $0xdc] sm:$0xc] %vm232, %v1240
        %v1243 = vld [vmem:[%s859] sm:$0x3]
        %1245 = vst [vmem:[#allocation1] ss:$2 sm:$0xff] %v1243
        %v1246 = vld.sshfl [vmem:[#allocation1] sm:$0xff pattern:$0x75643120]
        %1248 = vrot.lane.b32.xlu0 %v1246, 126
        %v1249 = vpop.permute.xlu0 %1248
        %1251 = vst.msk [vmem:[#allocation2 + $0xe0] sm:$0x3] %vm219, %v1249
        %v1252 = vld [vmem:[%s869] sm:$0x3]
        %s1254 = scalar_lea.vmem [#allocation1], 1
        %1255 = vst [vmem:[%s1254] ss:$2 sm:$0xff] %v1252
        %v1256 = vld.sshfl [vmem:[#allocation1] sm:$0xff pattern:$0x75643120]
        %1258 = vrot.lane.b32.xlu0 %v1256, 126
        %v1259 = vpop.permute.xlu0 %1258
        %1261 = vst.msk [vmem:[#allocation2 + $0xe0] sm:$0xc] %vm232, %v1259
        %v1262 = vld [vmem:[%s859] sm:$0x3]
        %1264 = vst [vmem:[#allocation1] ss:$2 sm:$0xff] %v1262
        %v1265 = vld.sshfl [vmem:[#allocation1] sm:$0xff pattern:$0x75643120]
        %1267 = vrot.lane.b32.xlu0 %v1265, 125
        %v1268 = vpop.permute.xlu0 %1267
        %1270 = vst.msk [vmem:[#allocation2 + $0xe4] sm:$0x3] %vm219, %v1268
        %v1271 = vld [vmem:[%s869] sm:$0x3]
        %s1273 = scalar_lea.vmem [#allocation1], 1
        %1274 = vst [vmem:[%s1273] ss:$2 sm:$0xff] %v1271
        %v1275 = vld.sshfl [vmem:[#allocation1] sm:$0xff pattern:$0x75643120]
        %1277 = vrot.lane.b32.xlu0 %v1275, 125
        %v1278 = vpop.permute.xlu0 %1277
        %1280 = vst.msk [vmem:[#allocation2 + $0xe4] sm:$0xc] %vm232, %v1278
        %v1281 = vld [vmem:[%s859] sm:$0x3]
        %1283 = vst [vmem:[#allocation1] ss:$2 sm:$0xff] %v1281
        %v1284 = vld.sshfl [vmem:[#allocation1] sm:$0xff pattern:$0x75643120]
        %1286 = vrot.lane.b32.xlu0 %v1284, 124
        %v1287 = vpop.permute.xlu0 %1286
        %1289 = vst.msk [vmem:[#allocation2 + $0xe8] sm:$0x3] %vm219, %v1287
        %s1290 = smul.addr %s213, 2
        %s1291 = scalar_lea.vmem %s184, %s1290
        %v1292 = vld [vmem:[%s1291] sm:$0x3]
        %s1294 = scalar_lea.vmem [#allocation1], 1
        %1295 = vst [vmem:[%s1294] ss:$2 sm:$0xff] %v1292
        %v1296 = vld.sshfl [vmem:[#allocation1] sm:$0xff pattern:$0x75643120]
        %1298 = vrot.lane.b32.xlu0 %v1296, 127
        %v1299 = vpop.permute.xlu0 %1298
        %1301 = vst.msk [vmem:[#allocation2 + $0xe8] sm:$0xc] %vm232, %v1299
        %s1302 = sadd.s32 %s213, 22
        %s1303 = smul.addr %s1302, 2
        %s1304 = scalar_lea.vmem %s184, %s1303
        %v1305 = vld [vmem:[%s1304] sm:$0x3]
        %1307 = vst [vmem:[#allocation1] ss:$2 sm:$0xff] %v1305
        %v1308 = vld.sshfl [vmem:[#allocation1] sm:$0xff pattern:$0x75643120]
        %1310 = vrot.lane.b32.xlu0 %v1308, 127
        %v1311 = vpop.permute.xlu0 %1310
        %1313 = vst.msk [vmem:[#allocation2 + $0xec] sm:$0x3] %vm219, %v1311
        %v1314 = vld [vmem:[%s1291] sm:$0x3]
        %s1316 = scalar_lea.vmem [#allocation1], 1
        %1317 = vst [vmem:[%s1316] ss:$2 sm:$0xff] %v1314
        %v1318 = vld.sshfl [vmem:[#allocation1] sm:$0xff pattern:$0x75643120]
        %1320 = vrot.lane.b32.xlu0 %v1318, 126
        %v1321 = vpop.permute.xlu0 %1320
        %1323 = vst.msk [vmem:[#allocation2 + $0xec] sm:$0xc] %vm232, %v1321
        %v1324 = vld [vmem:[%s1304] sm:$0x3]
        %1326 = vst [vmem:[#allocation1] ss:$2 sm:$0xff] %v1324
        %v1327 = vld.sshfl [vmem:[#allocation1] sm:$0xff pattern:$0x75643120]
        %1329 = vrot.lane.b32.xlu0 %v1327, 126
        %v1330 = vpop.permute.xlu0 %1329
        %1332 = vst.msk [vmem:[#allocation2 + $0xf0] sm:$0x3] %vm219, %v1330
        %v1333 = vld [vmem:[%s1291] sm:$0x3]
        %s1335 = scalar_lea.vmem [#allocation1], 1
        %1336 = vst [vmem:[%s1335] ss:$2 sm:$0xff] %v1333
        %v1337 = vld.sshfl [vmem:[#allocation1] sm:$0xff pattern:$0x75643120]
        %1339 = vrot.lane.b32.xlu0 %v1337, 125
        %v1340 = vpop.permute.xlu0 %1339
        %1342 = vst.msk [vmem:[#allocation2 + $0xf0] sm:$0xc] %vm232, %v1340
        %v1343 = vld [vmem:[%s1304] sm:$0x3]
        %1345 = vst [vmem:[#allocation1] ss:$2 sm:$0xff] %v1343
        %v1346 = vld.sshfl [vmem:[#allocation1] sm:$0xff pattern:$0x75643120]
        %1348 = vrot.lane.b32.xlu0 %v1346, 125
        %v1349 = vpop.permute.xlu0 %1348
        %1351 = vst.msk [vmem:[#allocation2 + $0xf4] sm:$0x3] %vm219, %v1349
        %v1352 = vld [vmem:[%s1291] sm:$0x3]
        %s1354 = scalar_lea.vmem [#allocation1], 1
        %1355 = vst [vmem:[%s1354] ss:$2 sm:$0xff] %v1352
        %v1356 = vld.sshfl [vmem:[#allocation1] sm:$0xff pattern:$0x75643120]
        %1358 = vrot.lane.b32.xlu0 %v1356, 124
        %v1359 = vpop.permute.xlu0 %1358
        %1361 = vst.msk [vmem:[#allocation2 + $0xf4] sm:$0xc] %vm232, %v1359
        %v1362 = vld [vmem:[%s475] sm:$0x3]
        %1364 = vst [vmem:[#allocation1] ss:$2 sm:$0xff] %v1362
        %v1365 = vld.sshfl [vmem:[#allocation1] sm:$0xff pattern:$0x75643120]
        %1367 = vrot.lane.b32.xlu0 %v1365, 127
        %v1368 = vpop.permute.xlu0 %1367
        %1370 = vst.msk [vmem:[#allocation2 + $0xf8] sm:$0x3] %vm219, %v1368
        %v1371 = vld [vmem:[%s485] sm:$0x3]
        %s1373 = scalar_lea.vmem [#allocation1], 1
        %1374 = vst [vmem:[%s1373] ss:$2 sm:$0xff] %v1371
        %v1375 = vld.sshfl [vmem:[#allocation1] sm:$0xff pattern:$0x75643120]
        %1377 = vrot.lane.b32.xlu0 %v1375, 127
        %v1378 = vpop.permute.xlu0 %1377
        %1380 = vst.msk [vmem:[#allocation2 + $0xf8] sm:$0xc] %vm232, %v1378
        %v1381 = vld [vmem:[%s475] sm:$0x3]
        %1383 = vst [vmem:[#allocation1] ss:$2 sm:$0xff] %v1381
        %v1384 = vld.sshfl [vmem:[#allocation1] sm:$0xff pattern:$0x75643120]
        %1386 = vrot.lane.b32.xlu0 %v1384, 126
        %v1387 = vpop.permute.xlu0 %1386
        %1389 = vst.msk [vmem:[#allocation2 + $0xfc] sm:$0x3] %vm219, %v1387
        %v1390 = vld [vmem:[%s485] sm:$0x3]
        %s1392 = scalar_lea.vmem [#allocation1], 1
        %1393 = vst [vmem:[%s1392] ss:$2 sm:$0xff] %v1390
        %v1394 = vld.sshfl [vmem:[#allocation1] sm:$0xff pattern:$0x75643120]
        %1396 = vrot.lane.b32.xlu0 %v1394, 126
        %v1397 = vpop.permute.xlu0 %1396
        %1399 = vst.msk [vmem:[#allocation2 + $0xfc] sm:$0xc] %vm232, %v1397
        %v1400 = vld [vmem:[%s475] sm:$0x3]
        %1402 = vst [vmem:[#allocation1] ss:$2 sm:$0xff] %v1400
        %v1403 = vld.sshfl [vmem:[#allocation1] sm:$0xff pattern:$0x75643120]
        %1405 = vrot.lane.b32.xlu0 %v1403, 125
        %v1406 = vpop.permute.xlu0 %1405
        %1408 = vst.msk [vmem:[#allocation2 + $0x100] sm:$0x3] %vm219, %v1406
        %v1409 = vld [vmem:[%s485] sm:$0x3]
        %s1411 = scalar_lea.vmem [#allocation1], 1
        %1412 = vst [vmem:[%s1411] ss:$2 sm:$0xff] %v1409
        %v1413 = vld.sshfl [vmem:[#allocation1] sm:$0xff pattern:$0x75643120]
        %1415 = vrot.lane.b32.xlu0 %v1413, 125
        %v1416 = vpop.permute.xlu0 %1415
        %1418 = vst.msk [vmem:[#allocation2 + $0x100] sm:$0xc] %vm232, %v1416
        %v1419 = vld [vmem:[%s475] sm:$0x3]
        %1421 = vst [vmem:[#allocation1] ss:$2 sm:$0xff] %v1419
        %v1422 = vld.sshfl [vmem:[#allocation1] sm:$0xff pattern:$0x75643120]
        %1424 = vrot.lane.b32.xlu0 %v1422, 124
        %v1425 = vpop.permute.xlu0 %1424
        %1427 = vst.msk [vmem:[#allocation2 + $0x104] sm:$0x3] %vm219, %v1425
        %v1428 = vld [vmem:[%s222] sm:$0x3]
        %s1430 = scalar_lea.vmem [#allocation1], 1
        %1431 = vst [vmem:[%s1430] ss:$2 sm:$0xff] %v1428
        %v1432 = vld.sshfl [vmem:[#allocation1] sm:$0xff pattern:$0x75643120]
        %1434 = vrot.lane.b32.xlu0 %v1432, 127
        %v1435 = vpop.permute.xlu0 %1434
        %1437 = vst.msk [vmem:[#allocation2 + $0x104] sm:$0xc] %vm232, %v1435
        %v1438 = vld [vmem:[%s217] sm:$0x3]
        %1440 = vst [vmem:[#allocation1] ss:$2 sm:$0xff] %v1438
        %v1441 = vld.sshfl [vmem:[#allocation1] sm:$0xff pattern:$0x75643120]
        %1443 = vrot.lane.b32.xlu0 %v1441, 127
        %v1444 = vpop.permute.xlu0 %1443
        %1446 = vst.msk [vmem:[#allocation2 + $0x108] sm:$0x3] %vm219, %v1444
        %v1447 = vld [vmem:[%s222] sm:$0x3]
        %s1449 = scalar_lea.vmem [#allocation1], 1
        %1450 = vst [vmem:[%s1449] ss:$2 sm:$0xff] %v1447
        %v1451 = vld.sshfl [vmem:[#allocation1] sm:$0xff pattern:$0x75643120]
        %1453 = vrot.lane.b32.xlu0 %v1451, 126
        %v1454 = vpop.permute.xlu0 %1453
        %1456 = vst.msk [vmem:[#allocation2 + $0x108] sm:$0xc] %vm232, %v1454
        %v1457 = vld [vmem:[%s217] sm:$0x3]
        %1459 = vst [vmem:[#allocation1] ss:$2 sm:$0xff] %v1457
        %v1460 = vld.sshfl [vmem:[#allocation1] sm:$0xff pattern:$0x75643120]
        %1462 = vrot.lane.b32.xlu0 %v1460, 126
        %v1463 = vpop.permute.xlu0 %1462
        %1465 = vst.msk [vmem:[#allocation2 + $0x10c] sm:$0x3] %vm219, %v1463
        %v1466 = vld [vmem:[%s222] sm:$0x3]
        %s1468 = scalar_lea.vmem [#allocation1], 1
        %1469 = vst [vmem:[%s1468] ss:$2 sm:$0xff] %v1466
        %v1470 = vld.sshfl [vmem:[#allocation1] sm:$0xff pattern:$0x75643120]
        %1472 = vrot.lane.b32.xlu0 %v1470, 125
        %v1473 = vpop.permute.xlu0 %1472
        %1475 = vst.msk [vmem:[#allocation2 + $0x10c] sm:$0xc] %vm232, %v1473
        %v1476 = vld [vmem:[%s217] sm:$0x3]
        %1478 = vst [vmem:[#allocation1] ss:$2 sm:$0xff] %v1476
        %v1479 = vld.sshfl [vmem:[#allocation1] sm:$0xff pattern:$0x75643120]
        %1481 = vrot.lane.b32.xlu0 %v1479, 125
        %v1482 = vpop.permute.xlu0 %1481
        %1484 = vst.msk [vmem:[#allocation2 + $0x110] sm:$0x3] %vm219, %v1482
        %v1485 = vld [vmem:[%s222] sm:$0x3]
        %s1487 = scalar_lea.vmem [#allocation1], 1
        %1488 = vst [vmem:[%s1487] ss:$2 sm:$0xff] %v1485
        %v1489 = vld.sshfl [vmem:[#allocation1] sm:$0xff pattern:$0x75643120]
        %1491 = vrot.lane.b32.xlu0 %v1489, 124
        %v1492 = vpop.permute.xlu0 %1491
        %1494 = vst.msk [vmem:[#allocation2 + $0x110] sm:$0xc] %vm232, %v1492
        %v1495 = vld [vmem:[%s312] sm:$0x3]
        %1497 = vst [vmem:[#allocation1] ss:$2 sm:$0xff] %v1495
        %v1498 = vld.sshfl [vmem:[#allocation1] sm:$0xff pattern:$0x75643120]
        %1500 = vrot.lane.b32.xlu0 %v1498, 127
        %v1501 = vpop.permute.xlu0 %1500
        %1503 = vst.msk [vmem:[#allocation2 + $0x114] sm:$0x3] %vm219, %v1501
        %v1504 = vld [vmem:[%s303] sm:$0x3]
        %s1506 = scalar_lea.vmem [#allocation1], 1
        %1507 = vst [vmem:[%s1506] ss:$2 sm:$0xff] %v1504
        %v1508 = vld.sshfl [vmem:[#allocation1] sm:$0xff pattern:$0x75643120]
        %1510 = vrot.lane.b32.xlu0 %v1508, 127
        %v1511 = vpop.permute.xlu0 %1510
        %1513 = vst.msk [vmem:[#allocation2 + $0x114] sm:$0xc] %vm232, %v1511
        %v1514 = vld [vmem:[%s312] sm:$0x3]
        %1516 = vst [vmem:[#allocation1] ss:$2 sm:$0xff] %v1514
        %v1517 = vld.sshfl [vmem:[#allocation1] sm:$0xff pattern:$0x75643120]
        %1519 = vrot.lane.b32.xlu0 %v1517, 126
        %v1520 = vpop.permute.xlu0 %1519
        %1522 = vst.msk [vmem:[#allocation2 + $0x118] sm:$0x3] %vm219, %v1520
        %v1523 = vld [vmem:[%s303] sm:$0x3]
        %s1525 = scalar_lea.vmem [#allocation1], 1
        %1526 = vst [vmem:[%s1525] ss:$2 sm:$0xff] %v1523
        %v1527 = vld.sshfl [vmem:[#allocation1] sm:$0xff pattern:$0x75643120]
        %1529 = vrot.lane.b32.xlu0 %v1527, 126
        %v1530 = vpop.permute.xlu0 %1529
        %1532 = vst.msk [vmem:[#allocation2 + $0x118] sm:$0xc] %vm232, %v1530
        %v1533 = vld [vmem:[%s312] sm:$0x3]
        %1535 = vst [vmem:[#allocation1] ss:$2 sm:$0xff] %v1533
        %v1536 = vld.sshfl [vmem:[#allocation1] sm:$0xff pattern:$0x75643120]
        %1538 = vrot.lane.b32.xlu0 %v1536, 125
        %v1539 = vpop.permute.xlu0 %1538
        %1541 = vst.msk [vmem:[#allocation2 + $0x11c] sm:$0x3] %vm219, %v1539
        %v1542 = vld [vmem:[%s303] sm:$0x3]
        %s1544 = scalar_lea.vmem [#allocation1], 1
        %1545 = vst [vmem:[%s1544] ss:$2 sm:$0xff] %v1542
        %v1546 = vld.sshfl [vmem:[#allocation1] sm:$0xff pattern:$0x75643120]
        %1548 = vrot.lane.b32.xlu0 %v1546, 125
        %v1549 = vpop.permute.xlu0 %1548
        %1551 = vst.msk [vmem:[#allocation2 + $0x11c] sm:$0xc] %vm232, %v1549
        %v1552 = vld [vmem:[%s312] sm:$0x3]
        %1554 = vst [vmem:[#allocation1] ss:$2 sm:$0xff] %v1552
        %v1555 = vld.sshfl [vmem:[#allocation1] sm:$0xff pattern:$0x75643120]
        %1557 = vrot.lane.b32.xlu0 %v1555, 124
        %v1558 = vpop.permute.xlu0 %1557
        %1560 = vst.msk [vmem:[#allocation2 + $0x120] sm:$0x3] %vm219, %v1558
        %v1561 = vld [vmem:[%s396] sm:$0x3]
        %s1563 = scalar_lea.vmem [#allocation1], 1
        %1564 = vst [vmem:[%s1563] ss:$2 sm:$0xff] %v1561
        %v1565 = vld.sshfl [vmem:[#allocation1] sm:$0xff pattern:$0x75643120]
        %1567 = vrot.lane.b32.xlu0 %v1565, 127
        %v1568 = vpop.permute.xlu0 %1567
        %1570 = vst.msk [vmem:[#allocation2 + $0x120] sm:$0xc] %vm232, %v1568
        %v1571 = vld [vmem:[%s392] sm:$0x3]
        %1573 = vst [vmem:[#allocation1] ss:$2 sm:$0xff] %v1571
        %v1574 = vld.sshfl [vmem:[#allocation1] sm:$0xff pattern:$0x75643120]
        %1576 = vrot.lane.b32.xlu0 %v1574, 127
        %v1577 = vpop.permute.xlu0 %1576
        %1579 = vst.msk [vmem:[#allocation2 + $0x124] sm:$0x3] %vm219, %v1577
        %v1580 = vld [vmem:[%s396] sm:$0x3]
        %s1582 = scalar_lea.vmem [#allocation1], 1
        %1583 = vst [vmem:[%s1582] ss:$2 sm:$0xff] %v1580
        %v1584 = vld.sshfl [vmem:[#allocation1] sm:$0xff pattern:$0x75643120]
        %1586 = vrot.lane.b32.xlu0 %v1584, 126
        %v1587 = vpop.permute.xlu0 %1586
        %1589 = vst.msk [vmem:[#allocation2 + $0x124] sm:$0xc] %vm232, %v1587
        %v1590 = vld [vmem:[%s392] sm:$0x3]
        %1592 = vst [vmem:[#allocation1] ss:$2 sm:$0xff] %v1590
        %v1593 = vld.sshfl [vmem:[#allocation1] sm:$0xff pattern:$0x75643120]
        %1595 = vrot.lane.b32.xlu0 %v1593, 126
        %v1596 = vpop.permute.xlu0 %1595
        %1598 = vst.msk [vmem:[#allocation2 + $0x128] sm:$0x3] %vm219, %v1596
        %v1599 = vld [vmem:[%s396] sm:$0x3]
        %s1601 = scalar_lea.vmem [#allocation1], 1
        %1602 = vst [vmem:[%s1601] ss:$2 sm:$0xff] %v1599
        %v1603 = vld.sshfl [vmem:[#allocation1] sm:$0xff pattern:$0x75643120]
        %1605 = vrot.lane.b32.xlu0 %v1603, 125
        %v1606 = vpop.permute.xlu0 %1605
        %1608 = vst.msk [vmem:[#allocation2 + $0x128] sm:$0xc] %vm232, %v1606
        %v1609 = vld [vmem:[%s392] sm:$0x3]
        %1611 = vst [vmem:[#allocation1] ss:$2 sm:$0xff] %v1609
        %v1612 = vld.sshfl [vmem:[#allocation1] sm:$0xff pattern:$0x75643120]
        %1614 = vrot.lane.b32.xlu0 %v1612, 125
        %v1615 = vpop.permute.xlu0 %1614
        %1617 = vst.msk [vmem:[#allocation2 + $0x12c] sm:$0x3] %vm219, %v1615
        %v1618 = vld [vmem:[%s396] sm:$0x3]
        %s1620 = scalar_lea.vmem [#allocation1], 1
        %1621 = vst [vmem:[%s1620] ss:$2 sm:$0xff] %v1618
        %v1622 = vld.sshfl [vmem:[#allocation1] sm:$0xff pattern:$0x75643120]
        %1624 = vrot.lane.b32.xlu0 %v1622, 124
        %v1625 = vpop.permute.xlu0 %1624
        %1627 = vst.msk [vmem:[#allocation2 + $0x12c] sm:$0xc] %vm232, %v1625
        %v1628 = vld [vmem:[%s859] sm:$0x3]
        %1630 = vst [vmem:[#allocation1] ss:$2 sm:$0xff] %v1628
        %v1631 = vld.sshfl [vmem:[#allocation1] sm:$0xff pattern:$0x75643120]
        %1633 = vrot.lane.b32.xlu0 %v1631, 127
        %v1634 = vpop.permute.xlu0 %1633
        %1636 = vst.msk [vmem:[#allocation2 + $0x130] sm:$0x3] %vm219, %v1634
        %v1637 = vld [vmem:[%s869] sm:$0x3]
        %s1639 = scalar_lea.vmem [#allocation1], 1
        %1640 = vst [vmem:[%s1639] ss:$2 sm:$0xff] %v1637
        %v1641 = vld.sshfl [vmem:[#allocation1] sm:$0xff pattern:$0x75643120]
        %1643 = vrot.lane.b32.xlu0 %v1641, 127
        %v1644 = vpop.permute.xlu0 %1643
        %1646 = vst.msk [vmem:[#allocation2 + $0x130] sm:$0xc] %vm232, %v1644
        %v1647 = vld [vmem:[%s859] sm:$0x3]
        %1649 = vst [vmem:[#allocation1] ss:$2 sm:$0xff] %v1647
        %v1650 = vld.sshfl [vmem:[#allocation1] sm:$0xff pattern:$0x75643120]
        %1652 = vrot.lane.b32.xlu0 %v1650, 126
        %v1653 = vpop.permute.xlu0 %1652
        %1655 = vst.msk [vmem:[#allocation2 + $0x134] sm:$0x3] %vm219, %v1653
        %v1656 = vld [vmem:[%s869] sm:$0x3]
        %s1658 = scalar_lea.vmem [#allocation1], 1
        %1659 = vst [vmem:[%s1658] ss:$2 sm:$0xff] %v1656
        %v1660 = vld.sshfl [vmem:[#allocation1] sm:$0xff pattern:$0x75643120]
        %1662 = vrot.lane.b32.xlu0 %v1660, 126
        %v1663 = vpop.permute.xlu0 %1662
        %1665 = vst.msk [vmem:[#allocation2 + $0x134] sm:$0xc] %vm232, %v1663
        %v1666 = vld [vmem:[%s859] sm:$0x3]
        %1668 = vst [vmem:[#allocation1] ss:$2 sm:$0xff] %v1666
        %v1669 = vld.sshfl [vmem:[#allocation1] sm:$0xff pattern:$0x75643120]
        %1671 = vrot.lane.b32.xlu0 %v1669, 125
        %v1672 = vpop.permute.xlu0 %1671
        %1674 = vst.msk [vmem:[#allocation2 + $0x138] sm:$0x3] %vm219, %v1672
        %v1675 = vld [vmem:[%s869] sm:$0x3]
        %s1677 = scalar_lea.vmem [#allocation1], 1
        %1678 = vst [vmem:[%s1677] ss:$2 sm:$0xff] %v1675
        %v1679 = vld.sshfl [vmem:[#allocation1] sm:$0xff pattern:$0x75643120]
        %1681 = vrot.lane.b32.xlu0 %v1679, 125
        %v1682 = vpop.permute.xlu0 %1681
        %1684 = vst.msk [vmem:[#allocation2 + $0x138] sm:$0xc] %vm232, %v1682
        %v1685 = vld [vmem:[%s859] sm:$0x3]
        %1687 = vst [vmem:[#allocation1] ss:$2 sm:$0xff] %v1685
        %v1688 = vld.sshfl [vmem:[#allocation1] sm:$0xff pattern:$0x75643120]
        %1690 = vrot.lane.b32.xlu0 %v1688, 124
        %v1691 = vpop.permute.xlu0 %1690
        %1693 = vst.msk [vmem:[#allocation2 + $0x13c] sm:$0x3] %vm219, %v1691
        %s1694 = sadd.s32 %s213, 6
        %s1695 = smul.addr %s1694, 2
        %s1696 = scalar_lea.vmem %s184, %s1695
        %v1697 = vld [vmem:[%s1696] sm:$0x3]
        %s1699 = scalar_lea.vmem [#allocation1], 1
        %1700 = vst [vmem:[%s1699] ss:$2 sm:$0xff] %v1697
        %v1701 = vld.sshfl [vmem:[#allocation1] sm:$0xff pattern:$0x75643120]
        %1703 = vrot.lane.b32.xlu0 %v1701, 127
        %v1704 = vpop.permute.xlu0 %1703
        %1706 = vst.msk [vmem:[#allocation2 + $0x13c] sm:$0xc] %vm232, %v1704
        %s1707 = sadd.s32 %s213, 28
        %s1708 = smul.addr %s1707, 2
        %s1709 = scalar_lea.vmem %s184, %s1708
        %v1710 = vld [vmem:[%s1709] sm:$0x3]
        %1712 = vst [vmem:[#allocation1] ss:$2 sm:$0xff] %v1710
        %v1713 = vld.sshfl [vmem:[#allocation1] sm:$0xff pattern:$0x75643120]
        %1715 = vrot.lane.b32.xlu0 %v1713, 127
        %v1716 = vpop.permute.xlu0 %1715
        %1718 = vst.msk [vmem:[#allocation2 + $0x140] sm:$0x3] %vm219, %v1716
        %v1719 = vld [vmem:[%s1696] sm:$0x3]
        %s1721 = scalar_lea.vmem [#allocation1], 1
        %1722 = vst [vmem:[%s1721] ss:$2 sm:$0xff] %v1719
        %v1723 = vld.sshfl [vmem:[#allocation1] sm:$0xff pattern:$0x75643120]
        %1725 = vrot.lane.b32.xlu0 %v1723, 126
        %v1726 = vpop.permute.xlu0 %1725
        %1728 = vst.msk [vmem:[#allocation2 + $0x140] sm:$0xc] %vm232, %v1726
        %v1729 = vld [vmem:[%s1709] sm:$0x3]
        %1731 = vst [vmem:[#allocation1] ss:$2 sm:$0xff] %v1729
        %v1732 = vld.sshfl [vmem:[#allocation1] sm:$0xff pattern:$0x75643120]
        %1734 = vrot.lane.b32.xlu0 %v1732, 126
        %v1735 = vpop.permute.xlu0 %1734
        %1737 = vst.msk [vmem:[#allocation2 + $0x144] sm:$0x3] %vm219, %v1735
        %v1738 = vld [vmem:[%s1696] sm:$0x3]
        %s1740 = scalar_lea.vmem [#allocation1], 1
        %1741 = vst [vmem:[%s1740] ss:$2 sm:$0xff] %v1738
        %v1742 = vld.sshfl [vmem:[#allocation1] sm:$0xff pattern:$0x75643120]
        %1744 = vrot.lane.b32.xlu0 %v1742, 125
        %v1745 = vpop.permute.xlu0 %1744
        %1747 = vst.msk [vmem:[#allocation2 + $0x144] sm:$0xc] %vm232, %v1745
        %v1748 = vld [vmem:[%s1709] sm:$0x3]
        %1750 = vst [vmem:[#allocation1] ss:$2 sm:$0xff] %v1748
        %v1751 = vld.sshfl [vmem:[#allocation1] sm:$0xff pattern:$0x75643120]
        %1753 = vrot.lane.b32.xlu0 %v1751, 125
        %v1754 = vpop.permute.xlu0 %1753
        %1756 = vst.msk [vmem:[#allocation2 + $0x148] sm:$0x3] %vm219, %v1754
        %v1757 = vld [vmem:[%s1696] sm:$0x3]
        %s1759 = scalar_lea.vmem [#allocation1], 1
        %1760 = vst [vmem:[%s1759] ss:$2 sm:$0xff] %v1757
        %v1761 = vld.sshfl [vmem:[#allocation1] sm:$0xff pattern:$0x75643120]
        %1763 = vrot.lane.b32.xlu0 %v1761, 124
        %v1764 = vpop.permute.xlu0 %1763
        %1766 = vst.msk [vmem:[#allocation2 + $0x148] sm:$0xc] %vm232, %v1764
        %v1767 = vld [vmem:[#allocation2] sm:$0xf]
        %v1768 = vld [vmem:[#allocation2 + $0x4] sm:$0xf]
        %v1769 = vld [vmem:[#allocation2 + $0x8] sm:$0xf]
        %v1770 = vld [vmem:[#allocation2 + $0xc] sm:$0xf]
        %v1771 = vld [vmem:[#allocation2 + $0x10] sm:$0xf]
        %v1772 = vld [vmem:[#allocation2 + $0x14] sm:$0xf]
        %v1773 = vld [vmem:[#allocation2 + $0x18] sm:$0xf]
        %v1774 = vld [vmem:[#allocation2 + $0x1c] sm:$0xf]
        %v1775 = vld [vmem:[#allocation2 + $0x20] sm:$0xf]
        %v1776 = vld [vmem:[#allocation2 + $0x24] sm:$0xf]
        %v1777 = vld [vmem:[#allocation2 + $0x28] sm:$0xf]
        %v1778 = vld [vmem:[#allocation2 + $0x2c] sm:$0xf]
        %v1779 = vld [vmem:[#allocation2 + $0x30] sm:$0xf]
        %v1780 = vld [vmem:[#allocation2 + $0x34] sm:$0xf]
        %v1781 = vld [vmem:[#allocation2 + $0x38] sm:$0xf]
        %v1782 = vld [vmem:[#allocation2 + $0x3c] sm:$0xf]
        %v1783 = vld [vmem:[#allocation2 + $0x40] sm:$0xf]
        %v1784 = vld [vmem:[#allocation2 + $0x44] sm:$0xf]
        %v1785 = vld [vmem:[#allocation2 + $0x48] sm:$0xf]
        %v1786 = vld [vmem:[#allocation2 + $0x4c] sm:$0xf]
        %v1787 = vld [vmem:[#allocation2 + $0x50] sm:$0xf]
        %v1788 = vld [vmem:[#allocation2 + $0x54] sm:$0xf]
        %v1789 = vld [vmem:[#allocation2 + $0x58] sm:$0xf]
        %v1790 = vld [vmem:[#allocation2 + $0x5c] sm:$0xf]
        %v1791 = vld [vmem:[#allocation2 + $0x60] sm:$0xf]
        %v1792 = vld [vmem:[#allocation2 + $0x64] sm:$0xf]
        %v1793 = vld [vmem:[#allocation2 + $0x68] sm:$0xf]
        %v1794 = vld [vmem:[#allocation2 + $0x6c] sm:$0xf]
        %v1795 = vld [vmem:[#allocation2 + $0x70] sm:$0xf]
        %v1796 = vld [vmem:[#allocation2 + $0x74] sm:$0xf]
        %v1797 = vld [vmem:[#allocation2 + $0x78] sm:$0xf]
        %v1798 = vld [vmem:[#allocation2 + $0x7c] sm:$0xf]
        %v1799 = vld [vmem:[#allocation2 + $0x80] sm:$0xf]
        %v1800 = vld [vmem:[#allocation2 + $0x84] sm:$0xf]
        %v1801 = vld [vmem:[#allocation2 + $0x88] sm:$0xf]
        %v1802 = vld [vmem:[#allocation2 + $0x8c] sm:$0xf]
        %v1803 = vld [vmem:[#allocation2 + $0x90] sm:$0xf]
        %v1804 = vld [vmem:[#allocation2 + $0x94] sm:$0xf]
        %v1805 = vld [vmem:[#allocation2 + $0x98] sm:$0xf]
        %v1806 = vld [vmem:[#allocation2 + $0x9c] sm:$0xf]
        %v1807 = vld [vmem:[#allocation2 + $0xa0] sm:$0xf]
        %v1808 = vld [vmem:[#allocation2 + $0xa4] sm:$0xf]
        %v1809 = vld [vmem:[#allocation2 + $0xa8] sm:$0xf]
        %v1810 = vld [vmem:[#allocation2 + $0xac] sm:$0xf]
        %v1811 = vld [vmem:[#allocation2 + $0xb0] sm:$0xf]
        %v1812 = vld [vmem:[#allocation2 + $0xb4] sm:$0xf]
        %v1813 = vld [vmem:[#allocation2 + $0xb8] sm:$0xf]
        %v1814 = vld [vmem:[#allocation2 + $0xbc] sm:$0xf]
        %v1815 = vld [vmem:[#allocation2 + $0xc0] sm:$0xf]
        %v1816 = vld [vmem:[#allocation2 + $0xc4] sm:$0xf]
        %v1817 = vld [vmem:[#allocation2 + $0xc8] sm:$0xf]
        %v1818 = vld [vmem:[#allocation2 + $0xcc] sm:$0xf]
        %v1819 = vld [vmem:[#allocation2 + $0xd0] sm:$0xf]
        %v1820 = vld [vmem:[#allocation2 + $0xd4] sm:$0xf]
        %v1821 = vld [vmem:[#allocation2 + $0xd8] sm:$0xf]
        %v1822 = vld [vmem:[#allocation2 + $0xdc] sm:$0xf]
        %v1823 = vld [vmem:[#allocation2 + $0xe0] sm:$0xf]
        %v1824 = vld [vmem:[#allocation2 + $0xe4] sm:$0xf]
        %v1825 = vld [vmem:[#allocation2 + $0xe8] sm:$0xf]
        %v1826 = vld [vmem:[#allocation2 + $0xec] sm:$0xf]
        %v1827 = vld [vmem:[#allocation2 + $0xf0] sm:$0xf]
        %v1828 = vld [vmem:[#allocation2 + $0xf4] sm:$0xf]
        %v1829 = vld [vmem:[#allocation2 + $0xf8] sm:$0xf]
        %v1830 = vld [vmem:[#allocation2 + $0xfc] sm:$0xf]
        %v1831 = vld [vmem:[#allocation2 + $0x100] sm:$0xf]
        %v1832 = vld [vmem:[#allocation2 + $0x104] sm:$0xf]
        %v1833 = vld [vmem:[#allocation2 + $0x108] sm:$0xf]
        %v1834 = vld [vmem:[#allocation2 + $0x10c] sm:$0xf]
        %v1835 = vld [vmem:[#allocation2 + $0x110] sm:$0xf]
        %v1836 = vld [vmem:[#allocation2 + $0x114] sm:$0xf]
        %v1837 = vld [vmem:[#allocation2 + $0x118] sm:$0xf]
        %v1838 = vld [vmem:[#allocation2 + $0x11c] sm:$0xf]
        %v1839 = vld [vmem:[#allocation2 + $0x120] sm:$0xf]
        %v1840 = vld [vmem:[#allocation2 + $0x124] sm:$0xf]
        %v1841 = vld [vmem:[#allocation2 + $0x128] sm:$0xf]
        %v1842 = vld [vmem:[#allocation2 + $0x12c] sm:$0xf]
        %v1843 = vld [vmem:[#allocation2 + $0x130] sm:$0xf]
        %v1844 = vld [vmem:[#allocation2 + $0x134] sm:$0xf]
        %v1845 = vld [vmem:[#allocation2 + $0x138] sm:$0xf]
        %v1846 = vld [vmem:[#allocation2 + $0x13c] sm:$0xf]
        %v1847 = vld [vmem:[#allocation2 + $0x140] sm:$0xf]
        %v1848 = vld [vmem:[#allocation2 + $0x144] sm:$0xf]
        %v1849 = vld [vmem:[#allocation2 + $0x148] sm:$0xf]
        %1851 = vset.pattern.permute.xlu0 0
        %1852 = vperm.xlu0 %1851, %v203
        %v1853 = vpop.permute.xlu0 %1852
        %1856 = vset.pattern.permute.xlu0 0
        %1857 = vperm.xlu0 %1856, %v204
        %v1858 = vpop.permute.xlu0 %1857
        %v1866 = vunpack.c.l.b16 %v197
        %v1867 = vunpack.c.h.b16 %v197
        %v1868 = vunpack.c.l.b16 %v198
        %v1869 = vunpack.c.h.b16 %v198
        %v1870 = vunpack.c.l.b16 %v199
        %v1871 = vunpack.c.h.b16 %v199
        %v1872 = vunpack.c.l.b16 %v200
        %v1873 = vunpack.c.h.b16 %v200
        %v1874 = vunpack.c.l.b16 %v201
        %v1875 = vunpack.c.h.b16 %v201
        %v1876 = vunpack.c.l.b16 %v202
        %v1877 = vunpack.c.h.b16 %v202
        %v1878 = vpack.c.b16 %v1872, %v1866
        %v1879 = vpack.c.b16 %v1873, %v1867
        %v1880 = vpack.c.b16 %v1874, %v1868
        %v1881 = vpack.c.b16 %v1875, %v1869
        %v1882 = vpack.c.b16 %v1876, %v1870
        %v1883 = vpack.c.b16 %v1877, %v1871
        %v1972 = vunpack.c.l.b16 %v1767
        %v1973 = vunpack.c.l.b16 %v1768
        %v1974 = vunpack.c.l.b16 %v1769
        %v1975 = vunpack.c.l.b16 %v1770
        %v1976 = vunpack.c.l.b16 %v1771
        %v1977 = vunpack.c.l.b16 %v1772
        %v1978 = vunpack.c.l.b16 %v1773
        %v1979 = vunpack.c.l.b16 %v1774
        %v1980 = vunpack.c.l.b16 %v1775
        %v1981 = vunpack.c.l.b16 %v1776
        %v1982 = vunpack.c.l.b16 %v1777
        %v1983 = vunpack.c.l.b16 %v1778
        %v1984 = vunpack.c.l.b16 %v1779
        %v1985 = vunpack.c.l.b16 %v1780
        %v1986 = vunpack.c.l.b16 %v1781
        %v1987 = vunpack.c.l.b16 %v1782
        %v1988 = vunpack.c.l.b16 %v1783
        %v1989 = vunpack.c.l.b16 %v1784
        %v1990 = vunpack.c.l.b16 %v1785
        %v1991 = vunpack.c.l.b16 %v1786
        %v1992 = vunpack.c.l.b16 %v1787
        %v1993 = vunpack.c.l.b16 %v1788
        %v1994 = vunpack.c.l.b16 %v1789
        %v1995 = vunpack.c.l.b16 %v1790
        %v1996 = vunpack.c.l.b16 %v1791
        %v1997 = vunpack.c.l.b16 %v1792
        %v1998 = vunpack.c.l.b16 %v1793
        %v1999 = vunpack.c.l.b16 %v1794
        %v2000 = vunpack.c.l.b16 %v1795
        %v2001 = vunpack.c.l.b16 %v1796
        %v2002 = vunpack.c.l.b16 %v1797
        %v2003 = vunpack.c.l.b16 %v1798
        %v2004 = vunpack.c.l.b16 %v1799
        %v2005 = vunpack.c.l.b16 %v1800
        %v2006 = vunpack.c.l.b16 %v1801
        %v2007 = vunpack.c.l.b16 %v1802
        %v2008 = vunpack.c.l.b16 %v1803
        %v2009 = vunpack.c.l.b16 %v1804
        %v2010 = vunpack.c.l.b16 %v1805
        %v2011 = vunpack.c.l.b16 %v1806
        %v2012 = vunpack.c.l.b16 %v1807
        %v2013 = vunpack.c.l.b16 %v1808
        %v2014 = vunpack.c.l.b16 %v1809
        %v2015 = vunpack.c.l.b16 %v1810
        %v2016 = vunpack.c.l.b16 %v1811
        %v2017 = vunpack.c.l.b16 %v1812
        %v2018 = vunpack.c.l.b16 %v1813
        %v2019 = vunpack.c.l.b16 %v1814
        %v2020 = vunpack.c.l.b16 %v1815
        %v2021 = vunpack.c.l.b16 %v1816
        %v2022 = vunpack.c.l.b16 %v1817
        %v2023 = vunpack.c.l.b16 %v1818
        %v2024 = vunpack.c.l.b16 %v1819
        %v2025 = vunpack.c.l.b16 %v1820
        %v2026 = vunpack.c.l.b16 %v1821
        %v2027 = vunpack.c.l.b16 %v1822
        %v2028 = vunpack.c.l.b16 %v1823
        %v2029 = vunpack.c.l.b16 %v1824
        %v2030 = vunpack.c.l.b16 %v1825
        %v2031 = vunpack.c.l.b16 %v1826
        %v2032 = vunpack.c.l.b16 %v1827
        %v2033 = vunpack.c.l.b16 %v1828
        %v2034 = vunpack.c.l.b16 %v1829
        %v2035 = vunpack.c.l.b16 %v1830
        %v2036 = vunpack.c.l.b16 %v1831
        %v2037 = vunpack.c.l.b16 %v1832
        %v2038 = vunpack.c.l.b16 %v1833
        %v2039 = vunpack.c.l.b16 %v1834
        %v2040 = vunpack.c.l.b16 %v1835
        %v2041 = vunpack.c.l.b16 %v1836
        %v2042 = vunpack.c.l.b16 %v1837
        %v2043 = vunpack.c.l.b16 %v1838
        %v2044 = vunpack.c.l.b16 %v1839
        %v2045 = vunpack.c.l.b16 %v1840
        %v2046 = vunpack.c.l.b16 %v1841
        %v2047 = vunpack.c.l.b16 %v1842
        %v2048 = vunpack.c.l.b16 %v1843
        %v2049 = vunpack.c.l.b16 %v1844
        %v2050 = vunpack.c.l.b16 %v1845
        %v2051 = vunpack.c.l.b16 %v1846
        %v2052 = vunpack.c.l.b16 %v1847
        %v2053 = vunpack.c.l.b16 %v1848
        %v2054 = vunpack.c.l.b16 %v1849
        %v2055 = vpack.c.b16 %v1973, %v1972
        %v2056 = vpack.c.b16 %v1975, %v1974
        %v2057 = vpack.c.b16 %v1977, %v1976
        %v2058 = vpack.c.b16 %v1979, %v1978
        %v2059 = vpack.c.b16 %v1981, %v1980
        %v2060 = vpack.c.b16 %v1983, %v1982
        %v2061 = vpack.c.b16 %v1985, %v1984
        %v2062 = vpack.c.b16 %v1987, %v1986
        %v2063 = vpack.c.b16 %v1989, %v1988
        %v2064 = vpack.c.b16 %v1991, %v1990
        %v2065 = vpack.c.b16 %v1993, %v1992
        %v2066 = vpack.c.b16 %v1995, %v1994
        %v2067 = vpack.c.b16 %v1997, %v1996
        %v2068 = vpack.c.b16 %v1999, %v1998
        %v2069 = vpack.c.b16 %v2001, %v2000
        %v2070 = vpack.c.b16 %v2003, %v2002
        %v2071 = vpack.c.b16 %v2005, %v2004
        %v2072 = vpack.c.b16 %v2007, %v2006
        %v2073 = vpack.c.b16 %v2009, %v2008
        %v2074 = vpack.c.b16 %v2011, %v2010
        %v2075 = vpack.c.b16 %v2013, %v2012
        %v2076 = vpack.c.b16 %v2015, %v2014
        %v2077 = vpack.c.b16 %v2017, %v2016
        %v2078 = vpack.c.b16 %v2019, %v2018
        %v2079 = vpack.c.b16 %v2021, %v2020
        %v2080 = vpack.c.b16 %v2023, %v2022
        %v2081 = vpack.c.b16 %v2025, %v2024
        %v2082 = vpack.c.b16 %v2027, %v2026
        %v2083 = vpack.c.b16 %v2029, %v2028
        %v2084 = vpack.c.b16 %v2031, %v2030
        %v2085 = vpack.c.b16 %v2033, %v2032
        %v2086 = vpack.c.b16 %v2035, %v2034
        %v2087 = vpack.c.b16 %v2037, %v2036
        %v2088 = vpack.c.b16 %v2039, %v2038
        %v2089 = vpack.c.b16 %v2041, %v2040
        %v2090 = vpack.c.b16 %v2043, %v2042
        %v2091 = vpack.c.b16 %v2045, %v2044
        %v2092 = vpack.c.b16 %v2047, %v2046
        %v2093 = vpack.c.b16 %v2049, %v2048
        %v2094 = vpack.c.b16 %v2051, %v2050
        %v2095 = vpack.c.b16 %v2053, %v2052
        %v2096 = vpack.c.b16 %v2054, %v2054
        %vm2138 = vcmask 195584
        %v2140 = vsel %vm2138, %v1883, 0
        %vm2142 = vcmask 1043456
        %v2144 = vsel %vm2142, %v2096, 0
        %2146 = vmatpush.bf16.msra.mxu0 %v2062
        %2147 = vmatpush.bf16.msra.mxu0 %v2061
        %2148 = vmatpush.bf16.msra.mxu0 %v2060
        %2149 = vmatpush.bf16.msra.mxu0 %v2059
        %2150 = vmatpush.bf16.msra.mxu0 %v2058
        %2151 = vmatpush.bf16.msra.mxu0 %v2057
        %2152 = vmatpush.bf16.msra.mxu0 %v2056
        %2153 = vmatpush.bf16.msra.mxu0 %v2055
        %2154 = vmatmul.bf16.gmra.mxu0 %v1878
        %v2155 = vpop.f32.mrf.mxu0
        %v2156 = vadd.f32 %v1853, %v2155
        %v2157 = vpop.f32.mrf.mxu0
        %v2158 = vadd.f32 %v1858, %v2157
        %2159 = vdwg.mxu0
        %2160 = vmatpush.bf16.msra.mxu0 %v2070
        %2161 = vmatpush.bf16.msra.mxu0 %v2069
        %2162 = vmatpush.bf16.msra.mxu0 %v2068
        %2163 = vmatpush.bf16.msra.mxu0 %v2067
        %2164 = vmatpush.bf16.msra.mxu0 %v2066
        %2165 = vmatpush.bf16.msra.mxu0 %v2065
        %2166 = vmatpush.bf16.msra.mxu0 %v2064
        %2167 = vmatpush.bf16.msra.mxu0 %v2063
        %2168 = vmatmul.bf16.gmra.mxu0 %v1879
        %v2169 = vpop.f32.mrf.mxu0
        %v2170 = vadd.f32 %v2156, %v2169
        %v2171 = vpop.f32.mrf.mxu0
        %v2172 = vadd.f32 %v2158, %v2171
        %2173 = vdwg.mxu0
        %2174 = vmatpush.bf16.msra.mxu0 %v2078
        %2175 = vmatpush.bf16.msra.mxu0 %v2077
        %2176 = vmatpush.bf16.msra.mxu0 %v2076
        %2177 = vmatpush.bf16.msra.mxu0 %v2075
        %2178 = vmatpush.bf16.msra.mxu0 %v2074
        %2179 = vmatpush.bf16.msra.mxu0 %v2073
        %2180 = vmatpush.bf16.msra.mxu0 %v2072
        %2181 = vmatpush.bf16.msra.mxu0 %v2071
        %2182 = vmatmul.bf16.gmra.mxu0 %v1880
        %v2183 = vpop.f32.mrf.mxu0
        %v2184 = vadd.f32 %v2170, %v2183
        %v2185 = vpop.f32.mrf.mxu0
        %v2186 = vadd.f32 %v2172, %v2185
        %2187 = vdwg.mxu0
        %2188 = vmatpush.bf16.msra.mxu0 %v2086
        %2189 = vmatpush.bf16.msra.mxu0 %v2085
        %2190 = vmatpush.bf16.msra.mxu0 %v2084
        %2191 = vmatpush.bf16.msra.mxu0 %v2083
        %2192 = vmatpush.bf16.msra.mxu0 %v2082
        %2193 = vmatpush.bf16.msra.mxu0 %v2081
        %2194 = vmatpush.bf16.msra.mxu0 %v2080
        %2195 = vmatpush.bf16.msra.mxu0 %v2079
        %2196 = vmatmul.bf16.gmra.mxu0 %v1881
        %v2197 = vpop.f32.mrf.mxu0
        %v2198 = vadd.f32 %v2184, %v2197
        %v2199 = vpop.f32.mrf.mxu0
        %v2200 = vadd.f32 %v2186, %v2199
        %2201 = vdwg.mxu0
        %2202 = vmatpush.bf16.msra.mxu0 %v2094
        %2203 = vmatpush.bf16.msra.mxu0 %v2093
        %2204 = vmatpush.bf16.msra.mxu0 %v2092
        %2205 = vmatpush.bf16.msra.mxu0 %v2091
        %2206 = vmatpush.bf16.msra.mxu0 %v2090
        %2207 = vmatpush.bf16.msra.mxu0 %v2089
        %2208 = vmatpush.bf16.msra.mxu0 %v2088
        %2209 = vmatpush.bf16.msra.mxu0 %v2087
        %2210 = vmatmul.bf16.gmra.mxu0 %v1882
        %v2211 = vpop.f32.mrf.mxu0
        %v2212 = vadd.f32 %v2198, %v2211
        %v2213 = vpop.f32.mrf.mxu0
        %v2214 = vadd.f32 %v2200, %v2213
        %2215 = vdwg.mxu0
        %2216 = vmatpush.bf16.msra.mxu0 0
        %2217 = vmatpush.bf16.msra.mxu0 0
        %2218 = vmatpush.bf16.msra.mxu0 0
        %2219 = vmatpush.bf16.msra.mxu0 0
        %2220 = vmatpush.bf16.msra.mxu0 0
        %2221 = vmatpush.bf16.msra.mxu0 0
        %2222 = vmatpush.bf16.msra.mxu0 %v2144
        %2223 = vmatpush.bf16.msra.mxu0 %v2095
        %2224 = vmatmul.bf16.gmra.mxu0 %v2140
        %v2225 = vpop.f32.mrf.mxu0
        %v2226 = vadd.f32 %v2212, %v2225
        %v2227 = vpop.f32.mrf.mxu0
        %v2228 = vadd.f32 %v2214, %v2227
        %2229 = vdwg.mxu0
        %v2230 = vmax.f32 %v2226, 0.0
        %v2231 = vmax.f32 %v2228, 0.0
        %s2232 = smul.u32 %s207, 16
        %s2233 = scalar_lea.vmem %s194, %s2232
        %vm2234 = vcmask 64512
        %2235 = vst.msk [vmem:[%s2233] sm:$0xff] %vm2234, %v2230
        %2236 = vst.msk [vmem:[%s2233 + $0x8] sm:$0xff] %vm2234, %v2231
      $region37: #{preproc_block_forward.1} parent=31 // loop_footer
        %s211 = sadd.s32 1, %s207
      $region38: #{preproc_block_forward.1} parent=31 // loop_footer_branch
        %206 = sbr.rel target = $region34
      $region39: #{preproc_block_forward.1} parent=31 // loop_exit
        _
      %s2237 = smul.u32 8, %s19
      %p2238 = scmp.lt.s32.totalorder %s18, 1
      %s2239 = scalar_select %p2238, %s18, 1
      %p2240 = scmp.lt.s32.totalorder %s2237, 7
      %s2241 = scalar_select %p2240, %s2237, 7
      %s2242 = smul.addr %s2241, 2
      %s2243 = smul.addr %s2239, 16
      %s2244 = sadd.s32 %s2242, %s2243
      %s2245 = smul.addr %s2244, 8
      %s2246 = scalar_lea.vmem %s3, %s2245
      // Predicated region
      $region40: #{preproc_block_forward.1} parent=31 // pred_check
        %p2247 = pneg %p114
      $region41: #{preproc_block_forward.1} parent=31 // pred_check_branch
        %2249 = sbr.rel (%p2247) target = $region43
      $region42: #{preproc_block_forward.1} parent=31 // pred_region
        %s2250 = smul.u32 8, %s19
      $region43: #{preproc_block_forward.1} parent=31 // pred_fallthru
        _
    $region32: #{preproc_block_forward.1} parent=5 // pred_fallthru
      _
    %p2251 = scmp.le.s32.totalorder 2, %s9
    // Predicated region
    $region44: #{preproc_block_forward.1} parent=5 // pred_check
      %p2252 = pneg %p2251
    $region45: #{preproc_block_forward.1} parent=5 // pred_check_branch
      %2254 = sbr.rel (%p2252) target = $region47
    $region46: #{preproc_block_forward.1} parent=5 // pred_region
      %s2255 = ssub.s32 %s9, 2
      // Predicated region
      $region48: #{preproc_block_forward.1} parent=46 // pred_check
        %p2256 = pneg %p120
      $region49: #{preproc_block_forward.1} parent=46 // pred_check_branch
        %2258 = sbr.rel (%p2256) target = $region51
      $region50: #{preproc_block_forward.1} parent=46 // pred_region
        %s2259 = smul.u32 8, %s21
        %p2260 = scmp.lt.s32.totalorder %s20, 1
        %s2261 = scalar_select %p2260, %s20, 1
        %p2262 = scmp.lt.s32.totalorder %s2259, 7
        %s2263 = scalar_select %p2262, %s2259, 7
        %s2264 = smul.addr %s2263, 2
        %s2265 = smul.addr %s2261, 16
        %s2266 = sadd.s32 %s2264, %s2265
        %s2267 = smul.addr %s2266, 8
        %s2268 = scalar_lea.vmem %s3, %s2267
      $region51: #{preproc_block_forward.1} parent=46 // pred_fallthru
        _
    $region47: #{preproc_block_forward.1} parent=5 // pred_fallthru
      _
  $region6: #{preproc_block_forward.1} parent=0 // loop_footer
    %s13 = sadd.s32 1, %s9
  $region7: #{preproc_block_forward.1} parent=0 // loop_footer_branch
    %8 = sbr.rel target = $region3
  $region8: #{preproc_block_forward.1} parent=0 // loop_exit
    _

</llo_original>
